<compile_context>
chip_gen: v7x
topology: tpu7x:2x2x1
jax: 0.10.0
libtpu: 0.0.40
codegen_flags: <defaults>
</compile_context>

<pallas_src>
import functools
import math

import jax
import jax.numpy as jnp
from jax.experimental import pallas as pl
from jax.experimental.pallas import tpu as pltpu


_VMEM_LIMIT = 48 * 1024 * 1024


def _choose_row_tile(L, target=256):
    """Largest power-of-two row tile (8..target) dividing L; fall back to full L."""
    t = target
    while t >= 8:
        if L % t == 0:
            return t
        t //= 2
    return L


def _choose_d_tile(D, target=512):
    """d_inner (lane) tile for the scan so per-step temporaries fit the vreg file."""
    if D <= target:
        return D
    for t in (512, 256, 128):
        if D % t == 0:
            return t
    return D


def _full(shape):
    """BlockSpec for an un-tiled (resident) operand under the 2-D (b, chunk) grid."""
    nd = len(shape)
    return pl.BlockSpec(shape, lambda b, i: (0,) * nd)


def _ln_modulate(x, shift, scale):
    """LayerNorm (no affine, eps=1e-6) + adaLN modulate. x:(tl,H) shift/scale:(1,H)."""
    mu = jnp.mean(x, axis=-1, keepdims=True)
    xc = x - mu
    var = jnp.mean(xc * xc, axis=-1, keepdims=True)
    xn = xc * jax.lax.rsqrt(var + 1e-6)
    return xn * (1.0 + scale) + shift


# ----------------------------------------------------------------------------
# 1. adaLN:  ada = SiLU(c) @ W + b   ->  (B, 1, 3H)  (shift | scale | alpha)
# ----------------------------------------------------------------------------
def _adaln_kernel(c_ref, w_ref, b_ref, o_ref):
    cc = c_ref[...]
    cc = cc * jax.nn.sigmoid(cc)                                 # SiLU (f32)
    res = jnp.dot(cc, w_ref[...], preferred_element_type=jnp.float32) + b_ref[...]
    o_ref[...] = res[:, None, :]                                 # (B, 1, 3H)


def adaln(c, w, b):
    Bsz = c.shape[0]
    n = w.shape[1]
    vm = pl.BlockSpec(memory_space=pltpu.MemorySpace.VMEM)
    return pl.pallas_call(
        _adaln_kernel,
        out_shape=jax.ShapeDtypeStruct((Bsz, 1, n), jnp.float32),
        in_specs=[vm, vm, vm],
        out_specs=vm,
        compiler_params=pltpu.CompilerParams(vmem_limit_bytes=_VMEM_LIMIT),
    )(c, w, b)


# ----------------------------------------------------------------------------
# 2. fused block kernel
# ----------------------------------------------------------------------------
def _block_kernel(x_ref, ada_ref,
                  w1_ref, b1_ref, w2_ref, b2_ref,
                  inx_ref, inz_ref, convw_ref, convb_ref,
                  xproj_ref, dtproj_ref, dtb_ref, A_ref, Dsk_ref, outw_ref,
                  wm_ref, bm_ref, wr_ref, br_ref, wf_ref, bfu_ref,
                  o_ref,
                  x1_s, gate_s, u_s, xo_s, dta_s, y_s, xp_s, h_s, tail_s,
                  *, tl, H, D, N, K, R, dtile):
    chunk = pl.program_id(1)
    bf16 = jnp.bfloat16

    # Cross-chunk carries.  Correct only because the chunk axis is the innermost,
    # sequentially iterated ("arbitrary") grid axis and scratch persists.
    @pl.when(chunk == 0)
    def _():
        h_s[...] = jnp.zeros_like(h_s)
        tail_s[...] = jnp.zeros_like(tail_s)

    # ---- adaLN: LayerNorm (no learned affine) + modulate --------------------
    x = x_ref[0]                                                 # (tl, H) f32
    ada = ada_ref[0]                                             # (1, 3H)
    shift = ada[:, 0:H]
    scale = ada[:, H:2 * H]
    alpha = ada[:, 2 * H:3 * H]
    x1 = _ln_modulate(x, shift, scale)                           # (tl, H)
    x1_s[...] = x1                                               # kept for hg_fuse

    # ---- hourglass dense MLP -------------------------------------------------
    h1 = jnp.dot(x1.astype(bf16), w1_ref[...],
                 preferred_element_type=jnp.float32) + b1_ref[...]
    h1 = h1 * jax.nn.sigmoid(h1)
    hgd = jnp.dot(h1.astype(bf16), w2_ref[...],
                  preferred_element_type=jnp.float32) + b2_ref[...]
    hgd16 = hgd.astype(bf16)

    # ---- Mamba in_proj (no bias): x / z streams ------------------------------
    xs = jnp.dot(hgd16, inx_ref[...], preferred_element_type=jnp.float32)  # (tl, D)
    z = jnp.dot(hgd16, inz_ref[...], preferred_element_type=jnp.float32)   # (tl, D)
    gate_s[...] = z * jax.nn.sigmoid(z)

    # ---- depthwise causal conv1d + SiLU (channels-last) ----------------------
    # Big store is sublane-aligned (row offset 8); only the (K-1, D) left-context
    # write is masked.  Zero left padding comes from tail_s reset at chunk 0.
    xp_s[pl.ds(8, tl), :] = xs
    xp_s[pl.ds(8 - (K - 1), K - 1), :] = tail_s[...]
    tail_s[...] = xs[tl - (K - 1):, :]                           # carry for next chunk
    acc = convb_ref[...]
    for k in range(K):                                           # K = d_conv (static)
        acc = acc + convw_ref[k:k + 1, :] * xp_s[pl.ds(8 - (K - 1) + k, tl), :]
    u = acc * jax.nn.sigmoid(acc)                                # (tl, D) f32
    u_s[...] = u

    # ---- fused x_proj (dt | B | C zero-padded to Wp lanes) + dt_proj ---------
    # f32 on the dt path (numerically sensitive); dtproj rows >= R are zero so the
    # padded matmul is exact.
    xo = jnp.dot(u, xproj_ref[...], preferred_element_type=jnp.float32)     # (tl, Wp)
    xo_s[...] = xo
    dt_full = jnp.dot(xo, dtproj_ref[...], preferred_element_type=jnp.float32)
    dta_s[...] = jax.nn.softplus(dt_full + dtb_ref[...])                    # (tl, D)

    # ---- sequential selective scan -------------------------------------------
    # h: (N, dtile) carried as the fori_loop value; aligned 8-row time blocks.
    rows8 = jax.lax.broadcasted_iota(jnp.int32, (8, 1), 0)
    n_blk = tl // 8
    for d0 in range(0, D, dtile):                                # static d_inner tiling
        dsl = pl.ds(d0, dtile)
        A_t = A_ref[:, d0:d0 + dtile]                            # (N, dtile)
        h0 = h_s[:, dsl]                                         # once per chunk

        def blk(bi, h):
            base = pl.multiple_of(bi * 8, 8)
            dt_blk = dta_s[pl.ds(base, 8), dsl]                  # (8, dtile)
            du_blk = dt_blk * u_s[pl.ds(base, 8), dsl]           # (8, dtile)
            bc_blk = xo_s[pl.ds(base, 8), :]                     # (8, Wp)
            y_blk = jnp.zeros((8, dtile), jnp.float32)
            for r in range(8):                                   # static unroll
                dt_r = dt_blk[r:r + 1, :]                        # (1, dtile)
                du_r = du_blk[r:r + 1, :]                        # (1, dtile)
                b_col = bc_blk[r:r + 1, R:R + N][:, :, None][0]          # (N, 1)
                c_col = bc_blk[r:r + 1, R + N:R + 2 * N][:, :, None][0]  # (N, 1)
                dA = jnp.exp(dt_r * A_t)                         # (N, dtile)
                h = dA * h + du_r * b_col
                y_r = jnp.sum(h * c_col, axis=0, keepdims=True)  # (1, dtile)
                y_blk = jnp.where(rows8 == r, y_r, y_blk)
            y_s[pl.ds(base, 8), dsl] = y_blk                     # aligned 8-row store
            return h

        h_fin = jax.lax.fori_loop(0, n_blk, blk, h0)
        h_s[:, dsl] = h_fin                                      # once per chunk

    # ---- D skip, SiLU(z) gating, out_proj (no bias) --------------------------
    y = (y_s[...] + u_s[...] * Dsk_ref[...]) * gate_s[...]
    x12 = jnp.dot(y.astype(bf16), outw_ref[...],
                  preferred_element_type=jnp.float32)            # (tl, H)

    # ---- hourglass fusion + adaLN-zero gated residual ------------------------
    main = jnp.dot(x12.astype(bf16), wm_ref[...],
                   preferred_element_type=jnp.float32) + bm_ref[...]
    main = main * jax.nn.sigmoid(main)
    resid = jnp.dot(x1_s[...].astype(bf16), wr_ref[...],
                    preferred_element_type=jnp.float32) + br_ref[...]
    resid = resid * jax.nn.sigmoid(resid)
    fuse = jnp.dot((main * resid).astype(bf16), wf_ref[...],
                   preferred_element_type=jnp.float32) + bfu_ref[...]
    o_ref[0] = x + alpha * fuse


# ----------------------------------------------------------------------------
# full block forward
# ----------------------------------------------------------------------------
def diff_ssm_block_forward(params, x, c):
    Bsz, L, H = x.shape
    m = params["mamba"]
    D, N, K, R = m["d_inner"], m["d_state"], m["d_conv"], m["dt_rank"]
    Wp = m["xproj_pad"].shape[1]
    tl = _choose_row_tile(L)
    assert L % tl == 0 and tl % 8 == 0, "sequence length must be a multiple of 8"
    assert K - 1 <= 8, "conv kernel width must satisfy d_conv - 1 <= 8"
    dtile = _choose_d_tile(D)
    assert D % dtile == 0

    # adaLN (tiny): (B, 1, 3H) with rows [shift | scale | alpha] packed along lanes.
    ada = adaln(c, params["ada_w"], params["ada_b"])

    act = pl.BlockSpec((1, tl, H), lambda b, i: (b, i, 0))
    ada_spec = pl.BlockSpec((1, 1, 3 * H), lambda b, i: (b, 0, 0))

    in_arrays = [
        x, ada,
        params["hgd_w1"], params["hgd_b1"], params["hgd_w2"], params["hgd_b2"],
        m["in_w_x"], m["in_w_z"], m["conv_w"], m["conv_b"],
        m["xproj_pad"], m["dtproj_pad"], m["dt_bias"], m["A_t"], m["D"], m["out_w"],
        params["hgf_wm"], params["hgf_bm"], params["hgf_wr"], params["hgf_br"],
        params["hgf_wf"], params["hgf_bf"],
    ]
    in_specs = [act, ada_spec] + [_full(a.shape) for a in in_arrays[2:]]

    kern = functools.partial(_block_kernel, tl=tl, H=H, D=D, N=N, K=K, R=R,
                             dtile=dtile)

    return pl.pallas_call(
        kern,
        out_shape=jax.ShapeDtypeStruct((Bsz, L, H), jnp.float32),
        grid=(Bsz, L // tl),
        in_specs=in_specs,
        out_specs=act,
        scratch_shapes=[
            pltpu.VMEM((tl, H), jnp.float32),       # x1   : LN+modulate (hg_fuse residual)
            pltpu.VMEM((tl, D), jnp.float32),       # gate : SiLU(z)
            pltpu.VMEM((tl, D), jnp.float32),       # u    : conv+SiLU output
            pltpu.VMEM((tl, Wp), jnp.float32),      # xo   : x_proj (dt_lo | B | C)
            pltpu.VMEM((tl, D), jnp.float32),       # dta  : softplus(dt + bias)
            pltpu.VMEM((tl, D), jnp.float32),       # y    : scan output
            pltpu.VMEM((tl + 8, D), jnp.float32),   # xp   : conv halo (aligned store)
            pltpu.VMEM((N, D), jnp.float32),        # h    : SSM state (cross-chunk)
            pltpu.VMEM((K - 1, D), jnp.float32),    # tail : conv left context carry
        ],
        compiler_params=pltpu.CompilerParams(
            dimension_semantics=("parallel", "arbitrary"),
            vmem_limit_bytes=_VMEM_LIMIT),
    )(*in_arrays)


# ----------------------------------------------------------------------------
# synthetic parameters: PyTorch-layout init, then offline kernel-layout prep
# ----------------------------------------------------------------------------
def init_params_raw(key, H, d_state=16, d_conv=4, expand=2):
    d_inner = expand * H
    dt_rank = math.ceil(H / 16)
    ks = jax.random.split(key, 12)

    def w(k, shape, scale=0.02):
        return scale * jax.random.normal(k, shape, jnp.float32)

    return {
        "ada_w": w(ks[0], (H, 3 * H)), "ada_b": jnp.zeros((3 * H,), jnp.float32),
        "hgd_w1": w(ks[1], (H, H // 4)), "hgd_b1": jnp.zeros((H // 4,), jnp.float32),
        "hgd_w2": w(ks[2], (H // 4, H)), "hgd_b2": jnp.zeros((H,), jnp.float32),
        "hgf_wm": w(ks[3], (H, H // 4)), "hgf_bm": jnp.zeros((H // 4,), jnp.float32),
        "hgf_wr": w(ks[4], (H, H // 4)), "hgf_br": jnp.zeros((H // 4,), jnp.float32),
        "hgf_wf": w(ks[5], (H // 4, H)), "hgf_bf": jnp.zeros((H,), jnp.float32),
        "mamba": {
            "d_inner": d_inner, "d_state": d_state,
            "dt_rank": dt_rank, "d_conv": d_conv,
            "in_w": w(ks[6], (H, 2 * d_inner)),
            "conv_w": w(ks[7], (d_inner, d_conv), scale=0.1),
            "conv_b": jnp.zeros((d_inner,), jnp.float32),
            "xproj_w": w(ks[8], (d_inner, dt_rank + 2 * d_state)),
            "dtproj_w": w(ks[9], (dt_rank, d_inner), scale=dt_rank ** -0.5),
            "dt_bias": jnp.full((d_inner,), math.log(math.expm1(0.01)), jnp.float32),
            "A_log": jnp.log(jnp.tile(
                jnp.arange(1, d_state + 1, dtype=jnp.float32)[None, :],
                (d_inner, 1))),
            "D": jnp.ones((d_inner,), jnp.float32),
            "out_w": w(ks[10], (d_inner, H)),
        },
    }


def prepare_params(raw):
    """Offline weight prep: bf16 weights for the large matmuls, fused/zero-padded
    x_proj + dt_proj (128-lane dense), channels-last conv weight, transposed A.
    adaLN, dt path, conv, scan and LN parameters stay f32."""
    bf16 = jnp.bfloat16
    m = raw["mamba"]
    D, N, R, K = m["d_inner"], m["d_state"], m["dt_rank"], m["d_conv"]
    Wp = max(128, ((R + 2 * N + 127) // 128) * 128)
    xproj_pad = jnp.zeros((D, Wp), jnp.float32).at[:, :R + 2 * N].set(m["xproj_w"])
    dtproj_pad = jnp.zeros((Wp, D), jnp.float32).at[:R, :].set(m["dtproj_w"])
    return {
        "ada_w": raw["ada_w"], "ada_b": raw["ada_b"].reshape(1, -1),
        "hgd_w1": raw["hgd_w1"].astype(bf16), "hgd_b1": raw["hgd_b1"].reshape(1, -1),
        "hgd_w2": raw["hgd_w2"].astype(bf16), "hgd_b2": raw["hgd_b2"].reshape(1, -1),
        "hgf_wm": raw["hgf_wm"].astype(bf16), "hgf_bm": raw["hgf_bm"].reshape(1, -1),
        "hgf_wr": raw["hgf_wr"].astype(bf16), "hgf_br": raw["hgf_br"].reshape(1, -1),
        "hgf_wf": raw["hgf_wf"].astype(bf16), "hgf_bf": raw["hgf_bf"].reshape(1, -1),
        "mamba": {
            "d_inner": D, "d_state": N, "dt_rank": R, "d_conv": K,
            "in_w_x": m["in_w"][:, :D].astype(bf16),
            "in_w_z": m["in_w"][:, D:].astype(bf16),
            "conv_w": jnp.transpose(m["conv_w"]),            # (K, D) f32
            "conv_b": m["conv_b"].reshape(1, -1),
            "xproj_pad": xproj_pad,                          # (D, Wp) f32, dt|B|C
            "dtproj_pad": dtproj_pad,                        # (Wp, D) f32
            "dt_bias": m["dt_bias"].reshape(1, -1),
            "A_t": jnp.transpose(-jnp.exp(m["A_log"])),      # (N, D) f32
            "D": m["D"].reshape(1, -1),
            "out_w": m["out_w"].astype(bf16),
        },
    }


if __name__ == "__main__":
    B, L, H = 2, 8, 32
    key = jax.random.PRNGKey(0)
    kx, kc, kp = jax.random.split(key, 3)
    x = jax.random.normal(kx, (B, L, H), jnp.float32)
    c = jax.random.normal(kc, (B, H), jnp.float32)
    params = prepare_params(init_params_raw(kp, H))

    fwd = jax.jit(lambda x_, c_: diff_ssm_block_forward(params, x_, c_))
    out = jax.block_until_ready(fwd(x, c))

    assert out.shape == (B, L, H)
    assert bool(jnp.all(jnp.isfinite(out)))
    print("KERNEL_OK")
</pallas_src>

<mosaic_0001>
module attributes {stable_mosaic.version = 11 : i64} {
  func.func @_adaln_kernel(%arg0: memref<2x32xf32, #tpu.memory_space<vmem>>, %arg1: memref<32x96xf32, #tpu.memory_space<vmem>>, %arg2: memref<1x96xf32, #tpu.memory_space<vmem>>, %arg3: memref<2x1x96xf32, #tpu.memory_space<vmem>>) attributes {dimension_semantics = [], scalar_prefetch = 0 : i64, scratch_operands = 0 : i64, tpu.core_type = #tpu.core_type<tc>} {
    %c0 = arith.constant 0 : index
    %c0_0 = arith.constant 0 : index
    %0 = vector.load %arg0[%c0, %c0_0] : memref<2x32xf32, #tpu.memory_space<vmem>>, vector<2x32xf32>
    %1 = arith.negf %0 : vector<2x32xf32>
    %2 = math.exp %1 : vector<2x32xf32>
    %cst = arith.constant 1.000000e+00 : f32
    %3 = vector.broadcast %cst : f32 to vector<2x32xf32>
    %4 = arith.addf %3, %2 : vector<2x32xf32>
    %5 = arith.divf %3, %4 : vector<2x32xf32>
    %6 = arith.mulf %0, %5 : vector<2x32xf32>
    %c0_1 = arith.constant 0 : index
    %c0_2 = arith.constant 0 : index
    %7 = vector.load %arg1[%c0_1, %c0_2] : memref<32x96xf32, #tpu.memory_space<vmem>>, vector<32x96xf32>
    %cst_3 = arith.constant dense<0.000000e+00> : vector<2x96xf32>
    %8 = tpu.matmul %6, %7, %cst_3 {dimension_numbers = #tpu.dot_dimension_numbers<[1], [0], [0], [1], [0, 0, 1, 1], [], []>} : vector<2x32xf32>, vector<32x96xf32>, vector<2x96xf32> -> vector<2x96xf32>
    %c0_4 = arith.constant 0 : index
    %c0_5 = arith.constant 0 : index
    %9 = vector.load %arg2[%c0_4, %c0_5] : memref<1x96xf32, #tpu.memory_space<vmem>>, vector<1x96xf32>
    %10 = vector.broadcast %9 : vector<1x96xf32> to vector<2x96xf32>
    %11 = arith.addf %8, %10 : vector<2x96xf32>
    %12 = vector.shape_cast %11 : vector<2x96xf32> to vector<2x1x96xf32>
    %c0_6 = arith.constant 0 : index
    %c0_7 = arith.constant 0 : index
    %c0_8 = arith.constant 0 : index
    %13 = vector.load %arg3[%c0_6, %c0_7, %c0_8] : memref<2x1x96xf32, #tpu.memory_space<vmem>>, vector<2x1x96xf32>
    tpu.vector_store %arg3[%c0_6, %c0_7, %c0_8], %12 {strides = array<i32>} : memref<2x1x96xf32, #tpu.memory_space<vmem>>, vector<2x1x96xf32>,
    return
  }
}

module attributes {stable_mosaic.version = 11 : i64} {
  func.func @_block_kernel(%arg0: i32, %arg1: i32, %arg2: memref<1x8x32xf32, #tpu.memory_space<vmem>>, %arg3: memref<1x1x96xf32, #tpu.memory_space<vmem>>, %arg4: memref<32x8xbf16, #tpu.memory_space<vmem>>, %arg5: memref<1x8xf32, #tpu.memory_space<vmem>>, %arg6: memref<8x32xbf16, #tpu.memory_space<vmem>>, %arg7: memref<1x32xf32, #tpu.memory_space<vmem>>, %arg8: memref<32x64xbf16, #tpu.memory_space<vmem>>, %arg9: memref<32x64xbf16, #tpu.memory_space<vmem>>, %arg10: memref<4x64xf32, #tpu.memory_space<vmem>>, %arg11: memref<1x64xf32, #tpu.memory_space<vmem>>, %arg12: memref<64x128xf32, #tpu.memory_space<vmem>>, %arg13: memref<128x64xf32, #tpu.memory_space<vmem>>, %arg14: memref<1x64xf32, #tpu.memory_space<vmem>>, %arg15: memref<16x64xf32, #tpu.memory_space<vmem>>, %arg16: memref<1x64xf32, #tpu.memory_space<vmem>>, %arg17: memref<64x32xbf16, #tpu.memory_space<vmem>>, %arg18: memref<32x8xbf16, #tpu.memory_space<vmem>>, %arg19: memref<1x8xf32, #tpu.memory_space<vmem>>, %arg20: memref<32x8xbf16, #tpu.memory_space<vmem>>, %arg21: memref<1x8xf32, #tpu.memory_space<vmem>>, %arg22: memref<8x32xbf16, #tpu.memory_space<vmem>>, %arg23: memref<1x32xf32, #tpu.memory_space<vmem>>, %arg24: memref<1x8x32xf32, #tpu.memory_space<vmem>>, %arg25: memref<8x32xf32, #tpu.memory_space<vmem>>, %arg26: memref<8x64xf32, #tpu.memory_space<vmem>>, %arg27: memref<8x64xf32, #tpu.memory_space<vmem>>, %arg28: memref<8x128xf32, #tpu.memory_space<vmem>>, %arg29: memref<8x64xf32, #tpu.memory_space<vmem>>, %arg30: memref<8x64xf32, #tpu.memory_space<vmem>>, %arg31: memref<16x64xf32, #tpu.memory_space<vmem>>, %arg32: memref<16x64xf32, #tpu.memory_space<vmem>>, %arg33: memref<3x64xf32, #tpu.memory_space<vmem>>) attributes {dimension_semantics = [#tpu.dimension_semantics<parallel>, #tpu.dimension_semantics<arbitrary>], iteration_bounds = array<i64: 2, 1>, scalar_prefetch = 0 : i64, scratch_operands = 9 : i64, tpu.core_type = #tpu.core_type<tc>, window_params = [{transform_indices = @transform_0, window_bounds = array<i64: 1, 8, 32>}, {transform_indices = @transform_1, window_bounds = array<i64: 1, 1, 96>}, {pipeline_mode = #tpu.pipeline_mode<synchronous>, transform_indices = @transform_2, window_bounds = array<i64: 32, 8>}, {pipeline_mode = #tpu.pipeline_mode<synchronous>, transform_indices = @transform_3, window_bounds = array<i64: 1, 8>}, {pipeline_mode = #tpu.pipeline_mode<synchronous>, transform_indices = @transform_4, window_bounds = array<i64: 8, 32>}, {pipeline_mode = #tpu.pipeline_mode<synchronous>, transform_indices = @transform_5, window_bounds = array<i64: 1, 32>}, {pipeline_mode = #tpu.pipeline_mode<synchronous>, transform_indices = @transform_6, window_bounds = array<i64: 32, 64>}, {pipeline_mode = #tpu.pipeline_mode<synchronous>, transform_indices = @transform_7, window_bounds = array<i64: 32, 64>}, {pipeline_mode = #tpu.pipeline_mode<synchronous>, transform_indices = @transform_8, window_bounds = array<i64: 4, 64>}, {pipeline_mode = #tpu.pipeline_mode<synchronous>, transform_indices = @transform_9, window_bounds = array<i64: 1, 64>}, {pipeline_mode = #tpu.pipeline_mode<synchronous>, transform_indices = @transform_10, window_bounds = array<i64: 64, 128>}, {pipeline_mode = #tpu.pipeline_mode<synchronous>, transform_indices = @transform_11, window_bounds = array<i64: 128, 64>}, {pipeline_mode = #tpu.pipeline_mode<synchronous>, transform_indices = @transform_12, window_bounds = array<i64: 1, 64>}, {pipeline_mode = #tpu.pipeline_mode<synchronous>, transform_indices = @transform_13, window_bounds = array<i64: 16, 64>}, {pipeline_mode = #tpu.pipeline_mode<synchronous>, transform_indices = @transform_14, window_bounds = array<i64: 1, 64>}, {pipeline_mode = #tpu.pipeline_mode<synchronous>, transform_indices = @transform_15, window_bounds = array<i64: 64, 32>}, {pipeline_mode = #tpu.pipeline_mode<synchronous>, transform_indices = @transform_16, window_bounds = array<i64: 32, 8>}, {pipeline_mode = #tpu.pipeline_mode<synchronous>, transform_indices = @transform_17, window_bounds = array<i64: 1, 8>}, {pipeline_mode = #tpu.pipeline_mode<synchronous>, transform_indices = @transform_18, window_bounds = array<i64: 32, 8>}, {pipeline_mode = #tpu.pipeline_mode<synchronous>, transform_indices = @transform_19, window_bounds = array<i64: 1, 8>}, {pipeline_mode = #tpu.pipeline_mode<synchronous>, transform_indices = @transform_20, window_bounds = array<i64: 8, 32>}, {pipeline_mode = #tpu.pipeline_mode<synchronous>, transform_indices = @transform_21, window_bounds = array<i64: 1, 32>}, {transform_indices = @transform_22, window_bounds = array<i64: 1, 8, 32>}]} {
    %c0_i32 = arith.constant 0 : i32
    %0 = arith.cmpi eq, %arg1, %c0_i32 : i32
    %1 = arith.extui %0 : i1 to i32
    %c0_i32_0 = arith.constant 0 : i32
    %2 = arith.cmpi ne, %1, %c0_i32_0 : i32
    scf.if %2 {
      %cst_124 = arith.constant 0.000000e+00 : f32
      %401 = vector.broadcast %cst_124 : f32 to vector<16x64xf32>
      %c0_125 = arith.constant 0 : index
      %c0_126 = arith.constant 0 : index
      %402 = vector.load %arg32[%c0_125, %c0_126] : memref<16x64xf32, #tpu.memory_space<vmem>>, vector<16x64xf32>
      tpu.vector_store %arg32[%c0_125, %c0_126], %401 {strides = array<i32>} : memref<16x64xf32, #tpu.memory_space<vmem>>, vector<16x64xf32>,
      %cst_127 = arith.constant 0.000000e+00 : f32
      %403 = vector.broadcast %cst_127 : f32 to vector<3x64xf32>
      %c0_128 = arith.constant 0 : index
      %c0_129 = arith.constant 0 : index
      %404 = vector.load %arg33[%c0_128, %c0_129] : memref<3x64xf32, #tpu.memory_space<vmem>>, vector<3x64xf32>
      tpu.vector_store %arg33[%c0_128, %c0_129], %403 {strides = array<i32>} : memref<3x64xf32, #tpu.memory_space<vmem>>, vector<3x64xf32>,
    } else {
    }
    %c0 = arith.constant 0 : index
    %c0_1 = arith.constant 0 : index
    %c0_2 = arith.constant 0 : index
    %3 = vector.load %arg2[%c0, %c0_1, %c0_2] : memref<1x8x32xf32, #tpu.memory_space<vmem>>, vector<1x8x32xf32>
    %4 = vector.shape_cast %3 : vector<1x8x32xf32> to vector<8x32xf32>
    %c0_3 = arith.constant 0 : index
    %c0_4 = arith.constant 0 : index
    %c0_5 = arith.constant 0 : index
    %5 = vector.load %arg3[%c0_3, %c0_4, %c0_5] : memref<1x1x96xf32, #tpu.memory_space<vmem>>, vector<1x1x96xf32>
    %6 = vector.shape_cast %5 : vector<1x1x96xf32> to vector<1x96xf32>
    %7 = vector.extract_strided_slice %6 {offsets = [0, 0], sizes = [1, 32], strides = [1, 1]} : vector<1x96xf32> to vector<1x32xf32>
    %8 = vector.extract_strided_slice %6 {offsets = [0, 32], sizes = [1, 32], strides = [1, 1]} : vector<1x96xf32> to vector<1x32xf32>
    %9 = vector.extract_strided_slice %6 {offsets = [0, 64], sizes = [1, 32], strides = [1, 1]} : vector<1x96xf32> to vector<1x32xf32>
    %cst = arith.constant dense<0.000000e+00> : vector<8xf32>
    %10 = vector.multi_reduction <add>, %4, %cst [1] : vector<8x32xf32> to vector<8xf32>
    %11 = vector.shape_cast %10 : vector<8xf32> to vector<8x1xf32>
    %cst_6 = arith.constant 3.200000e+01 : f32
    %12 = vector.broadcast %cst_6 : f32 to vector<8x1xf32>
    %13 = arith.divf %11, %12 : vector<8x1xf32>
    %14 = vector.broadcast %13 : vector<8x1xf32> to vector<8x32xf32>
    %15 = arith.subf %4, %14 : vector<8x32xf32>
    %16 = arith.mulf %15, %15 : vector<8x32xf32>
    %cst_7 = arith.constant dense<0.000000e+00> : vector<8xf32>
    %17 = vector.multi_reduction <add>, %16, %cst_7 [1] : vector<8x32xf32> to vector<8xf32>
    %18 = vector.shape_cast %17 : vector<8xf32> to vector<8x1xf32>
    %cst_8 = arith.constant 3.200000e+01 : f32
    %19 = vector.broadcast %cst_8 : f32 to vector<8x1xf32>
    %20 = arith.divf %18, %19 : vector<8x1xf32>
    %cst_9 = arith.constant 9.99999997E-7 : f32
    %21 = vector.broadcast %cst_9 : f32 to vector<8x1xf32>
    %22 = arith.addf %20, %21 : vector<8x1xf32>
    %23 = math.rsqrt %22 : vector<8x1xf32>
    %24 = vector.broadcast %23 : vector<8x1xf32> to vector<8x32xf32>
    %25 = arith.mulf %15, %24 : vector<8x32xf32>
    %cst_10 = arith.constant 1.000000e+00 : f32
    %26 = vector.broadcast %cst_10 : f32 to vector<1x32xf32>
    %27 = arith.addf %26, %8 : vector<1x32xf32>
    %28 = vector.broadcast %27 : vector<1x32xf32> to vector<8x32xf32>
    %29 = arith.mulf %25, %28 : vector<8x32xf32>
    %30 = vector.broadcast %7 : vector<1x32xf32> to vector<8x32xf32>
    %31 = arith.addf %29, %30 : vector<8x32xf32>
    %c0_11 = arith.constant 0 : index
    %c0_12 = arith.constant 0 : index
    %32 = vector.load %arg25[%c0_11, %c0_12] : memref<8x32xf32, #tpu.memory_space<vmem>>, vector<8x32xf32>
    tpu.vector_store %arg25[%c0_11, %c0_12], %31 {strides = array<i32>} : memref<8x32xf32, #tpu.memory_space<vmem>>, vector<8x32xf32>,
    %33 = arith.truncf %31 : vector<8x32xf32> to vector<8x32xbf16>
    %c0_13 = arith.constant 0 : index
    %c0_14 = arith.constant 0 : index
    %34 = vector.load %arg4[%c0_13, %c0_14] : memref<32x8xbf16, #tpu.memory_space<vmem>>, vector<32x8xbf16>
    %cst_15 = arith.constant dense<0.000000e+00> : vector<8x8xf32>
    %35 = tpu.matmul %33, %34, %cst_15 {dimension_numbers = #tpu.dot_dimension_numbers<[1], [0], [0], [1], [0, 0, 1, 1], [], []>} : vector<8x32xbf16>, vector<32x8xbf16>, vector<8x8xf32> -> vector<8x8xf32>
    %c0_16 = arith.constant 0 : index
    %c0_17 = arith.constant 0 : index
    %36 = vector.load %arg5[%c0_16, %c0_17] : memref<1x8xf32, #tpu.memory_space<vmem>>, vector<1x8xf32>
    %37 = vector.broadcast %36 : vector<1x8xf32> to vector<8x8xf32>
    %38 = arith.addf %35, %37 : vector<8x8xf32>
    %39 = arith.negf %38 : vector<8x8xf32>
    %40 = math.exp %39 : vector<8x8xf32>
    %cst_18 = arith.constant 1.000000e+00 : f32
    %41 = vector.broadcast %cst_18 : f32 to vector<8x8xf32>
    %42 = arith.addf %41, %40 : vector<8x8xf32>
    %43 = arith.divf %41, %42 : vector<8x8xf32>
    %44 = arith.mulf %38, %43 : vector<8x8xf32>
    %45 = arith.truncf %44 : vector<8x8xf32> to vector<8x8xbf16>
    %c0_19 = arith.constant 0 : index
    %c0_20 = arith.constant 0 : index
    %46 = vector.load %arg6[%c0_19, %c0_20] : memref<8x32xbf16, #tpu.memory_space<vmem>>, vector<8x32xbf16>
    %cst_21 = arith.constant dense<0.000000e+00> : vector<8x32xf32>
    %47 = tpu.matmul %45, %46, %cst_21 {dimension_numbers = #tpu.dot_dimension_numbers<[1], [0], [0], [1], [0, 0, 1, 1], [], []>} : vector<8x8xbf16>, vector<8x32xbf16>, vector<8x32xf32> -> vector<8x32xf32>
    %c0_22 = arith.constant 0 : index
    %c0_23 = arith.constant 0 : index
    %48 = vector.load %arg7[%c0_22, %c0_23] : memref<1x32xf32, #tpu.memory_space<vmem>>, vector<1x32xf32>
    %49 = vector.broadcast %48 : vector<1x32xf32> to vector<8x32xf32>
    %50 = arith.addf %47, %49 : vector<8x32xf32>
    %51 = arith.truncf %50 : vector<8x32xf32> to vector<8x32xbf16>
    %c0_24 = arith.constant 0 : index
    %c0_25 = arith.constant 0 : index
    %52 = vector.load %arg8[%c0_24, %c0_25] : memref<32x64xbf16, #tpu.memory_space<vmem>>, vector<32x64xbf16>
    %cst_26 = arith.constant dense<0.000000e+00> : vector<8x64xf32>
    %53 = tpu.matmul %51, %52, %cst_26 {dimension_numbers = #tpu.dot_dimension_numbers<[1], [0], [0], [1], [0, 0, 1, 1], [], []>} : vector<8x32xbf16>, vector<32x64xbf16>, vector<8x64xf32> -> vector<8x64xf32>
    %c0_27 = arith.constant 0 : index
    %c0_28 = arith.constant 0 : index
    %54 = vector.load %arg9[%c0_27, %c0_28] : memref<32x64xbf16, #tpu.memory_space<vmem>>, vector<32x64xbf16>
    %cst_29 = arith.constant dense<0.000000e+00> : vector<8x64xf32>
    %55 = tpu.matmul %51, %54, %cst_29 {dimension_numbers = #tpu.dot_dimension_numbers<[1], [0], [0], [1], [0, 0, 1, 1], [], []>} : vector<8x32xbf16>, vector<32x64xbf16>, vector<8x64xf32> -> vector<8x64xf32>
    %56 = arith.negf %55 : vector<8x64xf32>
    %57 = math.exp %56 : vector<8x64xf32>
    %cst_30 = arith.constant 1.000000e+00 : f32
    %58 = vector.broadcast %cst_30 : f32 to vector<8x64xf32>
    %59 = arith.addf %58, %57 : vector<8x64xf32>
    %60 = arith.divf %58, %59 : vector<8x64xf32>
    %61 = arith.mulf %55, %60 : vector<8x64xf32>
    %c0_31 = arith.constant 0 : index
    %c0_32 = arith.constant 0 : index
    %62 = vector.load %arg26[%c0_31, %c0_32] : memref<8x64xf32, #tpu.memory_space<vmem>>, vector<8x64xf32>
    tpu.vector_store %arg26[%c0_31, %c0_32], %61 {strides = array<i32>} : memref<8x64xf32, #tpu.memory_space<vmem>>, vector<8x64xf32>,
    %c8 = arith.constant 8 : index
    %c0_33 = arith.constant 0 : index
    %63 = vector.load %arg31[%c8, %c0_33] : memref<16x64xf32, #tpu.memory_space<vmem>>, vector<8x64xf32>
    tpu.vector_store %arg31[%c8, %c0_33], %53 {strides = array<i32>} : memref<16x64xf32, #tpu.memory_space<vmem>>, vector<8x64xf32>,
    %c0_34 = arith.constant 0 : index
    %c0_35 = arith.constant 0 : index
    %64 = vector.load %arg33[%c0_34, %c0_35] : memref<3x64xf32, #tpu.memory_space<vmem>>, vector<3x64xf32>
    %c5 = arith.constant 5 : index
    %c0_36 = arith.constant 0 : index
    %65 = vector.load %arg31[%c5, %c0_36] : memref<16x64xf32, #tpu.memory_space<vmem>>, vector<3x64xf32>
    tpu.vector_store %arg31[%c5, %c0_36], %64 {strides = array<i32>} : memref<16x64xf32, #tpu.memory_space<vmem>>, vector<3x64xf32>,
    %66 = vector.extract_strided_slice %53 {offsets = [5, 0], sizes = [3, 64], strides = [1, 1]} : vector<8x64xf32> to vector<3x64xf32>
    %c0_37 = arith.constant 0 : index
    %c0_38 = arith.constant 0 : index
    %67 = vector.load %arg33[%c0_37, %c0_38] : memref<3x64xf32, #tpu.memory_space<vmem>>, vector<3x64xf32>
    tpu.vector_store %arg33[%c0_37, %c0_38], %66 {strides = array<i32>} : memref<3x64xf32, #tpu.memory_space<vmem>>, vector<3x64xf32>,
    %c0_39 = arith.constant 0 : index
    %c0_40 = arith.constant 0 : index
    %68 = vector.load %arg11[%c0_39, %c0_40] : memref<1x64xf32, #tpu.memory_space<vmem>>, vector<1x64xf32>
    %c0_41 = arith.constant 0 : index
    %c0_42 = arith.constant 0 : index
    %69 = vector.load %arg10[%c0_41, %c0_42] : memref<4x64xf32, #tpu.memory_space<vmem>>, vector<1x64xf32>
    %c5_43 = arith.constant 5 : index
    %c0_44 = arith.constant 0 : index
    %70 = vector.load %arg31[%c5_43, %c0_44] : memref<16x64xf32, #tpu.memory_space<vmem>>, vector<8x64xf32>
    %71 = vector.broadcast %69 : vector<1x64xf32> to vector<8x64xf32>
    %72 = arith.mulf %71, %70 : vector<8x64xf32>
    %73 = vector.broadcast %68 : vector<1x64xf32> to vector<8x64xf32>
    %74 = arith.addf %73, %72 : vector<8x64xf32>
    %c1 = arith.constant 1 : index
    %c0_45 = arith.constant 0 : index
    %75 = vector.load %arg10[%c1, %c0_45] : memref<4x64xf32, #tpu.memory_space<vmem>>, vector<1x64xf32>
    %c6 = arith.constant 6 : index
    %c0_46 = arith.constant 0 : index
    %76 = vector.load %arg31[%c6, %c0_46] : memref<16x64xf32, #tpu.memory_space<vmem>>, vector<8x64xf32>
    %77 = vector.broadcast %75 : vector<1x64xf32> to vector<8x64xf32>
    %78 = arith.mulf %77, %76 : vector<8x64xf32>
    %79 = arith.addf %74, %78 : vector<8x64xf32>
    %c2 = arith.constant 2 : index
    %c0_47 = arith.constant 0 : index
    %80 = vector.load %arg10[%c2, %c0_47] : memref<4x64xf32, #tpu.memory_space<vmem>>, vector<1x64xf32>
    %c7 = arith.constant 7 : index
    %c0_48 = arith.constant 0 : index
    %81 = vector.load %arg31[%c7, %c0_48] : memref<16x64xf32, #tpu.memory_space<vmem>>, vector<8x64xf32>
    %82 = vector.broadcast %80 : vector<1x64xf32> to vector<8x64xf32>
    %83 = arith.mulf %82, %81 : vector<8x64xf32>
    %84 = arith.addf %79, %83 : vector<8x64xf32>
    %c3 = arith.constant 3 : index
    %c0_49 = arith.constant 0 : index
    %85 = vector.load %arg10[%c3, %c0_49] : memref<4x64xf32, #tpu.memory_space<vmem>>, vector<1x64xf32>
    %c8_50 = arith.constant 8 : index
    %c0_51 = arith.constant 0 : index
    %86 = vector.load %arg31[%c8_50, %c0_51] : memref<16x64xf32, #tpu.memory_space<vmem>>, vector<8x64xf32>
    %87 = vector.broadcast %85 : vector<1x64xf32> to vector<8x64xf32>
    %88 = arith.mulf %87, %86 : vector<8x64xf32>
    %89 = arith.addf %84, %88 : vector<8x64xf32>
    %90 = arith.negf %89 : vector<8x64xf32>
    %91 = math.exp %90 : vector<8x64xf32>
    %cst_52 = arith.constant 1.000000e+00 : f32
    %92 = vector.broadcast %cst_52 : f32 to vector<8x64xf32>
    %93 = arith.addf %92, %91 : vector<8x64xf32>
    %94 = arith.divf %92, %93 : vector<8x64xf32>
    %95 = arith.mulf %89, %94 : vector<8x64xf32>
    %c0_53 = arith.constant 0 : index
    %c0_54 = arith.constant 0 : index
    %96 = vector.load %arg27[%c0_53, %c0_54] : memref<8x64xf32, #tpu.memory_space<vmem>>, vector<8x64xf32>
    tpu.vector_store %arg27[%c0_53, %c0_54], %95 {strides = array<i32>} : memref<8x64xf32, #tpu.memory_space<vmem>>, vector<8x64xf32>,
    %c0_55 = arith.constant 0 : index
    %c0_56 = arith.constant 0 : index
    %97 = vector.load %arg12[%c0_55, %c0_56] : memref<64x128xf32, #tpu.memory_space<vmem>>, vector<64x128xf32>
    %cst_57 = arith.constant dense<0.000000e+00> : vector<8x128xf32>
    %98 = tpu.matmul %95, %97, %cst_57 {dimension_numbers = #tpu.dot_dimension_numbers<[1], [0], [0], [1], [0, 0, 1, 1], [], []>} : vector<8x64xf32>, vector<64x128xf32>, vector<8x128xf32> -> vector<8x128xf32>
    %c0_58 = arith.constant 0 : index
    %c0_59 = arith.constant 0 : index
    %99 = vector.load %arg28[%c0_58, %c0_59] : memref<8x128xf32, #tpu.memory_space<vmem>>, vector<8x128xf32>
    tpu.vector_store %arg28[%c0_58, %c0_59], %98 {strides = array<i32>} : memref<8x128xf32, #tpu.memory_space<vmem>>, vector<8x128xf32>,
    %c0_60 = arith.constant 0 : index
    %c0_61 = arith.constant 0 : index
    %100 = vector.load %arg13[%c0_60, %c0_61] : memref<128x64xf32, #tpu.memory_space<vmem>>, vector<128x64xf32>
    %cst_62 = arith.constant dense<0.000000e+00> : vector<8x64xf32>
    %101 = tpu.matmul %98, %100, %cst_62 {dimension_numbers = #tpu.dot_dimension_numbers<[1], [0], [0], [1], [0, 0, 1, 1], [], []>} : vector<8x128xf32>, vector<128x64xf32>, vector<8x64xf32> -> vector<8x64xf32>
    %c0_63 = arith.constant 0 : index
    %c0_64 = arith.constant 0 : index
    %102 = vector.load %arg14[%c0_63, %c0_64] : memref<1x64xf32, #tpu.memory_space<vmem>>, vector<1x64xf32>
    %103 = vector.broadcast %102 : vector<1x64xf32> to vector<8x64xf32>
    %104 = arith.addf %101, %103 : vector<8x64xf32>
    %cst_65 = arith.constant 0.000000e+00 : f32
    %105 = vector.broadcast %cst_65 : f32 to vector<8x64xf32>
    %106 = arith.maximumf %104, %105 : vector<8x64xf32>
    %107 = vector.broadcast %cst_65 : f32 to vector<8x64xf32>
    %108 = arith.subf %104, %107 : vector<8x64xf32>
    %109 = arith.cmpf one, %108, %108 : vector<8x64xf32>
    %110 = vector.broadcast %cst_65 : f32 to vector<8x64xf32>
    %111 = arith.addf %104, %110 : vector<8x64xf32>
    %112 = math.absf %108 : vector<8x64xf32>
    %cst_66 = arith.constant 0.000000e+00 : f32
    %113 = vector.broadcast %cst_66 : f32 to vector<8x64xf32>
    %114 = arith.subf %113, %112 : vector<8x64xf32>
    %115 = math.exp %114 : vector<8x64xf32>
    %116 = math.log1p %115 : vector<8x64xf32>
    %117 = arith.addf %106, %116 : vector<8x64xf32>
    %118 = arith.select %109, %111, %117 : vector<8x64xi1>, vector<8x64xf32>
    %c0_67 = arith.constant 0 : index
    %c0_68 = arith.constant 0 : index
    %119 = vector.load %arg29[%c0_67, %c0_68] : memref<8x64xf32, #tpu.memory_space<vmem>>, vector<8x64xf32>
    tpu.vector_store %arg29[%c0_67, %c0_68], %118 {strides = array<i32>} : memref<8x64xf32, #tpu.memory_space<vmem>>, vector<8x64xf32>,
    %120 = tpu.iota {dimensions = array<i32: 0>} : vector<8x1xi32>
    %c0_69 = arith.constant 0 : index
    %c0_70 = arith.constant 0 : index
    %121 = vector.load %arg15[%c0_69, %c0_70] : memref<16x64xf32, #tpu.memory_space<vmem>>, vector<16x64xf32>
    %c0_71 = arith.constant 0 : index
    %c0_72 = arith.constant 0 : index
    %122 = vector.load %arg32[%c0_71, %c0_72] : memref<16x64xf32, #tpu.memory_space<vmem>>, vector<16x64xf32>
    %c0_i32_73 = arith.constant 0 : i32
    %c8_i32 = arith.constant 8 : i32
    %123 = arith.muli %c0_i32_73, %c8_i32 : i32
    %124 = tpu.assume_multiple %123, 8 : i32
    %125 = arith.index_cast %124 : i32 to index
    %c0_74 = arith.constant 0 : index
    %126 = vector.load %arg29[%125, %c0_74] : memref<8x64xf32, #tpu.memory_space<vmem>>, vector<8x64xf32>
    %127 = arith.index_cast %124 : i32 to index
    %c0_75 = arith.constant 0 : index
    %128 = vector.load %arg27[%127, %c0_75] : memref<8x64xf32, #tpu.memory_space<vmem>>, vector<8x64xf32>
    %129 = arith.mulf %126, %128 : vector<8x64xf32>
    %130 = arith.index_cast %124 : i32 to index
    %c0_76 = arith.constant 0 : index
    %131 = vector.load %arg28[%130, %c0_76] : memref<8x128xf32, #tpu.memory_space<vmem>>, vector<8x128xf32>
    %cst_77 = arith.constant 0.000000e+00 : f32
    %132 = vector.broadcast %cst_77 : f32 to vector<8x64xf32>
    %133 = vector.extract_strided_slice %126 {offsets = [0, 0], sizes = [1, 64], strides = [1, 1]} : vector<8x64xf32> to vector<1x64xf32>
    %134 = vector.extract_strided_slice %129 {offsets = [0, 0], sizes = [1, 64], strides = [1, 1]} : vector<8x64xf32> to vector<1x64xf32>
    %135 = vector.extract_strided_slice %131 {offsets = [0, 2], sizes = [1, 16], strides = [1, 1]} : vector<8x128xf32> to vector<1x16xf32>
    %136 = vector.shape_cast %135 : vector<1x16xf32> to vector<1x16x1xf32>
    %137 = vector.shape_cast %136 : vector<1x16x1xf32> to vector<16x1xf32>
    %138 = vector.extract_strided_slice %131 {offsets = [0, 18], sizes = [1, 16], strides = [1, 1]} : vector<8x128xf32> to vector<1x16xf32>
    %139 = vector.shape_cast %138 : vector<1x16xf32> to vector<1x16x1xf32>
    %140 = vector.shape_cast %139 : vector<1x16x1xf32> to vector<16x1xf32>
    %141 = vector.broadcast %133 : vector<1x64xf32> to vector<16x64xf32>
    %142 = arith.mulf %141, %121 : vector<16x64xf32>
    %143 = math.exp %142 : vector<16x64xf32>
    %144 = arith.mulf %143, %122 : vector<16x64xf32>
    %145 = vector.broadcast %134 : vector<1x64xf32> to vector<16x64xf32>
    %146 = vector.broadcast %137 : vector<16x1xf32> to vector<16x64xf32>
    %147 = arith.mulf %145, %146 : vector<16x64xf32>
    %148 = arith.addf %144, %147 : vector<16x64xf32>
    %149 = vector.broadcast %140 : vector<16x1xf32> to vector<16x64xf32>
    %150 = arith.mulf %148, %149 : vector<16x64xf32>
    %cst_78 = arith.constant dense<0.000000e+00> : vector<64xf32>
    %151 = vector.multi_reduction <add>, %150, %cst_78 [0] : vector<16x64xf32> to vector<64xf32>
    %152 = vector.shape_cast %151 : vector<64xf32> to vector<1x64xf32>
    %c0_i32_79 = arith.constant 0 : i32
    %153 = vector.broadcast %c0_i32_79 : i32 to vector<8x1xi32>
    %154 = arith.cmpi eq, %120, %153 : vector<8x1xi32>
    %155 = vector.shape_cast %154 : vector<8x1xi1> to vector<8x1xi1>
    %156 = vector.broadcast %155 : vector<8x1xi1> to vector<8x64xi1>
    %157 = vector.shape_cast %152 : vector<1x64xf32> to vector<1x64xf32>
    %158 = vector.broadcast %157 : vector<1x64xf32> to vector<8x64xf32>
    %159 = arith.select %156, %158, %132 : vector<8x64xi1>, vector<8x64xf32>
    %160 = vector.extract_strided_slice %126 {offsets = [1, 0], sizes = [1, 64], strides = [1, 1]} : vector<8x64xf32> to vector<1x64xf32>
    %161 = vector.extract_strided_slice %129 {offsets = [1, 0], sizes = [1, 64], strides = [1, 1]} : vector<8x64xf32> to vector<1x64xf32>
    %162 = vector.extract_strided_slice %131 {offsets = [1, 2], sizes = [1, 16], strides = [1, 1]} : vector<8x128xf32> to vector<1x16xf32>
    %163 = vector.shape_cast %162 : vector<1x16xf32> to vector<1x16x1xf32>
    %164 = vector.shape_cast %163 : vector<1x16x1xf32> to vector<16x1xf32>
    %165 = vector.extract_strided_slice %131 {offsets = [1, 18], sizes = [1, 16], strides = [1, 1]} : vector<8x128xf32> to vector<1x16xf32>
    %166 = vector.shape_cast %165 : vector<1x16xf32> to vector<1x16x1xf32>
    %167 = vector.shape_cast %166 : vector<1x16x1xf32> to vector<16x1xf32>
    %168 = vector.broadcast %160 : vector<1x64xf32> to vector<16x64xf32>
    %169 = arith.mulf %168, %121 : vector<16x64xf32>
    %170 = math.exp %169 : vector<16x64xf32>
    %171 = arith.mulf %170, %148 : vector<16x64xf32>
    %172 = vector.broadcast %161 : vector<1x64xf32> to vector<16x64xf32>
    %173 = vector.broadcast %164 : vector<16x1xf32> to vector<16x64xf32>
    %174 = arith.mulf %172, %173 : vector<16x64xf32>
    %175 = arith.addf %171, %174 : vector<16x64xf32>
    %176 = vector.broadcast %167 : vector<16x1xf32> to vector<16x64xf32>
    %177 = arith.mulf %175, %176 : vector<16x64xf32>
    %cst_80 = arith.constant dense<0.000000e+00> : vector<64xf32>
    %178 = vector.multi_reduction <add>, %177, %cst_80 [0] : vector<16x64xf32> to vector<64xf32>
    %179 = vector.shape_cast %178 : vector<64xf32> to vector<1x64xf32>
    %c1_i32 = arith.constant 1 : i32
    %180 = vector.broadcast %c1_i32 : i32 to vector<8x1xi32>
    %181 = arith.cmpi eq, %120, %180 : vector<8x1xi32>
    %182 = vector.shape_cast %181 : vector<8x1xi1> to vector<8x1xi1>
    %183 = vector.broadcast %182 : vector<8x1xi1> to vector<8x64xi1>
    %184 = vector.shape_cast %179 : vector<1x64xf32> to vector<1x64xf32>
    %185 = vector.broadcast %184 : vector<1x64xf32> to vector<8x64xf32>
    %186 = arith.select %183, %185, %159 : vector<8x64xi1>, vector<8x64xf32>
    %187 = vector.extract_strided_slice %126 {offsets = [2, 0], sizes = [1, 64], strides = [1, 1]} : vector<8x64xf32> to vector<1x64xf32>
    %188 = vector.extract_strided_slice %129 {offsets = [2, 0], sizes = [1, 64], strides = [1, 1]} : vector<8x64xf32> to vector<1x64xf32>
    %189 = vector.extract_strided_slice %131 {offsets = [2, 2], sizes = [1, 16], strides = [1, 1]} : vector<8x128xf32> to vector<1x16xf32>
    %190 = vector.shape_cast %189 : vector<1x16xf32> to vector<1x16x1xf32>
    %191 = vector.shape_cast %190 : vector<1x16x1xf32> to vector<16x1xf32>
    %192 = vector.extract_strided_slice %131 {offsets = [2, 18], sizes = [1, 16], strides = [1, 1]} : vector<8x128xf32> to vector<1x16xf32>
    %193 = vector.shape_cast %192 : vector<1x16xf32> to vector<1x16x1xf32>
    %194 = vector.shape_cast %193 : vector<1x16x1xf32> to vector<16x1xf32>
    %195 = vector.broadcast %187 : vector<1x64xf32> to vector<16x64xf32>
    %196 = arith.mulf %195, %121 : vector<16x64xf32>
    %197 = math.exp %196 : vector<16x64xf32>
    %198 = arith.mulf %197, %175 : vector<16x64xf32>
    %199 = vector.broadcast %188 : vector<1x64xf32> to vector<16x64xf32>
    %200 = vector.broadcast %191 : vector<16x1xf32> to vector<16x64xf32>
    %201 = arith.mulf %199, %200 : vector<16x64xf32>
    %202 = arith.addf %198, %201 : vector<16x64xf32>
    %203 = vector.broadcast %194 : vector<16x1xf32> to vector<16x64xf32>
    %204 = arith.mulf %202, %203 : vector<16x64xf32>
    %cst_81 = arith.constant dense<0.000000e+00> : vector<64xf32>
    %205 = vector.multi_reduction <add>, %204, %cst_81 [0] : vector<16x64xf32> to vector<64xf32>
    %206 = vector.shape_cast %205 : vector<64xf32> to vector<1x64xf32>
    %c2_i32 = arith.constant 2 : i32
    %207 = vector.broadcast %c2_i32 : i32 to vector<8x1xi32>
    %208 = arith.cmpi eq, %120, %207 : vector<8x1xi32>
    %209 = vector.shape_cast %208 : vector<8x1xi1> to vector<8x1xi1>
    %210 = vector.broadcast %209 : vector<8x1xi1> to vector<8x64xi1>
    %211 = vector.shape_cast %206 : vector<1x64xf32> to vector<1x64xf32>
    %212 = vector.broadcast %211 : vector<1x64xf32> to vector<8x64xf32>
    %213 = arith.select %210, %212, %186 : vector<8x64xi1>, vector<8x64xf32>
    %214 = vector.extract_strided_slice %126 {offsets = [3, 0], sizes = [1, 64], strides = [1, 1]} : vector<8x64xf32> to vector<1x64xf32>
    %215 = vector.extract_strided_slice %129 {offsets = [3, 0], sizes = [1, 64], strides = [1, 1]} : vector<8x64xf32> to vector<1x64xf32>
    %216 = vector.extract_strided_slice %131 {offsets = [3, 2], sizes = [1, 16], strides = [1, 1]} : vector<8x128xf32> to vector<1x16xf32>
    %217 = vector.shape_cast %216 : vector<1x16xf32> to vector<1x16x1xf32>
    %218 = vector.shape_cast %217 : vector<1x16x1xf32> to vector<16x1xf32>
    %219 = vector.extract_strided_slice %131 {offsets = [3, 18], sizes = [1, 16], strides = [1, 1]} : vector<8x128xf32> to vector<1x16xf32>
    %220 = vector.shape_cast %219 : vector<1x16xf32> to vector<1x16x1xf32>
    %221 = vector.shape_cast %220 : vector<1x16x1xf32> to vector<16x1xf32>
    %222 = vector.broadcast %214 : vector<1x64xf32> to vector<16x64xf32>
    %223 = arith.mulf %222, %121 : vector<16x64xf32>
    %224 = math.exp %223 : vector<16x64xf32>
    %225 = arith.mulf %224, %202 : vector<16x64xf32>
    %226 = vector.broadcast %215 : vector<1x64xf32> to vector<16x64xf32>
    %227 = vector.broadcast %218 : vector<16x1xf32> to vector<16x64xf32>
    %228 = arith.mulf %226, %227 : vector<16x64xf32>
    %229 = arith.addf %225, %228 : vector<16x64xf32>
    %230 = vector.broadcast %221 : vector<16x1xf32> to vector<16x64xf32>
    %231 = arith.mulf %229, %230 : vector<16x64xf32>
    %cst_82 = arith.constant dense<0.000000e+00> : vector<64xf32>
    %232 = vector.multi_reduction <add>, %231, %cst_82 [0] : vector<16x64xf32> to vector<64xf32>
    %233 = vector.shape_cast %232 : vector<64xf32> to vector<1x64xf32>
    %c3_i32 = arith.constant 3 : i32
    %234 = vector.broadcast %c3_i32 : i32 to vector<8x1xi32>
    %235 = arith.cmpi eq, %120, %234 : vector<8x1xi32>
    %236 = vector.shape_cast %235 : vector<8x1xi1> to vector<8x1xi1>
    %237 = vector.broadcast %236 : vector<8x1xi1> to vector<8x64xi1>
    %238 = vector.shape_cast %233 : vector<1x64xf32> to vector<1x64xf32>
    %239 = vector.broadcast %238 : vector<1x64xf32> to vector<8x64xf32>
    %240 = arith.select %237, %239, %213 : vector<8x64xi1>, vector<8x64xf32>
    %241 = vector.extract_strided_slice %126 {offsets = [4, 0], sizes = [1, 64], strides = [1, 1]} : vector<8x64xf32> to vector<1x64xf32>
    %242 = vector.extract_strided_slice %129 {offsets = [4, 0], sizes = [1, 64], strides = [1, 1]} : vector<8x64xf32> to vector<1x64xf32>
    %243 = vector.extract_strided_slice %131 {offsets = [4, 2], sizes = [1, 16], strides = [1, 1]} : vector<8x128xf32> to vector<1x16xf32>
    %244 = vector.shape_cast %243 : vector<1x16xf32> to vector<1x16x1xf32>
    %245 = vector.shape_cast %244 : vector<1x16x1xf32> to vector<16x1xf32>
    %246 = vector.extract_strided_slice %131 {offsets = [4, 18], sizes = [1, 16], strides = [1, 1]} : vector<8x128xf32> to vector<1x16xf32>
    %247 = vector.shape_cast %246 : vector<1x16xf32> to vector<1x16x1xf32>
    %248 = vector.shape_cast %247 : vector<1x16x1xf32> to vector<16x1xf32>
    %249 = vector.broadcast %241 : vector<1x64xf32> to vector<16x64xf32>
    %250 = arith.mulf %249, %121 : vector<16x64xf32>
    %251 = math.exp %250 : vector<16x64xf32>
    %252 = arith.mulf %251, %229 : vector<16x64xf32>
    %253 = vector.broadcast %242 : vector<1x64xf32> to vector<16x64xf32>
    %254 = vector.broadcast %245 : vector<16x1xf32> to vector<16x64xf32>
    %255 = arith.mulf %253, %254 : vector<16x64xf32>
    %256 = arith.addf %252, %255 : vector<16x64xf32>
    %257 = vector.broadcast %248 : vector<16x1xf32> to vector<16x64xf32>
    %258 = arith.mulf %256, %257 : vector<16x64xf32>
    %cst_83 = arith.constant dense<0.000000e+00> : vector<64xf32>
    %259 = vector.multi_reduction <add>, %258, %cst_83 [0] : vector<16x64xf32> to vector<64xf32>
    %260 = vector.shape_cast %259 : vector<64xf32> to vector<1x64xf32>
    %c4_i32 = arith.constant 4 : i32
    %261 = vector.broadcast %c4_i32 : i32 to vector<8x1xi32>
    %262 = arith.cmpi eq, %120, %261 : vector<8x1xi32>
    %263 = vector.shape_cast %262 : vector<8x1xi1> to vector<8x1xi1>
    %264 = vector.broadcast %263 : vector<8x1xi1> to vector<8x64xi1>
    %265 = vector.shape_cast %260 : vector<1x64xf32> to vector<1x64xf32>
    %266 = vector.broadcast %265 : vector<1x64xf32> to vector<8x64xf32>
    %267 = arith.select %264, %266, %240 : vector<8x64xi1>, vector<8x64xf32>
    %268 = vector.extract_strided_slice %126 {offsets = [5, 0], sizes = [1, 64], strides = [1, 1]} : vector<8x64xf32> to vector<1x64xf32>
    %269 = vector.extract_strided_slice %129 {offsets = [5, 0], sizes = [1, 64], strides = [1, 1]} : vector<8x64xf32> to vector<1x64xf32>
    %270 = vector.extract_strided_slice %131 {offsets = [5, 2], sizes = [1, 16], strides = [1, 1]} : vector<8x128xf32> to vector<1x16xf32>
    %271 = vector.shape_cast %270 : vector<1x16xf32> to vector<1x16x1xf32>
    %272 = vector.shape_cast %271 : vector<1x16x1xf32> to vector<16x1xf32>
    %273 = vector.extract_strided_slice %131 {offsets = [5, 18], sizes = [1, 16], strides = [1, 1]} : vector<8x128xf32> to vector<1x16xf32>
    %274 = vector.shape_cast %273 : vector<1x16xf32> to vector<1x16x1xf32>
    %275 = vector.shape_cast %274 : vector<1x16x1xf32> to vector<16x1xf32>
    %276 = vector.broadcast %268 : vector<1x64xf32> to vector<16x64xf32>
    %277 = arith.mulf %276, %121 : vector<16x64xf32>
    %278 = math.exp %277 : vector<16x64xf32>
    %279 = arith.mulf %278, %256 : vector<16x64xf32>
    %280 = vector.broadcast %269 : vector<1x64xf32> to vector<16x64xf32>
    %281 = vector.broadcast %272 : vector<16x1xf32> to vector<16x64xf32>
    %282 = arith.mulf %280, %281 : vector<16x64xf32>
    %283 = arith.addf %279, %282 : vector<16x64xf32>
    %284 = vector.broadcast %275 : vector<16x1xf32> to vector<16x64xf32>
    %285 = arith.mulf %283, %284 : vector<16x64xf32>
    %cst_84 = arith.constant dense<0.000000e+00> : vector<64xf32>
    %286 = vector.multi_reduction <add>, %285, %cst_84 [0] : vector<16x64xf32> to vector<64xf32>
    %287 = vector.shape_cast %286 : vector<64xf32> to vector<1x64xf32>
    %c5_i32 = arith.constant 5 : i32
    %288 = vector.broadcast %c5_i32 : i32 to vector<8x1xi32>
    %289 = arith.cmpi eq, %120, %288 : vector<8x1xi32>
    %290 = vector.shape_cast %289 : vector<8x1xi1> to vector<8x1xi1>
    %291 = vector.broadcast %290 : vector<8x1xi1> to vector<8x64xi1>
    %292 = vector.shape_cast %287 : vector<1x64xf32> to vector<1x64xf32>
    %293 = vector.broadcast %292 : vector<1x64xf32> to vector<8x64xf32>
    %294 = arith.select %291, %293, %267 : vector<8x64xi1>, vector<8x64xf32>
    %295 = vector.extract_strided_slice %126 {offsets = [6, 0], sizes = [1, 64], strides = [1, 1]} : vector<8x64xf32> to vector<1x64xf32>
    %296 = vector.extract_strided_slice %129 {offsets = [6, 0], sizes = [1, 64], strides = [1, 1]} : vector<8x64xf32> to vector<1x64xf32>
    %297 = vector.extract_strided_slice %131 {offsets = [6, 2], sizes = [1, 16], strides = [1, 1]} : vector<8x128xf32> to vector<1x16xf32>
    %298 = vector.shape_cast %297 : vector<1x16xf32> to vector<1x16x1xf32>
    %299 = vector.shape_cast %298 : vector<1x16x1xf32> to vector<16x1xf32>
    %300 = vector.extract_strided_slice %131 {offsets = [6, 18], sizes = [1, 16], strides = [1, 1]} : vector<8x128xf32> to vector<1x16xf32>
    %301 = vector.shape_cast %300 : vector<1x16xf32> to vector<1x16x1xf32>
    %302 = vector.shape_cast %301 : vector<1x16x1xf32> to vector<16x1xf32>
    %303 = vector.broadcast %295 : vector<1x64xf32> to vector<16x64xf32>
    %304 = arith.mulf %303, %121 : vector<16x64xf32>
    %305 = math.exp %304 : vector<16x64xf32>
    %306 = arith.mulf %305, %283 : vector<16x64xf32>
    %307 = vector.broadcast %296 : vector<1x64xf32> to vector<16x64xf32>
    %308 = vector.broadcast %299 : vector<16x1xf32> to vector<16x64xf32>
    %309 = arith.mulf %307, %308 : vector<16x64xf32>
    %310 = arith.addf %306, %309 : vector<16x64xf32>
    %311 = vector.broadcast %302 : vector<16x1xf32> to vector<16x64xf32>
    %312 = arith.mulf %310, %311 : vector<16x64xf32>
    %cst_85 = arith.constant dense<0.000000e+00> : vector<64xf32>
    %313 = vector.multi_reduction <add>, %312, %cst_85 [0] : vector<16x64xf32> to vector<64xf32>
    %314 = vector.shape_cast %313 : vector<64xf32> to vector<1x64xf32>
    %c6_i32 = arith.constant 6 : i32
    %315 = vector.broadcast %c6_i32 : i32 to vector<8x1xi32>
    %316 = arith.cmpi eq, %120, %315 : vector<8x1xi32>
    %317 = vector.shape_cast %316 : vector<8x1xi1> to vector<8x1xi1>
    %318 = vector.broadcast %317 : vector<8x1xi1> to vector<8x64xi1>
    %319 = vector.shape_cast %314 : vector<1x64xf32> to vector<1x64xf32>
    %320 = vector.broadcast %319 : vector<1x64xf32> to vector<8x64xf32>
    %321 = arith.select %318, %320, %294 : vector<8x64xi1>, vector<8x64xf32>
    %322 = vector.extract_strided_slice %126 {offsets = [7, 0], sizes = [1, 64], strides = [1, 1]} : vector<8x64xf32> to vector<1x64xf32>
    %323 = vector.extract_strided_slice %129 {offsets = [7, 0], sizes = [1, 64], strides = [1, 1]} : vector<8x64xf32> to vector<1x64xf32>
    %324 = vector.extract_strided_slice %131 {offsets = [7, 2], sizes = [1, 16], strides = [1, 1]} : vector<8x128xf32> to vector<1x16xf32>
    %325 = vector.shape_cast %324 : vector<1x16xf32> to vector<1x16x1xf32>
    %326 = vector.shape_cast %325 : vector<1x16x1xf32> to vector<16x1xf32>
    %327 = vector.extract_strided_slice %131 {offsets = [7, 18], sizes = [1, 16], strides = [1, 1]} : vector<8x128xf32> to vector<1x16xf32>
    %328 = vector.shape_cast %327 : vector<1x16xf32> to vector<1x16x1xf32>
    %329 = vector.shape_cast %328 : vector<1x16x1xf32> to vector<16x1xf32>
    %330 = vector.broadcast %322 : vector<1x64xf32> to vector<16x64xf32>
    %331 = arith.mulf %330, %121 : vector<16x64xf32>
    %332 = math.exp %331 : vector<16x64xf32>
    %333 = arith.mulf %332, %310 : vector<16x64xf32>
    %334 = vector.broadcast %323 : vector<1x64xf32> to vector<16x64xf32>
    %335 = vector.broadcast %326 : vector<16x1xf32> to vector<16x64xf32>
    %336 = arith.mulf %334, %335 : vector<16x64xf32>
    %337 = arith.addf %333, %336 : vector<16x64xf32>
    %338 = vector.broadcast %329 : vector<16x1xf32> to vector<16x64xf32>
    %339 = arith.mulf %337, %338 : vector<16x64xf32>
    %cst_86 = arith.constant dense<0.000000e+00> : vector<64xf32>
    %340 = vector.multi_reduction <add>, %339, %cst_86 [0] : vector<16x64xf32> to vector<64xf32>
    %341 = vector.shape_cast %340 : vector<64xf32> to vector<1x64xf32>
    %c7_i32 = arith.constant 7 : i32
    %342 = vector.broadcast %c7_i32 : i32 to vector<8x1xi32>
    %343 = arith.cmpi eq, %120, %342 : vector<8x1xi32>
    %344 = vector.shape_cast %343 : vector<8x1xi1> to vector<8x1xi1>
    %345 = vector.broadcast %344 : vector<8x1xi1> to vector<8x64xi1>
    %346 = vector.shape_cast %341 : vector<1x64xf32> to vector<1x64xf32>
    %347 = vector.broadcast %346 : vector<1x64xf32> to vector<8x64xf32>
    %348 = arith.select %345, %347, %321 : vector<8x64xi1>, vector<8x64xf32>
    %349 = arith.index_cast %124 : i32 to index
    %c0_87 = arith.constant 0 : index
    %350 = vector.load %arg30[%349, %c0_87] : memref<8x64xf32, #tpu.memory_space<vmem>>, vector<8x64xf32>
    tpu.vector_store %arg30[%349, %c0_87], %348 {strides = array<i32>} : memref<8x64xf32, #tpu.memory_space<vmem>>, vector<8x64xf32>,
    %c1_i32_88 = arith.constant 1 : i32
    %c0_89 = arith.constant 0 : index
    %c0_90 = arith.constant 0 : index
    %351 = vector.load %arg32[%c0_89, %c0_90] : memref<16x64xf32, #tpu.memory_space<vmem>>, vector<16x64xf32>
    tpu.vector_store %arg32[%c0_89, %c0_90], %337 {strides = array<i32>} : memref<16x64xf32, #tpu.memory_space<vmem>>, vector<16x64xf32>,
    %c0_91 = arith.constant 0 : index
    %c0_92 = arith.constant 0 : index
    %352 = vector.load %arg30[%c0_91, %c0_92] : memref<8x64xf32, #tpu.memory_space<vmem>>, vector<8x64xf32>
    %c0_93 = arith.constant 0 : index
    %c0_94 = arith.constant 0 : index
    %353 = vector.load %arg27[%c0_93, %c0_94] : memref<8x64xf32, #tpu.memory_space<vmem>>, vector<8x64xf32>
    %c0_95 = arith.constant 0 : index
    %c0_96 = arith.constant 0 : index
    %354 = vector.load %arg16[%c0_95, %c0_96] : memref<1x64xf32, #tpu.memory_space<vmem>>, vector<1x64xf32>
    %355 = vector.broadcast %354 : vector<1x64xf32> to vector<8x64xf32>
    %356 = arith.mulf %353, %355 : vector<8x64xf32>
    %357 = arith.addf %352, %356 : vector<8x64xf32>
    %c0_97 = arith.constant 0 : index
    %c0_98 = arith.constant 0 : index
    %358 = vector.load %arg26[%c0_97, %c0_98] : memref<8x64xf32, #tpu.memory_space<vmem>>, vector<8x64xf32>
    %359 = arith.mulf %357, %358 : vector<8x64xf32>
    %360 = arith.truncf %359 : vector<8x64xf32> to vector<8x64xbf16>
    %c0_99 = arith.constant 0 : index
    %c0_100 = arith.constant 0 : index
    %361 = vector.load %arg17[%c0_99, %c0_100] : memref<64x32xbf16, #tpu.memory_space<vmem>>, vector<64x32xbf16>
    %cst_101 = arith.constant dense<0.000000e+00> : vector<8x32xf32>
    %362 = tpu.matmul %360, %361, %cst_101 {dimension_numbers = #tpu.dot_dimension_numbers<[1], [0], [0], [1], [0, 0, 1, 1], [], []>} : vector<8x64xbf16>, vector<64x32xbf16>, vector<8x32xf32> -> vector<8x32xf32>
    %363 = arith.truncf %362 : vector<8x32xf32> to vector<8x32xbf16>
    %c0_102 = arith.constant 0 : index
    %c0_103 = arith.constant 0 : index
    %364 = vector.load %arg18[%c0_102, %c0_103] : memref<32x8xbf16, #tpu.memory_space<vmem>>, vector<32x8xbf16>
    %cst_104 = arith.constant dense<0.000000e+00> : vector<8x8xf32>
    %365 = tpu.matmul %363, %364, %cst_104 {dimension_numbers = #tpu.dot_dimension_numbers<[1], [0], [0], [1], [0, 0, 1, 1], [], []>} : vector<8x32xbf16>, vector<32x8xbf16>, vector<8x8xf32> -> vector<8x8xf32>
    %c0_105 = arith.constant 0 : index
    %c0_106 = arith.constant 0 : index
    %366 = vector.load %arg19[%c0_105, %c0_106] : memref<1x8xf32, #tpu.memory_space<vmem>>, vector<1x8xf32>
    %367 = vector.broadcast %366 : vector<1x8xf32> to vector<8x8xf32>
    %368 = arith.addf %365, %367 : vector<8x8xf32>
    %369 = arith.negf %368 : vector<8x8xf32>
    %370 = math.exp %369 : vector<8x8xf32>
    %cst_107 = arith.constant 1.000000e+00 : f32
    %371 = vector.broadcast %cst_107 : f32 to vector<8x8xf32>
    %372 = arith.addf %371, %370 : vector<8x8xf32>
    %373 = arith.divf %371, %372 : vector<8x8xf32>
    %374 = arith.mulf %368, %373 : vector<8x8xf32>
    %c0_108 = arith.constant 0 : index
    %c0_109 = arith.constant 0 : index
    %375 = vector.load %arg25[%c0_108, %c0_109] : memref<8x32xf32, #tpu.memory_space<vmem>>, vector<8x32xf32>
    %376 = arith.truncf %375 : vector<8x32xf32> to vector<8x32xbf16>
    %c0_110 = arith.constant 0 : index
    %c0_111 = arith.constant 0 : index
    %377 = vector.load %arg20[%c0_110, %c0_111] : memref<32x8xbf16, #tpu.memory_space<vmem>>, vector<32x8xbf16>
    %cst_112 = arith.constant dense<0.000000e+00> : vector<8x8xf32>
    %378 = tpu.matmul %376, %377, %cst_112 {dimension_numbers = #tpu.dot_dimension_numbers<[1], [0], [0], [1], [0, 0, 1, 1], [], []>} : vector<8x32xbf16>, vector<32x8xbf16>, vector<8x8xf32> -> vector<8x8xf32>
    %c0_113 = arith.constant 0 : index
    %c0_114 = arith.constant 0 : index
    %379 = vector.load %arg21[%c0_113, %c0_114] : memref<1x8xf32, #tpu.memory_space<vmem>>, vector<1x8xf32>
    %380 = vector.broadcast %379 : vector<1x8xf32> to vector<8x8xf32>
    %381 = arith.addf %378, %380 : vector<8x8xf32>
    %382 = arith.negf %381 : vector<8x8xf32>
    %383 = math.exp %382 : vector<8x8xf32>
    %cst_115 = arith.constant 1.000000e+00 : f32
    %384 = vector.broadcast %cst_115 : f32 to vector<8x8xf32>
    %385 = arith.addf %384, %383 : vector<8x8xf32>
    %386 = arith.divf %384, %385 : vector<8x8xf32>
    %387 = arith.mulf %381, %386 : vector<8x8xf32>
    %388 = arith.mulf %374, %387 : vector<8x8xf32>
    %389 = arith.truncf %388 : vector<8x8xf32> to vector<8x8xbf16>
    %c0_116 = arith.constant 0 : index
    %c0_117 = arith.constant 0 : index
    %390 = vector.load %arg22[%c0_116, %c0_117] : memref<8x32xbf16, #tpu.memory_space<vmem>>, vector<8x32xbf16>
    %cst_118 = arith.constant dense<0.000000e+00> : vector<8x32xf32>
    %391 = tpu.matmul %389, %390, %cst_118 {dimension_numbers = #tpu.dot_dimension_numbers<[1], [0], [0], [1], [0, 0, 1, 1], [], []>} : vector<8x8xbf16>, vector<8x32xbf16>, vector<8x32xf32> -> vector<8x32xf32>
    %c0_119 = arith.constant 0 : index
    %c0_120 = arith.constant 0 : index
    %392 = vector.load %arg23[%c0_119, %c0_120] : memref<1x32xf32, #tpu.memory_space<vmem>>, vector<1x32xf32>
    %393 = vector.broadcast %392 : vector<1x32xf32> to vector<8x32xf32>
    %394 = arith.addf %391, %393 : vector<8x32xf32>
    %395 = vector.broadcast %9 : vector<1x32xf32> to vector<8x32xf32>
    %396 = arith.mulf %395, %394 : vector<8x32xf32>
    %397 = arith.addf %4, %396 : vector<8x32xf32>
    %c0_121 = arith.constant 0 : index
    %c0_122 = arith.constant 0 : index
    %c0_123 = arith.constant 0 : index
    %398 = vector.load %arg24[%c0_121, %c0_122, %c0_123] : memref<1x8x32xf32, #tpu.memory_space<vmem>>, vector<1x8x32xf32>
    %399 = vector.shape_cast %398 : vector<1x8x32xf32> to vector<8x32xf32>
    %400 = vector.shape_cast %397 : vector<8x32xf32> to vector<1x8x32xf32>
    tpu.vector_store %arg24[%c0_121, %c0_122, %c0_123], %400 {strides = array<i32>} : memref<1x8x32xf32, #tpu.memory_space<vmem>>, vector<1x8x32xf32>,
    return
  }
  func.func @transform_0(%arg0: i32, %arg1: i32) -> (i32, i32, i32) {
    %c0_i32 = arith.constant 0 : i32
    %c0_i32_0 = arith.constant 0 : i32
    return %arg0, %arg1, %c0_i32 : i32, i32, i32
  }
  func.func @transform_1(%arg0: i32, %arg1: i32) -> (i32, i32, i32) {
    %c0_i32 = arith.constant 0 : i32
    %c0_i32_0 = arith.constant 0 : i32
    %c0_i32_1 = arith.constant 0 : i32
    return %arg0, %c0_i32, %c0_i32_0 : i32, i32, i32
  }
  func.func @transform_2(%arg0: i32, %arg1: i32) -> (i32, i32) {
    %c0_i32 = arith.constant 0 : i32
    %c0_i32_0 = arith.constant 0 : i32
    %c0_i32_1 = arith.constant 0 : i32
    return %c0_i32, %c0_i32_0 : i32, i32
  }
  func.func @transform_3(%arg0: i32, %arg1: i32) -> (i32, i32) {
    %c0_i32 = arith.constant 0 : i32
    %c0_i32_0 = arith.constant 0 : i32
    %c0_i32_1 = arith.constant 0 : i32
    return %c0_i32, %c0_i32_0 : i32, i32
  }
  func.func @transform_4(%arg0: i32, %arg1: i32) -> (i32, i32) {
    %c0_i32 = arith.constant 0 : i32
    %c0_i32_0 = arith.constant 0 : i32
    %c0_i32_1 = arith.constant 0 : i32
    return %c0_i32, %c0_i32_0 : i32, i32
  }
  func.func @transform_5(%arg0: i32, %arg1: i32) -> (i32, i32) {
    %c0_i32 = arith.constant 0 : i32
    %c0_i32_0 = arith.constant 0 : i32
    %c0_i32_1 = arith.constant 0 : i32
    return %c0_i32, %c0_i32_0 : i32, i32
  }
  func.func @transform_6(%arg0: i32, %arg1: i32) -> (i32, i32) {
    %c0_i32 = arith.constant 0 : i32
    %c0_i32_0 = arith.constant 0 : i32
    %c0_i32_1 = arith.constant 0 : i32
    return %c0_i32, %c0_i32_0 : i32, i32
  }
  func.func @transform_7(%arg0: i32, %arg1: i32) -> (i32, i32) {
    %c0_i32 = arith.constant 0 : i32
    %c0_i32_0 = arith.constant 0 : i32
    %c0_i32_1 = arith.constant 0 : i32
    return %c0_i32, %c0_i32_0 : i32, i32
  }
  func.func @transform_8(%arg0: i32, %arg1: i32) -> (i32, i32) {
    %c0_i32 = arith.constant 0 : i32
    %c0_i32_0 = arith.constant 0 : i32
    %c0_i32_1 = arith.constant 0 : i32
    return %c0_i32, %c0_i32_0 : i32, i32
  }
  func.func @transform_9(%arg0: i32, %arg1: i32) -> (i32, i32) {
    %c0_i32 = arith.constant 0 : i32
    %c0_i32_0 = arith.constant 0 : i32
    %c0_i32_1 = arith.constant 0 : i32
    return %c0_i32, %c0_i32_0 : i32, i32
  }
  func.func @transform_10(%arg0: i32, %arg1: i32) -> (i32, i32) {
    %c0_i32 = arith.constant 0 : i32
    %c0_i32_0 = arith.constant 0 : i32
    %c0_i32_1 = arith.constant 0 : i32
    return %c0_i32, %c0_i32_0 : i32, i32
  }
  func.func @transform_11(%arg0: i32, %arg1: i32) -> (i32, i32) {
    %c0_i32 = arith.constant 0 : i32
    %c0_i32_0 = arith.constant 0 : i32
    %c0_i32_1 = arith.constant 0 : i32
    return %c0_i32, %c0_i32_0 : i32, i32
  }
  func.func @transform_12(%arg0: i32, %arg1: i32) -> (i32, i32) {
    %c0_i32 = arith.constant 0 : i32
    %c0_i32_0 = arith.constant 0 : i32
    %c0_i32_1 = arith.constant 0 : i32
    return %c0_i32, %c0_i32_0 : i32, i32
  }
  func.func @transform_13(%arg0: i32, %arg1: i32) -> (i32, i32) {
    %c0_i32 = arith.constant 0 : i32
    %c0_i32_0 = arith.constant 0 : i32
    %c0_i32_1 = arith.constant 0 : i32
    return %c0_i32, %c0_i32_0 : i32, i32
  }
  func.func @transform_14(%arg0: i32, %arg1: i32) -> (i32, i32) {
    %c0_i32 = arith.constant 0 : i32
    %c0_i32_0 = arith.constant 0 : i32
    %c0_i32_1 = arith.constant 0 : i32
    return %c0_i32, %c0_i32_0 : i32, i32
  }
  func.func @transform_15(%arg0: i32, %arg1: i32) -> (i32, i32) {
    %c0_i32 = arith.constant 0 : i32
    %c0_i32_0 = arith.constant 0 : i32
    %c0_i32_1 = arith.constant 0 : i32
    return %c0_i32, %c0_i32_0 : i32, i32
  }
  func.func @transform_16(%arg0: i32, %arg1: i32) -> (i32, i32) {
    %c0_i32 = arith.constant 0 : i32
    %c0_i32_0 = arith.constant 0 : i32
    %c0_i32_1 = arith.constant 0 : i32
    return %c0_i32, %c0_i32_0 : i32, i32
  }
  func.func @transform_17(%arg0: i32, %arg1: i32) -> (i32, i32) {
    %c0_i32 = arith.constant 0 : i32
    %c0_i32_0 = arith.constant 0 : i32
    %c0_i32_1 = arith.constant 0 : i32
    return %c0_i32, %c0_i32_0 : i32, i32
  }
  func.func @transform_18(%arg0: i32, %arg1: i32) -> (i32, i32) {
    %c0_i32 = arith.constant 0 : i32
    %c0_i32_0 = arith.constant 0 : i32
    %c0_i32_1 = arith.constant 0 : i32
    return %c0_i32, %c0_i32_0 : i32, i32
  }
  func.func @transform_19(%arg0: i32, %arg1: i32) -> (i32, i32) {
    %c0_i32 = arith.constant 0 : i32
    %c0_i32_0 = arith.constant 0 : i32
    %c0_i32_1 = arith.constant 0 : i32
    return %c0_i32, %c0_i32_0 : i32, i32
  }
  func.func @transform_20(%arg0: i32, %arg1: i32) -> (i32, i32) {
    %c0_i32 = arith.constant 0 : i32
    %c0_i32_0 = arith.constant 0 : i32
    %c0_i32_1 = arith.constant 0 : i32
    return %c0_i32, %c0_i32_0 : i32, i32
  }
  func.func @transform_21(%arg0: i32, %arg1: i32) -> (i32, i32) {
    %c0_i32 = arith.constant 0 : i32
    %c0_i32_0 = arith.constant 0 : i32
    %c0_i32_1 = arith.constant 0 : i32
    return %c0_i32, %c0_i32_0 : i32, i32
  }
  func.func @transform_22(%arg0: i32, %arg1: i32) -> (i32, i32, i32) {
    %c0_i32 = arith.constant 0 : i32
    %c0_i32_0 = arith.constant 0 : i32
    return %arg0, %arg1, %c0_i32 : i32, i32, i32
  }
}

</mosaic_0001>

<llo_original>
// kernel: _lambda_.2
$region0: #{_lambda_.2}
  #allocation0 [shape = 'u32[]', space=smem, size = 0x4, offset = 0x4, fixed_abs, tag = 'smem constant byte address 0x4 - core index']
  #allocation1 [shape = 'u32[144,128]{1,0:T(1,128)}', space=vmem, size = 0x12000, scoped, tag = 'internal scratch']
  %s0 = inlined_call_operand.hbm [shape: f32[2,32], index: 0, kind: input, shape index: {}]
  %s1 = inlined_call_operand.hbm [shape: f32[32,96], index: 1, kind: input, shape index: {}]
  %s2 = inlined_call_operand.vmem [shape: f32[1,96], index: 2, kind: input, shape index: {}]
  %s3 = inlined_call_operand.vmem [shape: f32[2,1,96], index: 3, kind: output, shape index: {}]
  %s4 = sld [smem:[#allocation0]]
  $region30: #{_lambda_.2} parent=0
    _
  %s6 = ssub.s32 1, %s4
  %s7 = scalar_select 0, %s6, %s4
  $region1: #{_lambda_.2} parent=0
    #allocation2 [shape = 'u8[1024]{0}', space=vmem, size = 0x400, scoped, tag = 'input window, operand 0, single buffered']
    #allocation3 [shape = 's32[1]{0}', space=sflag, size = 0x4, scoped, tag = 'scoped memory for _lambda_.2']
    #allocation4 [shape = 'u8[16384]{0}', space=vmem, size = 0x4000, scoped, tag = 'input window, operand 1, single buffered']
    #allocation5 [shape = 's32[1]{0}', space=sflag, size = 0x4, scoped, tag = 'scoped memory for _lambda_.2']
    %8 = vsyncpa [#allocation3], 0
    %9 = vsyncpa [#allocation5], 0
    // Predicated region
    $region2: #{_lambda_.2} parent=1 // pred_check
      _
    $region3: #{_lambda_.2} parent=1 // pred_check_branch
      %11 = sbr.rel (0) target = $region5
    $region4: #{_lambda_.2} parent=1 // pred_region
      %s13 = ssub.s32 32, 32
      %14 = vsyncadd [#allocation3], %s13
      %s16 = sshll.u32 [#allocation2], 4
      %s17 = int_to_ptr.vmem [resolvable:$true] %s16
      %19 = dma.hbm_to_vmem [thread:$0]  %s0, 32, %s17, [#allocation3]
    $region5: #{_lambda_.2} parent=1 // pred_fallthru
      _
    // Predicated region
    $region6: #{_lambda_.2} parent=1 // pred_check
      _
    $region7: #{_lambda_.2} parent=1 // pred_check_branch
      %21 = sbr.rel (0) target = $region9
    $region8: #{_lambda_.2} parent=1 // pred_region
      %s23 = ssub.s32 512, 512
      %24 = vsyncadd [#allocation5], %s23
      %s25 = sshll.u32 [#allocation4], 4
      %s26 = int_to_ptr.vmem [resolvable:$true] %s25
      %31 = dma.hbm_to_vmem [thread:$0]  %s1, 512, %s26, [#allocation5], 128, 128, 8
    $region9: #{_lambda_.2} parent=1 // pred_fallthru
      _
    // Predicated region
    $region10: #{_lambda_.2} parent=1 // pred_check
      _
    $region11: #{_lambda_.2} parent=1 // pred_check_branch
      %33 = sbr.rel (0) target = $region13
    $region12: #{_lambda_.2} parent=1 // pred_region
      _
    $region13: #{_lambda_.2} parent=1 // pred_fallthru
      _
    // Predicated region
    $region14: #{_lambda_.2} parent=1 // pred_check
      _
    $region15: #{_lambda_.2} parent=1 // pred_check_branch
      %35 = sbr.rel (0) target = $region17
    $region16: #{_lambda_.2} parent=1 // pred_region
      %36 = dma.done [#allocation3], 32
    $region17: #{_lambda_.2} parent=1 // pred_fallthru
      _
    // Predicated region
    $region18: #{_lambda_.2} parent=1 // pred_check
      _
    $region19: #{_lambda_.2} parent=1 // pred_check_branch
      %38 = sbr.rel (0) target = $region21
    $region20: #{_lambda_.2} parent=1 // pred_region
      %39 = dma.done [#allocation5], 512
    $region21: #{_lambda_.2} parent=1 // pred_fallthru
      _
    %v40 = vld [vmem:[#allocation2] sm:$0x3]
    %v41 = vxor.u32 %v40, 2147483648
    %v42 = vmul.f32 %v41, 1.442695
    %v43 = vpow.pop %v42
    %v44 = vadd.f32 %v43, 1.0
    %v45 = vrcp.pop %v44
    %v46 = vmul.f32 1.0, %v45
    %v47 = vmul.f32 %v40, %v46
    %v48 = vld [vmem:[#allocation4] sm:$0xff]
    %v49 = vld [vmem:[#allocation4 + $0x8] sm:$0xff]
    %v50 = vld [vmem:[#allocation4 + $0x10] sm:$0xff]
    %v51 = vld [vmem:[#allocation4 + $0x18] sm:$0xff]
    %v52 = vld [vmem:[%s2] sm:$0x1]
    %v54 = vlaneseq
    %v55 = vshrl.u32 %v54, 7
    %v56 = vsub.s32 0, %v55
    %v57 = vrot.slane %v52, %v56
    %vm59 = vcmask 261120
    %v61 = vsel %vm59, %v47, 0
    %63 = vmatprep.subr.mxu0 0.0
    %64 = vmatpush1.msra.mxu0 %v48
    %65 = vmatprep.subr.mxu0 0.0
    %66 = vmatpush1.msra.mxu0 %v49
    %67 = vmatprep.subr.mxu0 0.0
    %68 = vmatpush1.msra.mxu0 %v50
    %69 = vmatprep.subr.mxu0 0.0
    %70 = vmatpush1.msra.mxu0 %v51
    %71 = vmatprep.subr.mxu0 0.0
    %72 = vmatpush1.msra.mxu0 0.0
    %73 = vmatprep.subr.mxu0 0.0
    %74 = vmatpush1.msra.mxu0 0.0
    %75 = vmatprep.subr.mxu0 0.0
    %76 = vmatpush1.msra.mxu0 0.0
    %77 = vmatprep.subr.mxu0 0.0
    %78 = vmatpush1.msra.mxu0 0.0
    %79 = vmatprep.subr.mxu0 0.0
    %80 = vmatpush1.msra.mxu0 0.0
    %81 = vmatprep.subr.mxu0 0.0
    %82 = vmatpush1.msra.mxu0 0.0
    %83 = vmatprep.subr.mxu0 0.0
    %84 = vmatpush1.msra.mxu0 0.0
    %85 = vmatprep.subr.mxu0 0.0
    %86 = vmatpush1.msra.mxu0 0.0
    %87 = vmatprep.subr.mxu0 0.0
    %88 = vmatpush1.msra.mxu0 0.0
    %89 = vmatprep.subr.mxu0 0.0
    %90 = vmatpush1.msra.mxu0 0.0
    %91 = vmatprep.subr.mxu0 0.0
    %92 = vmatpush1.msra.mxu0 0.0
    %93 = vmatprep.subr.mxu0 0.0
    %94 = vmatpush1.msra.mxu0 0.0
    %95 = vmatprep.subr.mxu0 0.0
    %96 = vmatpush1.msra.mxu0 0.0
    %97 = vmatprep.subr.mxu0 0.0
    %98 = vmatpush1.msra.mxu0 0.0
    %99 = vmatprep.subr.mxu0 0.0
    %100 = vmatpush1.msra.mxu0 0.0
    %101 = vmatprep.subr.mxu0 0.0
    %102 = vmatpush1.msra.mxu0 0.0
    %103 = vmatprep.subr.mxu0 0.0
    %104 = vmatpush1.msra.mxu0 0.0
    %105 = vmatprep.subr.mxu0 0.0
    %106 = vmatpush1.msra.mxu0 0.0
    %107 = vmatprep.subr.mxu0 0.0
    %108 = vmatpush1.msra.mxu0 0.0
    %109 = vmatprep.subr.mxu0 0.0
    %110 = vmatpush1.msra.mxu0 0.0
    %111 = vmatprep.subr.mxu0 0.0
    %112 = vmatpush1.msra.mxu0 0.0
    %113 = vmatprep.subr.mxu0 0.0
    %114 = vmatpush1.msra.mxu0 0.0
    %115 = vmatprep.subr.mxu0 0.0
    %116 = vmatpush1.msra.mxu0 0.0
    %117 = vmatprep.subr.mxu0 0.0
    %118 = vmatpush1.msra.mxu0 0.0
    %119 = vmatprep.subr.mxu0 0.0
    %120 = vmatpush1.msra.mxu0 0.0
    %121 = vmatprep.subr.mxu0 0.0
    %122 = vmatpush1.msra.mxu0 0.0
    %123 = vmatprep.subr.mxu0 0.0
    %124 = vmatpush1.msra.mxu0 0.0
    %125 = vmatprep.subr.mxu0 0.0
    %126 = vmatpush1.msra.mxu0 0.0
    %127 = vmatprep.mubr.f32.mxu0 0.0
    %128 = vmatmul.mubr.f32.gmra.mrb[0].mxu0 %v61
    %v129 = vpop.f32.mrb[0].mxu0
    %v130 = vadd.f32 %v57, %v129
    %v131 = vpop.f32.mrb[0].mxu0
    %132 = vdwg.mxu0
    %v135 = vunpack.c.l.s4 1966171168
    %v136 = vunpack.c.0.s8 %v135
    %v137 = vlaneseq
    %v138 = vshrl.u32 %v137, 7
    %v139 = vsub.s32 %v136, %v138
    %v140 = vrot.slane %v130, %v139
    %v141 = vcombine.high %v140, %v140
    %v143 = vunpack.c.l.s4 1966171168
    %v144 = vunpack.c.0.s8 %v143
    %v145 = vlaneseq
    %v146 = vshrl.u32 %v145, 7
    %v147 = vsub.s32 %v144, %v146
    %v148 = vrot.slane %v140, %v147
    %v150 = vunpack.c.l.s4 1966171168
    %v151 = vunpack.c.0.s8 %v150
    %v152 = vlaneseq
    %v153 = vshrl.u32 %v152, 7
    %v154 = vsub.s32 %v151, %v153
    %v155 = vrot.slane %v141, %v154
    %vm158 = vcmask 778240
    %159 = vst.msk [vmem:[%s3] sm:$0x1] %vm158, %v148
    %160 = vst.msk [vmem:[%s3 + $0x1] sm:$0x1] %vm158, %v155
    // Predicated region
    $region22: #{_lambda_.2} parent=1 // pred_check
      _
    $region23: #{_lambda_.2} parent=1 // pred_check_branch
      %162 = sbr.rel (0) target = $region25
    $region24: #{_lambda_.2} parent=1 // pred_region
      _
    $region25: #{_lambda_.2} parent=1 // pred_fallthru
      _
    // Predicated region
    $region26: #{_lambda_.2} parent=1 // pred_check
      _
    $region27: #{_lambda_.2} parent=1 // pred_check_branch
      %164 = sbr.rel (0) target = $region29
    $region28: #{_lambda_.2} parent=1 // pred_region
      _
    $region29: #{_lambda_.2} parent=1 // pred_fallthru
      _
    %165 = vsyncpa [#allocation3], 1
    %166 = vsyncpa [#allocation5], 1

// kernel: _lambda_.3
$region0: #{_lambda_.3}
  #allocation0 [shape = 'u32[]', space=smem, size = 0x4, offset = 0x4, fixed_abs, tag = 'smem constant byte address 0x4 - core index']
  #allocation1 [shape = 'u32[144,128]{1,0:T(1,128)}', space=vmem, size = 0x12000, scoped, tag = 'internal scratch']
  #allocation2 [shape = 'f32[8,32]{1,0:T(8,128)}', space=vmem, size = 0x1000, scoped, tag = 'scratch operand']
  #allocation3 [shape = 'f32[8,64]{1,0:T(8,128)}', space=vmem, size = 0x1000, scoped, tag = 'scratch operand']
  #allocation4 [shape = 'f32[8,64]{1,0:T(8,128)}', space=vmem, size = 0x1000, scoped, tag = 'scratch operand']
  #allocation5 [shape = 'f32[8,128]{1,0:T(8,128)}', space=vmem, size = 0x1000, scoped, tag = 'scratch operand']
  #allocation6 [shape = 'f32[8,64]{1,0:T(8,128)}', space=vmem, size = 0x1000, scoped, tag = 'scratch operand']
  #allocation7 [shape = 'f32[8,64]{1,0:T(8,128)}', space=vmem, size = 0x1000, scoped, tag = 'scratch operand']
  #allocation8 [shape = 'f32[16,64]{1,0:T(8,128)}', space=vmem, size = 0x2000, scoped, tag = 'scratch operand']
  #allocation9 [shape = 'f32[16,64]{1,0:T(8,128)}', space=vmem, size = 0x2000, scoped, tag = 'scratch operand']
  #allocation10 [shape = 'f32[3,64]{1,0:T(4,128)}', space=vmem, size = 0x800, scoped, tag = 'scratch operand']
  %s0 = inlined_call_operand.hbm [shape: f32[2,8,32], index: 0, kind: input, shape index: {}]
  %s1 = inlined_call_operand.vmem [shape: f32[2,1,96], index: 1, kind: input, shape index: {}]
  %s2 = inlined_call_operand.hbm [shape: bf16[32,8], index: 2, kind: input, shape index: {}]
  %s3 = inlined_call_operand.vmem [shape: f32[1,8], index: 3, kind: input, shape index: {}, may-alias: {3,17,19}]
  %s4 = inlined_call_operand.hbm [shape: bf16[8,32], index: 4, kind: input, shape index: {}]
  %s5 = inlined_call_operand.vmem [shape: f32[1,32], index: 5, kind: input, shape index: {}, may-alias: {5,21}]
  %s6 = inlined_call_operand.hbm [shape: bf16[32,64], index: 6, kind: input, shape index: {}]
  %s7 = inlined_call_operand.hbm [shape: bf16[32,64], index: 7, kind: input, shape index: {}]
  %s8 = inlined_call_operand.hbm [shape: f32[4,64], index: 8, kind: input, shape index: {}]
  %s9 = inlined_call_operand.vmem [shape: f32[1,64], index: 9, kind: input, shape index: {}]
  %s10 = inlined_call_operand.vmem [shape: f32[64,128], index: 10, kind: input, shape index: {}]
  %s11 = inlined_call_operand.hbm [shape: f32[128,64], index: 11, kind: input, shape index: {}]
  %s12 = inlined_call_operand.vmem [shape: f32[1,64], index: 12, kind: input, shape index: {}]
  %s13 = inlined_call_operand.hbm [shape: f32[16,64], index: 13, kind: input, shape index: {}]
  %s14 = inlined_call_operand.vmem [shape: f32[1,64], index: 14, kind: input, shape index: {}]
  %s15 = inlined_call_operand.vmem [shape: bf16[64,32], index: 15, kind: input, shape index: {}]
  %s16 = inlined_call_operand.vmem [shape: bf16[32,8], index: 16, kind: input, shape index: {}]
  %s17 = inlined_call_operand.vmem [shape: f32[1,8], index: 17, kind: input, shape index: {}, may-alias: {3,17,19}]
  %s18 = inlined_call_operand.vmem [shape: bf16[32,8], index: 18, kind: input, shape index: {}]
  %s19 = inlined_call_operand.vmem [shape: f32[1,8], index: 19, kind: input, shape index: {}, may-alias: {3,17,19}]
  %s20 = inlined_call_operand.hbm [shape: bf16[8,32], index: 20, kind: input, shape index: {}]
  %s21 = inlined_call_operand.vmem [shape: f32[1,32], index: 21, kind: input, shape index: {}, may-alias: {5,21}]
  %s22 = inlined_call_operand.hbm [shape: f32[2,8,32], index: 22, kind: output, shape index: {}]
  %s23 = sld [smem:[#allocation0]]
  $region161: #{_lambda_.3} parent=0
    _
  %s25 = ssub.s32 1, %s23
  %s26 = scalar_select 0, %s25, %s23
  $region1: #{_lambda_.3} parent=0
    #allocation11 [shape = 'u8[8192]{0}', space=vmem, size = 0x2000, scoped, tag = 'input window, operand 0']
    #allocation12 [shape = 's32[2]{0}', space=sflag, size = 0x8, scoped, tag = 'scoped memory for _lambda_.3']
    #allocation13 [shape = 's32[2]{0}', space=sflag, size = 0x8, scoped, tag = 'scoped memory for _lambda_.3']
    #allocation14 [shape = 'u8[8192]{0}', space=vmem, size = 0x2000, scoped, tag = 'input window, operand 2, single buffered']
    #allocation15 [shape = 's32[1]{0}', space=sflag, size = 0x4, scoped, tag = 'scoped memory for _lambda_.3']
    #allocation16 [shape = 'u8[2048]{0}', space=vmem, size = 0x800, scoped, tag = 'input window, operand 4, single buffered']
    #allocation17 [shape = 'u8[8192]{0}', space=vmem, size = 0x2000, scoped, tag = 'input window, operand 6, single buffered']
    #allocation18 [shape = 's32[1]{0}', space=sflag, size = 0x4, scoped, tag = 'scoped memory for _lambda_.3']
    #allocation19 [shape = 'u8[8192]{0}', space=vmem, size = 0x2000, scoped, tag = 'input window, operand 7, single buffered']
    #allocation20 [shape = 'u8[2048]{0}', space=vmem, size = 0x800, scoped, tag = 'input window, operand 8, single buffered']
    #allocation21 [shape = 's32[1]{0}', space=sflag, size = 0x4, scoped, tag = 'scoped memory for _lambda_.3']
    #allocation22 [shape = 'u8[65536]{0}', space=vmem, size = 0x10000, scoped, tag = 'input window, operand 11, single buffered']
    #allocation23 [shape = 'u8[8192]{0}', space=vmem, size = 0x2000, scoped, tag = 'input window, operand 13, single buffered']
    #allocation24 [shape = 's32[1]{0}', space=sflag, size = 0x4, scoped, tag = 'scoped memory for _lambda_.3']
    #allocation25 [shape = 'u8[2048]{0}', space=vmem, size = 0x800, scoped, tag = 'input window, operand 20, single buffered']
    #allocation26 [shape = 'u8[8192]{0}', space=vmem, size = 0x2000, scoped, tag = 'output window, operand 0']
    %27 = vsyncpa [#allocation12], 0
    %s28 = scalar_lea.sflag [#allocation12], 1
    %29 = vsyncpa %s28, 0
    %30 = vsyncpa [#allocation15], 0
    %31 = vsyncpa [#allocation18], 0
    %32 = vsyncpa [#allocation21], 0
    %33 = vsyncpa [#allocation24], 0
    %34 = vsyncpa [#allocation13], 0
    %s35 = scalar_lea.sflag [#allocation13], 1
    %36 = vsyncpa %s35, 0
    loop: start=0, step=1, limit=4
    $region2: #{_lambda_.3} parent=1 // loop_pre_header
      _
    $region3: #{_lambda_.3} parent=1 // loop_header
      %s38 = sphi 0, %s42
      %p39 = scmp.ge.s32.totalorder %s38, 4
      %s45 = sphi 0, %s57
      %s46 = sphi 0, %s53
      %s47 = sphi 0, %s45
      %s48 = sphi 0, %s46
      %s49 = sphi 0, %s47
      %s50 = sphi 0, %s48
      %s62 = sphi 0, %s64
      %s65 = sphi 0, %s62
      %s66 = sphi 0, %s65
      %s82 = sphi 0, %s66
      %s88 = sphi 0, %s90
      %s91 = sphi 0, %s88
      %s92 = sphi 0, %s91
      %s108 = sphi 0, %s92
      %s112 = sphi 0, %s112
      %s114 = sphi 0, %s112
      %s115 = sphi 0, %s114
      %s129 = sphi 0, %s115
      %s133 = sphi 0, %s133
      %s135 = sphi 0, %s133
      %s136 = sphi 0, %s135
      %s150 = sphi 0, %s136
      %s154 = sphi 0, %s154
      %s156 = sphi 0, %s154
      %s157 = sphi 0, %s156
      %s171 = sphi 0, %s157
      %s175 = sphi 0, %s175
      %s177 = sphi 0, %s175
      %s178 = sphi 0, %s177
      %s192 = sphi 0, %s178
      %s196 = sphi 0, %s196
      %s198 = sphi 0, %s196
      %s199 = sphi 0, %s198
      %s213 = sphi 0, %s199
      %s217 = sphi 0, %s217
      %s219 = sphi 0, %s217
      %s220 = sphi 0, %s219
      %s234 = sphi 0, %s220
      %s238 = sphi 0, %s238
      %s240 = sphi 0, %s238
      %s241 = sphi 0, %s240
      %s255 = sphi 0, %s241
      %s259 = sphi 0, %s259
      %s261 = sphi 0, %s259
      %s262 = sphi 0, %s261
      %s276 = sphi 0, %s262
      %s280 = sphi 0, %s280
      %s282 = sphi 0, %s280
      %s283 = sphi 0, %s282
      %s297 = sphi 0, %s283
      %s301 = sphi 0, %s301
      %s303 = sphi 0, %s301
      %s304 = sphi 0, %s303
      %s318 = sphi 0, %s304
      %s322 = sphi 0, %s322
      %s324 = sphi 0, %s322
      %s325 = sphi 0, %s324
      %s339 = sphi 0, %s325
      %s343 = sphi 0, %s343
      %s345 = sphi 0, %s343
      %s346 = sphi 0, %s345
      %s360 = sphi 0, %s346
      %s364 = sphi 0, %s364
      %s366 = sphi 0, %s364
      %s367 = sphi 0, %s366
      %s381 = sphi 0, %s367
      %s385 = sphi 0, %s385
      %s387 = sphi 0, %s385
      %s388 = sphi 0, %s387
      %s402 = sphi 0, %s388
      %s406 = sphi 0, %s406
      %s408 = sphi 0, %s406
      %s409 = sphi 0, %s408
      %s423 = sphi 0, %s409
      %s427 = sphi 0, %s427
      %s429 = sphi 0, %s427
      %s430 = sphi 0, %s429
      %s444 = sphi 0, %s430
      %s448 = sphi 0, %s448
      %s450 = sphi 0, %s448
      %s451 = sphi 0, %s450
      %s465 = sphi 0, %s451
      %s469 = sphi 0, %s469
      %s471 = sphi 0, %s469
      %s472 = sphi 0, %s471
      %s486 = sphi 0, %s472
      %s490 = sphi 0, %s490
      %s492 = sphi 0, %s490
      %s493 = sphi 0, %s492
      %s507 = sphi 0, %s493
      %s511 = sphi 0, %s511
      %s513 = sphi 0, %s511
      %s514 = sphi 0, %s513
      %s528 = sphi 0, %s514
      %s536 = sphi 0, %s538
      %s539 = sphi 0, %s536
      %s540 = sphi 0, %s539
      %s556 = sphi 0, %s540
    $region4: #{_lambda_.3} parent=1 // loop_header_branch
      %41 = sbr.rel (%p39) target = $region8
    $region5: #{_lambda_.3} parent=1 // loop_body
      %s43 = ssub.s32 %s38, 1
      %s44 = ssub.s32 %s38, 2
      %s51 = sadd.s32 1, %s46
      %p52 = scmp.ge.s32.totalorder %s51, 1
      %s53 = scalar_select %p52, 0, %s51
      %s54 = sadd.s32 1, %s45
      %s55 = scalar_select %p52, %s54, %s45
      %p56 = scmp.ge.s32.totalorder %s55, 2
      %s57 = scalar_select %p56, 0, %s55
      %s58 = ssub.s32 %s45, %s57
      %s59 = ssub.s32 %s46, %s53
      %s60 = sor.u32 %s58, %s59
      %p61 = scmp.eq.s32.totalorder %s60, 0
      %s63 = sadd.s32 %s62, 1
      %s64 = scalar_select %p61, %s62, %s63
      %p67 = pneg %p61
      %p68 = scmp.eq.s32.totalorder %s38, 1
      %p69 = por %p67, %p68
      %p70 = scmp.ne.s32.totalorder %s62, %s65
      %p71 = scmp.eq.s32.totalorder %s38, 0
      %p72 = por %p70, %p71
      %p73 = scmp.ne.s32.totalorder %s62, %s65
      %p74 = scmp.eq.s32.totalorder %s43, 1
      %p75 = por %p73, %p74
      %p76 = scmp.ne.s32.totalorder %s65, %s66
      %p77 = scmp.eq.s32.totalorder %s43, 0
      %p78 = por %p76, %p77
      %p79 = scmp.ne.s32.totalorder %s65, %s66
      %p80 = scmp.eq.s32.totalorder %s44, 1
      %p81 = por %p79, %p80
      %p83 = scmp.ne.s32.totalorder %s66, %s82
      %p84 = scmp.eq.s32.totalorder %s44, 0
      %p85 = por %p83, %p84
      %s86 = ssub.s32 %s45, %s57
      %p87 = scmp.eq.s32.totalorder %s86, 0
      %s89 = sadd.s32 %s88, 1
      %s90 = scalar_select %p87, %s88, %s89
      %p93 = pneg %p87
      %p94 = scmp.eq.s32.totalorder %s38, 1
      %p95 = por %p93, %p94
      %p96 = scmp.ne.s32.totalorder %s88, %s91
      %p97 = scmp.eq.s32.totalorder %s38, 0
      %p98 = por %p96, %p97
      %p99 = scmp.ne.s32.totalorder %s88, %s91
      %p100 = scmp.eq.s32.totalorder %s43, 1
      %p101 = por %p99, %p100
      %p102 = scmp.ne.s32.totalorder %s91, %s92
      %p103 = scmp.eq.s32.totalorder %s43, 0
      %p104 = por %p102, %p103
      %p105 = scmp.ne.s32.totalorder %s91, %s92
      %p106 = scmp.eq.s32.totalorder %s44, 1
      %p107 = por %p105, %p106
      %p109 = scmp.ne.s32.totalorder %s92, %s108
      %p110 = scmp.eq.s32.totalorder %s44, 0
      %p111 = por %p109, %p110
      %s113 = sadd.s32 %s112, 1
      %p116 = scmp.eq.s32.totalorder %s38, 1
      %p117 = scmp.ne.s32.totalorder %s112, %s114
      %p118 = scmp.eq.s32.totalorder %s38, 0
      %p119 = por %p117, %p118
      %p120 = scmp.ne.s32.totalorder %s112, %s114
      %p121 = scmp.eq.s32.totalorder %s43, 1
      %p122 = por %p120, %p121
      %p123 = scmp.ne.s32.totalorder %s114, %s115
      %p124 = scmp.eq.s32.totalorder %s43, 0
      %p125 = por %p123, %p124
      %p126 = scmp.ne.s32.totalorder %s114, %s115
      %p127 = scmp.eq.s32.totalorder %s44, 1
      %p128 = por %p126, %p127
      %p130 = scmp.ne.s32.totalorder %s115, %s129
      %p131 = scmp.eq.s32.totalorder %s44, 0
      %p132 = por %p130, %p131
      %s134 = sadd.s32 %s133, 1
      %p137 = scmp.eq.s32.totalorder %s38, 1
      %p138 = scmp.ne.s32.totalorder %s133, %s135
      %p139 = scmp.eq.s32.totalorder %s38, 0
      %p140 = por %p138, %p139
      %p141 = scmp.ne.s32.totalorder %s133, %s135
      %p142 = scmp.eq.s32.totalorder %s43, 1
      %p143 = por %p141, %p142
      %p144 = scmp.ne.s32.totalorder %s135, %s136
      %p145 = scmp.eq.s32.totalorder %s43, 0
      %p146 = por %p144, %p145
      %p147 = scmp.ne.s32.totalorder %s135, %s136
      %p148 = scmp.eq.s32.totalorder %s44, 1
      %p149 = por %p147, %p148
      %p151 = scmp.ne.s32.totalorder %s136, %s150
      %p152 = scmp.eq.s32.totalorder %s44, 0
      %p153 = por %p151, %p152
      %s155 = sadd.s32 %s154, 1
      %p158 = scmp.eq.s32.totalorder %s38, 1
      %p159 = scmp.ne.s32.totalorder %s154, %s156
      %p160 = scmp.eq.s32.totalorder %s38, 0
      %p161 = por %p159, %p160
      %p162 = scmp.ne.s32.totalorder %s154, %s156
      %p163 = scmp.eq.s32.totalorder %s43, 1
      %p164 = por %p162, %p163
      %p165 = scmp.ne.s32.totalorder %s156, %s157
      %p166 = scmp.eq.s32.totalorder %s43, 0
      %p167 = por %p165, %p166
      %p168 = scmp.ne.s32.totalorder %s156, %s157
      %p169 = scmp.eq.s32.totalorder %s44, 1
      %p170 = por %p168, %p169
      %p172 = scmp.ne.s32.totalorder %s157, %s171
      %p173 = scmp.eq.s32.totalorder %s44, 0
      %p174 = por %p172, %p173
      %s176 = sadd.s32 %s175, 1
      %p179 = scmp.eq.s32.totalorder %s38, 1
      %p180 = scmp.ne.s32.totalorder %s175, %s177
      %p181 = scmp.eq.s32.totalorder %s38, 0
      %p182 = por %p180, %p181
      %p183 = scmp.ne.s32.totalorder %s175, %s177
      %p184 = scmp.eq.s32.totalorder %s43, 1
      %p185 = por %p183, %p184
      %p186 = scmp.ne.s32.totalorder %s177, %s178
      %p187 = scmp.eq.s32.totalorder %s43, 0
      %p188 = por %p186, %p187
      %p189 = scmp.ne.s32.totalorder %s177, %s178
      %p190 = scmp.eq.s32.totalorder %s44, 1
      %p191 = por %p189, %p190
      %p193 = scmp.ne.s32.totalorder %s178, %s192
      %p194 = scmp.eq.s32.totalorder %s44, 0
      %p195 = por %p193, %p194
      %s197 = sadd.s32 %s196, 1
      %p200 = scmp.eq.s32.totalorder %s38, 1
      %p201 = scmp.ne.s32.totalorder %s196, %s198
      %p202 = scmp.eq.s32.totalorder %s38, 0
      %p203 = por %p201, %p202
      %p204 = scmp.ne.s32.totalorder %s196, %s198
      %p205 = scmp.eq.s32.totalorder %s43, 1
      %p206 = por %p204, %p205
      %p207 = scmp.ne.s32.totalorder %s198, %s199
      %p208 = scmp.eq.s32.totalorder %s43, 0
      %p209 = por %p207, %p208
      %p210 = scmp.ne.s32.totalorder %s198, %s199
      %p211 = scmp.eq.s32.totalorder %s44, 1
      %p212 = por %p210, %p211
      %p214 = scmp.ne.s32.totalorder %s199, %s213
      %p215 = scmp.eq.s32.totalorder %s44, 0
      %p216 = por %p214, %p215
      %s218 = sadd.s32 %s217, 1
      %p221 = scmp.eq.s32.totalorder %s38, 1
      %p222 = scmp.ne.s32.totalorder %s217, %s219
      %p223 = scmp.eq.s32.totalorder %s38, 0
      %p224 = por %p222, %p223
      %p225 = scmp.ne.s32.totalorder %s217, %s219
      %p226 = scmp.eq.s32.totalorder %s43, 1
      %p227 = por %p225, %p226
      %p228 = scmp.ne.s32.totalorder %s219, %s220
      %p229 = scmp.eq.s32.totalorder %s43, 0
      %p230 = por %p228, %p229
      %p231 = scmp.ne.s32.totalorder %s219, %s220
      %p232 = scmp.eq.s32.totalorder %s44, 1
      %p233 = por %p231, %p232
      %p235 = scmp.ne.s32.totalorder %s220, %s234
      %p236 = scmp.eq.s32.totalorder %s44, 0
      %p237 = por %p235, %p236
      %s239 = sadd.s32 %s238, 1
      %p242 = scmp.eq.s32.totalorder %s38, 1
      %p243 = scmp.ne.s32.totalorder %s238, %s240
      %p244 = scmp.eq.s32.totalorder %s38, 0
      %p245 = por %p243, %p244
      %p246 = scmp.ne.s32.totalorder %s238, %s240
      %p247 = scmp.eq.s32.totalorder %s43, 1
      %p248 = por %p246, %p247
      %p249 = scmp.ne.s32.totalorder %s240, %s241
      %p250 = scmp.eq.s32.totalorder %s43, 0
      %p251 = por %p249, %p250
      %p252 = scmp.ne.s32.totalorder %s240, %s241
      %p253 = scmp.eq.s32.totalorder %s44, 1
      %p254 = por %p252, %p253
      %p256 = scmp.ne.s32.totalorder %s241, %s255
      %p257 = scmp.eq.s32.totalorder %s44, 0
      %p258 = por %p256, %p257
      %s260 = sadd.s32 %s259, 1
      %p263 = scmp.eq.s32.totalorder %s38, 1
      %p264 = scmp.ne.s32.totalorder %s259, %s261
      %p265 = scmp.eq.s32.totalorder %s38, 0
      %p266 = por %p264, %p265
      %p267 = scmp.ne.s32.totalorder %s259, %s261
      %p268 = scmp.eq.s32.totalorder %s43, 1
      %p269 = por %p267, %p268
      %p270 = scmp.ne.s32.totalorder %s261, %s262
      %p271 = scmp.eq.s32.totalorder %s43, 0
      %p272 = por %p270, %p271
      %p273 = scmp.ne.s32.totalorder %s261, %s262
      %p274 = scmp.eq.s32.totalorder %s44, 1
      %p275 = por %p273, %p274
      %p277 = scmp.ne.s32.totalorder %s262, %s276
      %p278 = scmp.eq.s32.totalorder %s44, 0
      %p279 = por %p277, %p278
      %s281 = sadd.s32 %s280, 1
      %p284 = scmp.eq.s32.totalorder %s38, 1
      %p285 = scmp.ne.s32.totalorder %s280, %s282
      %p286 = scmp.eq.s32.totalorder %s38, 0
      %p287 = por %p285, %p286
      %p288 = scmp.ne.s32.totalorder %s280, %s282
      %p289 = scmp.eq.s32.totalorder %s43, 1
      %p290 = por %p288, %p289
      %p291 = scmp.ne.s32.totalorder %s282, %s283
      %p292 = scmp.eq.s32.totalorder %s43, 0
      %p293 = por %p291, %p292
      %p294 = scmp.ne.s32.totalorder %s282, %s283
      %p295 = scmp.eq.s32.totalorder %s44, 1
      %p296 = por %p294, %p295
      %p298 = scmp.ne.s32.totalorder %s283, %s297
      %p299 = scmp.eq.s32.totalorder %s44, 0
      %p300 = por %p298, %p299
      %s302 = sadd.s32 %s301, 1
      %p305 = scmp.eq.s32.totalorder %s38, 1
      %p306 = scmp.ne.s32.totalorder %s301, %s303
      %p307 = scmp.eq.s32.totalorder %s38, 0
      %p308 = por %p306, %p307
      %p309 = scmp.ne.s32.totalorder %s301, %s303
      %p310 = scmp.eq.s32.totalorder %s43, 1
      %p311 = por %p309, %p310
      %p312 = scmp.ne.s32.totalorder %s303, %s304
      %p313 = scmp.eq.s32.totalorder %s43, 0
      %p314 = por %p312, %p313
      %p315 = scmp.ne.s32.totalorder %s303, %s304
      %p316 = scmp.eq.s32.totalorder %s44, 1
      %p317 = por %p315, %p316
      %p319 = scmp.ne.s32.totalorder %s304, %s318
      %p320 = scmp.eq.s32.totalorder %s44, 0
      %p321 = por %p319, %p320
      %s323 = sadd.s32 %s322, 1
      %p326 = scmp.eq.s32.totalorder %s38, 1
      %p327 = scmp.ne.s32.totalorder %s322, %s324
      %p328 = scmp.eq.s32.totalorder %s38, 0
      %p329 = por %p327, %p328
      %p330 = scmp.ne.s32.totalorder %s322, %s324
      %p331 = scmp.eq.s32.totalorder %s43, 1
      %p332 = por %p330, %p331
      %p333 = scmp.ne.s32.totalorder %s324, %s325
      %p334 = scmp.eq.s32.totalorder %s43, 0
      %p335 = por %p333, %p334
      %p336 = scmp.ne.s32.totalorder %s324, %s325
      %p337 = scmp.eq.s32.totalorder %s44, 1
      %p338 = por %p336, %p337
      %p340 = scmp.ne.s32.totalorder %s325, %s339
      %p341 = scmp.eq.s32.totalorder %s44, 0
      %p342 = por %p340, %p341
      %s344 = sadd.s32 %s343, 1
      %p347 = scmp.eq.s32.totalorder %s38, 1
      %p348 = scmp.ne.s32.totalorder %s343, %s345
      %p349 = scmp.eq.s32.totalorder %s38, 0
      %p350 = por %p348, %p349
      %p351 = scmp.ne.s32.totalorder %s343, %s345
      %p352 = scmp.eq.s32.totalorder %s43, 1
      %p353 = por %p351, %p352
      %p354 = scmp.ne.s32.totalorder %s345, %s346
      %p355 = scmp.eq.s32.totalorder %s43, 0
      %p356 = por %p354, %p355
      %p357 = scmp.ne.s32.totalorder %s345, %s346
      %p358 = scmp.eq.s32.totalorder %s44, 1
      %p359 = por %p357, %p358
      %p361 = scmp.ne.s32.totalorder %s346, %s360
      %p362 = scmp.eq.s32.totalorder %s44, 0
      %p363 = por %p361, %p362
      %s365 = sadd.s32 %s364, 1
      %p368 = scmp.eq.s32.totalorder %s38, 1
      %p369 = scmp.ne.s32.totalorder %s364, %s366
      %p370 = scmp.eq.s32.totalorder %s38, 0
      %p371 = por %p369, %p370
      %p372 = scmp.ne.s32.totalorder %s364, %s366
      %p373 = scmp.eq.s32.totalorder %s43, 1
      %p374 = por %p372, %p373
      %p375 = scmp.ne.s32.totalorder %s366, %s367
      %p376 = scmp.eq.s32.totalorder %s43, 0
      %p377 = por %p375, %p376
      %p378 = scmp.ne.s32.totalorder %s366, %s367
      %p379 = scmp.eq.s32.totalorder %s44, 1
      %p380 = por %p378, %p379
      %p382 = scmp.ne.s32.totalorder %s367, %s381
      %p383 = scmp.eq.s32.totalorder %s44, 0
      %p384 = por %p382, %p383
      %s386 = sadd.s32 %s385, 1
      %p389 = scmp.eq.s32.totalorder %s38, 1
      %p390 = scmp.ne.s32.totalorder %s385, %s387
      %p391 = scmp.eq.s32.totalorder %s38, 0
      %p392 = por %p390, %p391
      %p393 = scmp.ne.s32.totalorder %s385, %s387
      %p394 = scmp.eq.s32.totalorder %s43, 1
      %p395 = por %p393, %p394
      %p396 = scmp.ne.s32.totalorder %s387, %s388
      %p397 = scmp.eq.s32.totalorder %s43, 0
      %p398 = por %p396, %p397
      %p399 = scmp.ne.s32.totalorder %s387, %s388
      %p400 = scmp.eq.s32.totalorder %s44, 1
      %p401 = por %p399, %p400
      %p403 = scmp.ne.s32.totalorder %s388, %s402
      %p404 = scmp.eq.s32.totalorder %s44, 0
      %p405 = por %p403, %p404
      %s407 = sadd.s32 %s406, 1
      %p410 = scmp.eq.s32.totalorder %s38, 1
      %p411 = scmp.ne.s32.totalorder %s406, %s408
      %p412 = scmp.eq.s32.totalorder %s38, 0
      %p413 = por %p411, %p412
      %p414 = scmp.ne.s32.totalorder %s406, %s408
      %p415 = scmp.eq.s32.totalorder %s43, 1
      %p416 = por %p414, %p415
      %p417 = scmp.ne.s32.totalorder %s408, %s409
      %p418 = scmp.eq.s32.totalorder %s43, 0
      %p419 = por %p417, %p418
      %p420 = scmp.ne.s32.totalorder %s408, %s409
      %p421 = scmp.eq.s32.totalorder %s44, 1
      %p422 = por %p420, %p421
      %p424 = scmp.ne.s32.totalorder %s409, %s423
      %p425 = scmp.eq.s32.totalorder %s44, 0
      %p426 = por %p424, %p425
      %s428 = sadd.s32 %s427, 1
      %p431 = scmp.eq.s32.totalorder %s38, 1
      %p432 = scmp.ne.s32.totalorder %s427, %s429
      %p433 = scmp.eq.s32.totalorder %s38, 0
      %p434 = por %p432, %p433
      %p435 = scmp.ne.s32.totalorder %s427, %s429
      %p436 = scmp.eq.s32.totalorder %s43, 1
      %p437 = por %p435, %p436
      %p438 = scmp.ne.s32.totalorder %s429, %s430
      %p439 = scmp.eq.s32.totalorder %s43, 0
      %p440 = por %p438, %p439
      %p441 = scmp.ne.s32.totalorder %s429, %s430
      %p442 = scmp.eq.s32.totalorder %s44, 1
      %p443 = por %p441, %p442
      %p445 = scmp.ne.s32.totalorder %s430, %s444
      %p446 = scmp.eq.s32.totalorder %s44, 0
      %p447 = por %p445, %p446
      %s449 = sadd.s32 %s448, 1
      %p452 = scmp.eq.s32.totalorder %s38, 1
      %p453 = scmp.ne.s32.totalorder %s448, %s450
      %p454 = scmp.eq.s32.totalorder %s38, 0
      %p455 = por %p453, %p454
      %p456 = scmp.ne.s32.totalorder %s448, %s450
      %p457 = scmp.eq.s32.totalorder %s43, 1
      %p458 = por %p456, %p457
      %p459 = scmp.ne.s32.totalorder %s450, %s451
      %p460 = scmp.eq.s32.totalorder %s43, 0
      %p461 = por %p459, %p460
      %p462 = scmp.ne.s32.totalorder %s450, %s451
      %p463 = scmp.eq.s32.totalorder %s44, 1
      %p464 = por %p462, %p463
      %p466 = scmp.ne.s32.totalorder %s451, %s465
      %p467 = scmp.eq.s32.totalorder %s44, 0
      %p468 = por %p466, %p467
      %s470 = sadd.s32 %s469, 1
      %p473 = scmp.eq.s32.totalorder %s38, 1
      %p474 = scmp.ne.s32.totalorder %s469, %s471
      %p475 = scmp.eq.s32.totalorder %s38, 0
      %p476 = por %p474, %p475
      %p477 = scmp.ne.s32.totalorder %s469, %s471
      %p478 = scmp.eq.s32.totalorder %s43, 1
      %p479 = por %p477, %p478
      %p480 = scmp.ne.s32.totalorder %s471, %s472
      %p481 = scmp.eq.s32.totalorder %s43, 0
      %p482 = por %p480, %p481
      %p483 = scmp.ne.s32.totalorder %s471, %s472
      %p484 = scmp.eq.s32.totalorder %s44, 1
      %p485 = por %p483, %p484
      %p487 = scmp.ne.s32.totalorder %s472, %s486
      %p488 = scmp.eq.s32.totalorder %s44, 0
      %p489 = por %p487, %p488
      %s491 = sadd.s32 %s490, 1
      %p494 = scmp.eq.s32.totalorder %s38, 1
      %p495 = scmp.ne.s32.totalorder %s490, %s492
      %p496 = scmp.eq.s32.totalorder %s38, 0
      %p497 = por %p495, %p496
      %p498 = scmp.ne.s32.totalorder %s490, %s492
      %p499 = scmp.eq.s32.totalorder %s43, 1
      %p500 = por %p498, %p499
      %p501 = scmp.ne.s32.totalorder %s492, %s493
      %p502 = scmp.eq.s32.totalorder %s43, 0
      %p503 = por %p501, %p502
      %p504 = scmp.ne.s32.totalorder %s492, %s493
      %p505 = scmp.eq.s32.totalorder %s44, 1
      %p506 = por %p504, %p505
      %p508 = scmp.ne.s32.totalorder %s493, %s507
      %p509 = scmp.eq.s32.totalorder %s44, 0
      %p510 = por %p508, %p509
      %s512 = sadd.s32 %s511, 1
      %p515 = scmp.eq.s32.totalorder %s38, 1
      %p516 = scmp.ne.s32.totalorder %s511, %s513
      %p517 = scmp.eq.s32.totalorder %s38, 0
      %p518 = por %p516, %p517
      %p519 = scmp.ne.s32.totalorder %s511, %s513
      %p520 = scmp.eq.s32.totalorder %s43, 1
      %p521 = por %p519, %p520
      %p522 = scmp.ne.s32.totalorder %s513, %s514
      %p523 = scmp.eq.s32.totalorder %s43, 0
      %p524 = por %p522, %p523
      %p525 = scmp.ne.s32.totalorder %s513, %s514
      %p526 = scmp.eq.s32.totalorder %s44, 1
      %p527 = por %p525, %p526
      %p529 = scmp.ne.s32.totalorder %s514, %s528
      %p530 = scmp.eq.s32.totalorder %s44, 0
      %p531 = por %p529, %p530
      %s532 = ssub.s32 %s45, %s57
      %s533 = ssub.s32 %s46, %s53
      %s534 = sor.u32 %s532, %s533
      %p535 = scmp.eq.s32.totalorder %s534, 0
      %s537 = sadd.s32 %s536, 1
      %s538 = scalar_select %p535, %s536, %s537
      %p541 = pneg %p535
      %p542 = scmp.eq.s32.totalorder %s38, 1
      %p543 = por %p541, %p542
      %p544 = scmp.ne.s32.totalorder %s536, %s539
      %p545 = scmp.eq.s32.totalorder %s38, 0
      %p546 = por %p544, %p545
      %p547 = scmp.ne.s32.totalorder %s536, %s539
      %p548 = scmp.eq.s32.totalorder %s43, 1
      %p549 = por %p547, %p548
      %p550 = scmp.ne.s32.totalorder %s539, %s540
      %p551 = scmp.eq.s32.totalorder %s43, 0
      %p552 = por %p550, %p551
      %p553 = scmp.ne.s32.totalorder %s539, %s540
      %p554 = scmp.eq.s32.totalorder %s44, 1
      %p555 = por %p553, %p554
      %p557 = scmp.ne.s32.totalorder %s540, %s556
      %p558 = scmp.eq.s32.totalorder %s44, 0
      %p559 = por %p557, %p558
      %p560 = scmp.le.s32.totalorder 1, %s38
      %p561 = scmp.lt.s32.totalorder %s38, 3
      %p562 = pnand %p560, %p561
      %p563 = pneg %p562
      // Predicated region
      $region9: #{_lambda_.3} parent=5 // pred_check
        _
      $region10: #{_lambda_.3} parent=5 // pred_check_branch
        %565 = sbr.rel (%p562) target = $region12
      $region11: #{_lambda_.3} parent=5 // pred_region
        %s566 = ssub.s32 %s38, 1
        // Predicated region
        $region13: #{_lambda_.3} parent=11 // pred_check
          %p567 = pneg %p125
        $region14: #{_lambda_.3} parent=11 // pred_check_branch
          %569 = sbr.rel (%p567) target = $region16
        $region15: #{_lambda_.3} parent=11 // pred_region
          %s571 = ssub.s32 256, 256
          %572 = vsyncadd [#allocation15], %s571
          %s573 = sshll.u32 [#allocation14], 4
          %s574 = int_to_ptr.vmem [resolvable:$true] %s573
          %579 = dma.hbm_to_vmem [thread:$0]  %s2, 256, %s574, [#allocation15], 64, 64, 4
        $region16: #{_lambda_.3} parent=11 // pred_fallthru
          _
        // Predicated region
        $region17: #{_lambda_.3} parent=11 // pred_check
          %p580 = pneg %p146
        $region18: #{_lambda_.3} parent=11 // pred_check_branch
          %582 = sbr.rel (%p580) target = $region20
        $region19: #{_lambda_.3} parent=11 // pred_region
          _
        $region20: #{_lambda_.3} parent=11 // pred_fallthru
          _
        // Predicated region
        $region21: #{_lambda_.3} parent=11 // pred_check
          %p583 = pneg %p167
        $region22: #{_lambda_.3} parent=11 // pred_check_branch
          %585 = sbr.rel (%p583) target = $region24
        $region23: #{_lambda_.3} parent=11 // pred_region
          %s587 = ssub.s32 64, 64
          %588 = vsyncadd [#allocation15], %s587
          %s590 = sshll.u32 [#allocation16], 4
          %s591 = int_to_ptr.vmem [resolvable:$true] %s590
          %593 = dma.hbm_to_vmem [thread:$0]  %s4, 64, %s591, [#allocation15]
        $region24: #{_lambda_.3} parent=11 // pred_fallthru
          _
        // Predicated region
        $region25: #{_lambda_.3} parent=11 // pred_check
          %p594 = pneg %p188
        $region26: #{_lambda_.3} parent=11 // pred_check_branch
          %596 = sbr.rel (%p594) target = $region28
        $region27: #{_lambda_.3} parent=11 // pred_region
          _
        $region28: #{_lambda_.3} parent=11 // pred_fallthru
          _
        // Predicated region
        $region29: #{_lambda_.3} parent=11 // pred_check
          %p597 = pneg %p209
        $region30: #{_lambda_.3} parent=11 // pred_check_branch
          %599 = sbr.rel (%p597) target = $region32
        $region31: #{_lambda_.3} parent=11 // pred_region
          %s601 = ssub.s32 256, 256
          %602 = vsyncadd [#allocation18], %s601
          %s603 = sshll.u32 [#allocation17], 4
          %s604 = int_to_ptr.vmem [resolvable:$true] %s603
          %609 = dma.hbm_to_vmem [thread:$0]  %s6, 256, %s604, [#allocation18], 64, 64, 4
        $region32: #{_lambda_.3} parent=11 // pred_fallthru
          _
        // Predicated region
        $region33: #{_lambda_.3} parent=11 // pred_check
          %p610 = pneg %p230
        $region34: #{_lambda_.3} parent=11 // pred_check_branch
          %612 = sbr.rel (%p610) target = $region36
        $region35: #{_lambda_.3} parent=11 // pred_region
          %s614 = ssub.s32 256, 256
          %615 = vsyncadd [#allocation18], %s614
          %s616 = sshll.u32 [#allocation19], 4
          %s617 = int_to_ptr.vmem [resolvable:$true] %s616
          %622 = dma.hbm_to_vmem [thread:$0]  %s7, 256, %s617, [#allocation18], 64, 64, 4
        $region36: #{_lambda_.3} parent=11 // pred_fallthru
          _
        // Predicated region
        $region37: #{_lambda_.3} parent=11 // pred_check
          %p623 = pneg %p251
        $region38: #{_lambda_.3} parent=11 // pred_check_branch
          %625 = sbr.rel (%p623) target = $region40
        $region39: #{_lambda_.3} parent=11 // pred_region
          %s627 = ssub.s32 64, 64
          %628 = vsyncadd [#allocation21], %s627
          %s630 = sshll.u32 [#allocation20], 4
          %s631 = int_to_ptr.vmem [resolvable:$true] %s630
          %633 = dma.hbm_to_vmem [thread:$0]  %s8, 64, %s631, [#allocation21]
        $region40: #{_lambda_.3} parent=11 // pred_fallthru
          _
        // Predicated region
        $region41: #{_lambda_.3} parent=11 // pred_check
          %p634 = pneg %p272
        $region42: #{_lambda_.3} parent=11 // pred_check_branch
          %636 = sbr.rel (%p634) target = $region44
        $region43: #{_lambda_.3} parent=11 // pred_region
          _
        $region44: #{_lambda_.3} parent=11 // pred_fallthru
          _
        // Predicated region
        $region45: #{_lambda_.3} parent=11 // pred_check
          %p637 = pneg %p293
        $region46: #{_lambda_.3} parent=11 // pred_check_branch
          %639 = sbr.rel (%p637) target = $region48
        $region47: #{_lambda_.3} parent=11 // pred_region
          _
        $region48: #{_lambda_.3} parent=11 // pred_fallthru
          _
        // Predicated region
        $region49: #{_lambda_.3} parent=11 // pred_check
          %p640 = pneg %p314
        $region50: #{_lambda_.3} parent=11 // pred_check_branch
          %642 = sbr.rel (%p640) target = $region52
        $region51: #{_lambda_.3} parent=11 // pred_region
          %s644 = ssub.s32 2048, 2048
          %645 = vsyncadd [#allocation21], %s644
          %s646 = sshll.u32 [#allocation22], 4
          %s647 = int_to_ptr.vmem [resolvable:$true] %s646
          %652 = dma.hbm_to_vmem [thread:$0]  %s11, 2048, %s647, [#allocation21], 128, 128, 8
        $region52: #{_lambda_.3} parent=11 // pred_fallthru
          _
        // Predicated region
        $region53: #{_lambda_.3} parent=11 // pred_check
          %p653 = pneg %p335
        $region54: #{_lambda_.3} parent=11 // pred_check_branch
          %655 = sbr.rel (%p653) target = $region56
        $region55: #{_lambda_.3} parent=11 // pred_region
          _
        $region56: #{_lambda_.3} parent=11 // pred_fallthru
          _
        // Predicated region
        $region57: #{_lambda_.3} parent=11 // pred_check
          %p656 = pneg %p356
        $region58: #{_lambda_.3} parent=11 // pred_check_branch
          %658 = sbr.rel (%p656) target = $region60
        $region59: #{_lambda_.3} parent=11 // pred_region
          %s660 = ssub.s32 256, 256
          %661 = vsyncadd [#allocation24], %s660
          %s662 = sshll.u32 [#allocation23], 4
          %s663 = int_to_ptr.vmem [resolvable:$true] %s662
          %668 = dma.hbm_to_vmem [thread:$0]  %s13, 256, %s663, [#allocation24], 128, 128, 8
        $region60: #{_lambda_.3} parent=11 // pred_fallthru
          _
        // Predicated region
        $region61: #{_lambda_.3} parent=11 // pred_check
          %p669 = pneg %p377
        $region62: #{_lambda_.3} parent=11 // pred_check_branch
          %671 = sbr.rel (%p669) target = $region64
        $region63: #{_lambda_.3} parent=11 // pred_region
          _
        $region64: #{_lambda_.3} parent=11 // pred_fallthru
          _
        // Predicated region
        $region65: #{_lambda_.3} parent=11 // pred_check
          %p672 = pneg %p398
        $region66: #{_lambda_.3} parent=11 // pred_check_branch
          %674 = sbr.rel (%p672) target = $region68
        $region67: #{_lambda_.3} parent=11 // pred_region
          _
        $region68: #{_lambda_.3} parent=11 // pred_fallthru
          _
        // Predicated region
        $region69: #{_lambda_.3} parent=11 // pred_check
          %p675 = pneg %p419
        $region70: #{_lambda_.3} parent=11 // pred_check_branch
          %677 = sbr.rel (%p675) target = $region72
        $region71: #{_lambda_.3} parent=11 // pred_region
          _
        $region72: #{_lambda_.3} parent=11 // pred_fallthru
          _
        // Predicated region
        $region73: #{_lambda_.3} parent=11 // pred_check
          %p678 = pneg %p440
        $region74: #{_lambda_.3} parent=11 // pred_check_branch
          %680 = sbr.rel (%p678) target = $region76
        $region75: #{_lambda_.3} parent=11 // pred_region
          _
        $region76: #{_lambda_.3} parent=11 // pred_fallthru
          _
        // Predicated region
        $region77: #{_lambda_.3} parent=11 // pred_check
          %p681 = pneg %p461
        $region78: #{_lambda_.3} parent=11 // pred_check_branch
          %683 = sbr.rel (%p681) target = $region80
        $region79: #{_lambda_.3} parent=11 // pred_region
          _
        $region80: #{_lambda_.3} parent=11 // pred_fallthru
          _
        // Predicated region
        $region81: #{_lambda_.3} parent=11 // pred_check
          %p684 = pneg %p482
        $region82: #{_lambda_.3} parent=11 // pred_check_branch
          %686 = sbr.rel (%p684) target = $region84
        $region83: #{_lambda_.3} parent=11 // pred_region
          _
        $region84: #{_lambda_.3} parent=11 // pred_fallthru
          _
        // Predicated region
        $region85: #{_lambda_.3} parent=11 // pred_check
          %p687 = pneg %p503
        $region86: #{_lambda_.3} parent=11 // pred_check_branch
          %689 = sbr.rel (%p687) target = $region88
        $region87: #{_lambda_.3} parent=11 // pred_region
          %s691 = ssub.s32 64, 64
          %692 = vsyncadd [#allocation24], %s691
          %s694 = sshll.u32 [#allocation25], 4
          %s695 = int_to_ptr.vmem [resolvable:$true] %s694
          %697 = dma.hbm_to_vmem [thread:$0]  %s20, 64, %s695, [#allocation24]
        $region88: #{_lambda_.3} parent=11 // pred_fallthru
          _
        // Predicated region
        $region89: #{_lambda_.3} parent=11 // pred_check
          %p698 = pneg %p524
        $region90: #{_lambda_.3} parent=11 // pred_check_branch
          %700 = sbr.rel (%p698) target = $region92
        $region91: #{_lambda_.3} parent=11 // pred_region
          _
        $region92: #{_lambda_.3} parent=11 // pred_fallthru
          _
      $region12: #{_lambda_.3} parent=5 // pred_fallthru
        _
      %p701 = scmp.lt.s32.totalorder %s38, 2
      // Predicated region
      $region93: #{_lambda_.3} parent=5 // pred_check
        %p702 = pneg %p701
      $region94: #{_lambda_.3} parent=5 // pred_check_branch
        %704 = sbr.rel (%p702) target = $region96
      $region95: #{_lambda_.3} parent=5 // pred_region
        // Predicated region
        $region97: #{_lambda_.3} parent=95 // pred_check
          %p705 = pneg %p72
        $region98: #{_lambda_.3} parent=95 // pred_check_branch
          %707 = sbr.rel (%p705) target = $region100
        $region99: #{_lambda_.3} parent=95 // pred_region
          %s708 = sand.u32 %s62, 1
          %s709 = scalar_lea.sflag [#allocation12], %s708
          %s710 = sand.u32 %s62, 1
          %s711 = smul.addr %s710, 8
          %s712 = scalar_lea.vmem [#allocation11], %s711
          %s714 = ssub.s32 128, 128
          %715 = vsyncadd %s709, %s714
          %s716 = sadd.s32 %s46, %s45
          %s717 = smul.addr %s716, 128
          %s718 = scalar_lea.hbm %s0, %s717
          %s720 = sshll.u32 %s712, 4
          %s721 = int_to_ptr.vmem [resolvable:$true] %s720
          %723 = dma.hbm_to_vmem [thread:$0]  %s718, 128, %s721, %s709
        $region100: #{_lambda_.3} parent=95 // pred_fallthru
          _
        // Predicated region
        $region101: #{_lambda_.3} parent=95 // pred_check
          %p724 = pneg %p98
        $region102: #{_lambda_.3} parent=95 // pred_check_branch
          %726 = sbr.rel (%p724) target = $region104
        $region103: #{_lambda_.3} parent=95 // pred_region
          %p727 = scmp.lt.s32.totalorder %s45, 1
          %s728 = scalar_select %p727, %s45, 1
          %s729 = scalar_lea.vmem %s1, %s728
        $region104: #{_lambda_.3} parent=95 // pred_fallthru
          _
      $region96: #{_lambda_.3} parent=5 // pred_fallthru
        _
      %p730 = scmp.le.s32.totalorder 1, %s38
      %p731 = scmp.lt.s32.totalorder %s38, 3
      %p732 = pnand %p730, %p731
      %p733 = pneg %p732
      // Predicated region
      $region105: #{_lambda_.3} parent=5 // pred_check
        _
      $region106: #{_lambda_.3} parent=5 // pred_check_branch
        %735 = sbr.rel (%p732) target = $region108
      $region107: #{_lambda_.3} parent=5 // pred_region
        %s736 = ssub.s32 %s38, 1
        %s737 = sand.u32 %s65, 1
        %s738 = scalar_lea.sflag [#allocation12], %s737
        %s739 = sand.u32 %s65, 1
        %s740 = smul.addr %s739, 8
        %s741 = scalar_lea.vmem [#allocation11], %s740
        // Predicated region
        $region109: #{_lambda_.3} parent=107 // pred_check
          %p742 = pneg %p78
        $region110: #{_lambda_.3} parent=107 // pred_check_branch
          %744 = sbr.rel (%p742) target = $region112
        $region111: #{_lambda_.3} parent=107 // pred_region
          %745 = dma.done %s738, 128
        $region112: #{_lambda_.3} parent=107 // pred_fallthru
          _
        // Predicated region
        $region113: #{_lambda_.3} parent=107 // pred_check
          %p746 = pneg %p125
        $region114: #{_lambda_.3} parent=107 // pred_check_branch
          %748 = sbr.rel (%p746) target = $region116
        $region115: #{_lambda_.3} parent=107 // pred_region
          %749 = dma.done [#allocation15], 256
        $region116: #{_lambda_.3} parent=107 // pred_fallthru
          _
        // Predicated region
        $region117: #{_lambda_.3} parent=107 // pred_check
          %p750 = pneg %p167
        $region118: #{_lambda_.3} parent=107 // pred_check_branch
          %752 = sbr.rel (%p750) target = $region120
        $region119: #{_lambda_.3} parent=107 // pred_region
          %753 = dma.done [#allocation15], 64
        $region120: #{_lambda_.3} parent=107 // pred_fallthru
          _
        // Predicated region
        $region121: #{_lambda_.3} parent=107 // pred_check
          %p754 = pneg %p209
        $region122: #{_lambda_.3} parent=107 // pred_check_branch
          %756 = sbr.rel (%p754) target = $region124
        $region123: #{_lambda_.3} parent=107 // pred_region
          %757 = dma.done [#allocation18], 256
        $region124: #{_lambda_.3} parent=107 // pred_fallthru
          _
        // Predicated region
        $region125: #{_lambda_.3} parent=107 // pred_check
          %p758 = pneg %p230
        $region126: #{_lambda_.3} parent=107 // pred_check_branch
          %760 = sbr.rel (%p758) target = $region128
        $region127: #{_lambda_.3} parent=107 // pred_region
          %761 = dma.done [#allocation18], 256
        $region128: #{_lambda_.3} parent=107 // pred_fallthru
          _
        // Predicated region
        $region129: #{_lambda_.3} parent=107 // pred_check
          %p762 = pneg %p251
        $region130: #{_lambda_.3} parent=107 // pred_check_branch
          %764 = sbr.rel (%p762) target = $region132
        $region131: #{_lambda_.3} parent=107 // pred_region
          %765 = dma.done [#allocation21], 64
        $region132: #{_lambda_.3} parent=107 // pred_fallthru
          _
        // Predicated region
        $region133: #{_lambda_.3} parent=107 // pred_check
          %p766 = pneg %p314
        $region134: #{_lambda_.3} parent=107 // pred_check_branch
          %768 = sbr.rel (%p766) target = $region136
        $region135: #{_lambda_.3} parent=107 // pred_region
          %769 = dma.done [#allocation21], 2048
        $region136: #{_lambda_.3} parent=107 // pred_fallthru
          _
        // Predicated region
        $region137: #{_lambda_.3} parent=107 // pred_check
          %p770 = pneg %p356
        $region138: #{_lambda_.3} parent=107 // pred_check_branch
          %772 = sbr.rel (%p770) target = $region140
        $region139: #{_lambda_.3} parent=107 // pred_region
          %773 = dma.done [#allocation24], 256
        $region140: #{_lambda_.3} parent=107 // pred_fallthru
          _
        // Predicated region
        $region141: #{_lambda_.3} parent=107 // pred_check
          %p774 = pneg %p503
        $region142: #{_lambda_.3} parent=107 // pred_check_branch
          %776 = sbr.rel (%p774) target = $region144
        $region143: #{_lambda_.3} parent=107 // pred_region
          %777 = dma.done [#allocation24], 64
        $region144: #{_lambda_.3} parent=107 // pred_fallthru
          _
        %s778 = sand.u32 %s65, 1
        %s779 = scalar_lea.sflag [#allocation12], %s778
        %s780 = sand.u32 %s65, 1
        %s781 = smul.addr %s780, 8
        %s782 = scalar_lea.vmem [#allocation11], %s781
        %p783 = pneg %p78
        %p784 = pneg %p75
        %p785 = scmp.lt.s32.totalorder %s47, 1
        %s786 = scalar_select %p785, %s47, 1
        %s787 = scalar_lea.vmem %s1, %s786
        %p788 = pneg %p104
        %p789 = pneg %p101
        %p790 = pneg %p125
        %p791 = pneg %p122
        %p792 = pneg %p146
        %p793 = pneg %p143
        %p794 = pneg %p167
        %p795 = pneg %p164
        %p796 = pneg %p188
        %p797 = pneg %p185
        %p798 = pneg %p209
        %p799 = pneg %p206
        %p800 = pneg %p230
        %p801 = pneg %p227
        %p802 = pneg %p251
        %p803 = pneg %p248
        %p804 = pneg %p272
        %p805 = pneg %p269
        %p806 = pneg %p293
        %p807 = pneg %p290
        %p808 = pneg %p314
        %p809 = pneg %p311
        %p810 = pneg %p335
        %p811 = pneg %p332
        %p812 = pneg %p356
        %p813 = pneg %p353
        %p814 = pneg %p377
        %p815 = pneg %p374
        %p816 = pneg %p398
        %p817 = pneg %p395
        %p818 = pneg %p419
        %p819 = pneg %p416
        %p820 = pneg %p440
        %p821 = pneg %p437
        %p822 = pneg %p461
        %p823 = pneg %p458
        %p824 = pneg %p482
        %p825 = pneg %p479
        %p826 = pneg %p503
        %p827 = pneg %p500
        %p828 = pneg %p524
        %p829 = pneg %p521
        %p830 = pneg %p552
        %p831 = pneg %p549
        %s832 = sand.u32 %s539, 1
        %s833 = scalar_lea.sflag [#allocation13], %s832
        %s834 = sand.u32 %s539, 1
        %s835 = smul.addr %s834, 8
        %s836 = scalar_lea.vmem [#allocation26], %s835
        %p837 = scmp.lt.s32.totalorder %s47, 1
        %s838 = scalar_select %p837, %s47, 1
        %s839 = scalar_lea.vmem %s1, %s838
        %p841 = scmp.eq.s32.totalorder %s48, 0
        // Predicated region
        $region145: #{_lambda_.3} parent=107 // pred_check
          %p842 = pneg %p841
        $region146: #{_lambda_.3} parent=107 // pred_check_branch
          %844 = sbr.rel (%p842) target = $region148
        $region147: #{_lambda_.3} parent=107 // pred_region
          %vm845 = vcmask 523264
          %846 = vst.msk [vmem:[#allocation9] sm:$0xff] %vm845, 0.0
          %847 = vst.msk [vmem:[#allocation9 + $0x8] sm:$0xff] %vm845, 0.0
          %vm848 = vcmask 518144
          %849 = vst.msk [vmem:[#allocation10] sm:$0x7] %vm848, 0.0
        $region148: #{_lambda_.3} parent=107 // pred_fallthru
          _
        %v850 = vld [vmem:[%s741] sm:$0xff]
        %v851 = vld [vmem:[%s839] sm:$0x1]
        %vm852 = vcmask 261120
        %v853 = vsel %vm852, %v850, 0.0
        %854 = vadd.xlane.f32.xlu0 %v853
        %v855 = vpop.xlane.xlu0 %854
        %v856 = vrcp.pop 32.0
        %v857 = vmul.f32 %v855, %v856
        %v858 = vsub.f32 %v850, %v857
        %v859 = vmul.f32 %v858, %v858
        %v860 = vsel %vm852, %v859, 0.0
        %861 = vadd.xlane.f32.xlu0 %v860
        %v862 = vpop.xlane.xlu0 %861
        %v863 = vmul.f32 %v862, %v856
        %v864 = vadd.f32 %v863, 1e-06
        %v865 = vrsqrt.pop %v864
        %v866 = vmul.f32 %v858, %v865
        %v867 = vadd.f32 %v851, 1.0
        %v869 = vlaneseq
        %v870 = vshrl.u32 %v869, 7
        %v871 = vsub.s32 0, %v870
        %v872 = vrot.slane %v867, %v871
        %873 = vrot.lane.b32.xlu0 %v872, 96
        %v874 = vpop.permute.xlu0 %873
        %v876 = vmul.f32 %v866, %v874
        %v878 = vlaneseq
        %v879 = vshrl.u32 %v878, 7
        %v880 = vsub.s32 0, %v879
        %v881 = vrot.slane %v851, %v880
        %v883 = vadd.f32 %v876, %v881
        %884 = vst.msk [vmem:[#allocation2] sm:$0xff] %vm852, %v883
        %v885 = vpack.c.bf16 %v883, %v883
        %v886 = vld [vmem:[#allocation14] sm:$0xf]
        %v887 = vld [vmem:[#allocation14 + $0x4] sm:$0xf]
        %v888 = vld [vmem:[#allocation14 + $0x8] sm:$0xf]
        %v889 = vld [vmem:[#allocation14 + $0xc] sm:$0xf]
        %v890 = vld [vmem:[%s3] sm:$0x1]
        %v892 = vlaneseq
        %v893 = vshrl.u32 %v892, 7
        %v894 = vsub.s32 0, %v893
        %v895 = vrot.slane %v890, %v894
        %v901 = vunpack.c.l.b16 %v886
        %v902 = vunpack.c.l.b16 %v887
        %v903 = vunpack.c.l.b16 %v888
        %v904 = vunpack.c.l.b16 %v889
        %v905 = vpack.c.b16 %v902, %v901
        %v906 = vpack.c.b16 %v904, %v903
        %v910 = vsel %vm852, %v885, 0
        %912 = vmatprep.subr.bf16.mxu0 0
        %913 = vmatpush1.bf16.msra.mxu0 %v905
        %914 = vmatprep.subr.bf16.mxu0 0
        %915 = vmatpush1.bf16.msra.mxu0 %v906
        %916 = vmatprep.subr.bf16.mxu0 0
        %917 = vmatpush1.bf16.msra.mxu0 0
        %918 = vmatprep.subr.bf16.mxu0 0
        %919 = vmatpush1.bf16.msra.mxu0 0
        %920 = vmatprep.subr.bf16.mxu0 0
        %921 = vmatpush1.bf16.msra.mxu0 0
        %922 = vmatprep.subr.bf16.mxu0 0
        %923 = vmatpush1.bf16.msra.mxu0 0
        %924 = vmatprep.subr.bf16.mxu0 0
        %925 = vmatpush1.bf16.msra.mxu0 0
        %926 = vmatprep.subr.bf16.mxu0 0
        %927 = vmatpush1.bf16.msra.mxu0 0
        %928 = vmatprep.subr.bf16.mxu0 0
        %929 = vmatpush1.bf16.msra.mxu0 0
        %930 = vmatprep.subr.bf16.mxu0 0
        %931 = vmatpush1.bf16.msra.mxu0 0
        %932 = vmatprep.subr.bf16.mxu0 0
        %933 = vmatpush1.bf16.msra.mxu0 0
        %934 = vmatprep.subr.bf16.mxu0 0
        %935 = vmatpush1.bf16.msra.mxu0 0
        %936 = vmatprep.subr.bf16.mxu0 0
        %937 = vmatpush1.bf16.msra.mxu0 0
        %938 = vmatprep.subr.bf16.mxu0 0
        %939 = vmatpush1.bf16.msra.mxu0 0
        %940 = vmatprep.subr.bf16.mxu0 0
        %941 = vmatpush1.bf16.msra.mxu0 0
        %942 = vmatprep.subr.bf16.mxu0 0
        %943 = vmatpush1.bf16.msra.mxu0 0
        %944 = vmatprep.mubr.bf16.mxu0 0
        %945 = vmatmul.mubr.bf16.gmra.mrb[0].mxu0 %v910
        %v946 = vpop.f32.mrb[0].mxu0
        %v947 = vadd.f32 %v895, %v946
        %v948 = vpop.f32.mrb[0].mxu0
        %v949 = vpop.f32.mrb[0].mxu0
        %v950 = vpop.f32.mrb[0].mxu0
        %951 = vdwg.mxu0
        %v952 = vxor.u32 %v947, 2147483648
        %v953 = vmul.f32 %v952, 1.442695
        %v954 = vpow.pop %v953
        %v955 = vadd.f32 %v954, 1.0
        %v956 = vrcp.pop %v955
        %v957 = vmul.f32 1.0, %v956
        %v958 = vmul.f32 %v947, %v957
        %v959 = vpack.c.bf16 %v958, %v958
        %v960 = vld [vmem:[#allocation16] sm:$0xf]
        %v961 = vld [vmem:[%s5] sm:$0x1]
        %v963 = vlaneseq
        %v964 = vshrl.u32 %v963, 7
        %v965 = vsub.s32 0, %v964
        %v966 = vrot.slane %v961, %v965
        %vm968 = vcmask 64512
        %v970 = vsel %vm968, %v959, 0
        %vm972 = vcmask 1043456
        %v974 = vsel %vm972, %v960, 0
        %976 = vmatprep.subr.bf16.mxu0 0
        %977 = vmatpush1.bf16.msra.mxu0 %v974
        %978 = vmatprep.subr.bf16.mxu0 0
        %979 = vmatpush1.bf16.msra.mxu0 0
        %980 = vmatprep.subr.bf16.mxu0 0
        %981 = vmatpush1.bf16.msra.mxu0 0
        %982 = vmatprep.subr.bf16.mxu0 0
        %983 = vmatpush1.bf16.msra.mxu0 0
        %984 = vmatprep.subr.bf16.mxu0 0
        %985 = vmatpush1.bf16.msra.mxu0 0
        %986 = vmatprep.subr.bf16.mxu0 0
        %987 = vmatpush1.bf16.msra.mxu0 0
        %988 = vmatprep.subr.bf16.mxu0 0
        %989 = vmatpush1.bf16.msra.mxu0 0
        %990 = vmatprep.subr.bf16.mxu0 0
        %991 = vmatpush1.bf16.msra.mxu0 0
        %992 = vmatprep.subr.bf16.mxu0 0
        %993 = vmatpush1.bf16.msra.mxu0 0
        %994 = vmatprep.subr.bf16.mxu0 0
        %995 = vmatpush1.bf16.msra.mxu0 0
        %996 = vmatprep.subr.bf16.mxu0 0
        %997 = vmatpush1.bf16.msra.mxu0 0
        %998 = vmatprep.subr.bf16.mxu0 0
        %999 = vmatpush1.bf16.msra.mxu0 0
        %1000 = vmatprep.subr.bf16.mxu0 0
        %1001 = vmatpush1.bf16.msra.mxu0 0
        %1002 = vmatprep.subr.bf16.mxu0 0
        %1003 = vmatpush1.bf16.msra.mxu0 0
        %1004 = vmatprep.subr.bf16.mxu0 0
        %1005 = vmatpush1.bf16.msra.mxu0 0
        %1006 = vmatprep.subr.bf16.mxu0 0
        %1007 = vmatpush1.bf16.msra.mxu0 0
        %1008 = vmatprep.mubr.bf16.mxu0 0
        %1009 = vmatmul.mubr.bf16.gmra.mrb[0].mxu0 %v970
        %v1010 = vpop.f32.mrb[0].mxu0
        %v1011 = vadd.f32 %v966, %v1010
        %v1012 = vpop.f32.mrb[0].mxu0
        %v1013 = vpop.f32.mrb[0].mxu0
        %v1014 = vpop.f32.mrb[0].mxu0
        %1015 = vdwg.mxu0
        %v1016 = vpack.c.bf16 %v1011, %v1011
        %v1017 = vld [vmem:[#allocation17] sm:$0xf]
        %v1018 = vld [vmem:[#allocation17 + $0x4] sm:$0xf]
        %v1019 = vld [vmem:[#allocation17 + $0x8] sm:$0xf]
        %v1020 = vld [vmem:[#allocation17 + $0xc] sm:$0xf]
        %v1025 = vunpack.c.l.b16 %v1017
        %v1026 = vunpack.c.l.b16 %v1018
        %v1027 = vunpack.c.l.b16 %v1019
        %v1028 = vunpack.c.l.b16 %v1020
        %v1029 = vpack.c.b16 %v1026, %v1025
        %v1030 = vpack.c.b16 %v1028, %v1027
        %v1034 = vsel %vm852, %v1016, 0
        %1036 = vmatprep.subr.bf16.mxu0 0
        %1037 = vmatpush1.bf16.msra.mxu0 %v1029
        %1038 = vmatprep.subr.bf16.mxu0 0
        %1039 = vmatpush1.bf16.msra.mxu0 %v1030
        %1040 = vmatprep.subr.bf16.mxu0 0
        %1041 = vmatpush1.bf16.msra.mxu0 0
        %1042 = vmatprep.subr.bf16.mxu0 0
        %1043 = vmatpush1.bf16.msra.mxu0 0
        %1044 = vmatprep.subr.bf16.mxu0 0
        %1045 = vmatpush1.bf16.msra.mxu0 0
        %1046 = vmatprep.subr.bf16.mxu0 0
        %1047 = vmatpush1.bf16.msra.mxu0 0
        %1048 = vmatprep.subr.bf16.mxu0 0
        %1049 = vmatpush1.bf16.msra.mxu0 0
        %1050 = vmatprep.subr.bf16.mxu0 0
        %1051 = vmatpush1.bf16.msra.mxu0 0
        %1052 = vmatprep.subr.bf16.mxu0 0
        %1053 = vmatpush1.bf16.msra.mxu0 0
        %1054 = vmatprep.subr.bf16.mxu0 0
        %1055 = vmatpush1.bf16.msra.mxu0 0
        %1056 = vmatprep.subr.bf16.mxu0 0
        %1057 = vmatpush1.bf16.msra.mxu0 0
        %1058 = vmatprep.subr.bf16.mxu0 0
        %1059 = vmatpush1.bf16.msra.mxu0 0
        %1060 = vmatprep.subr.bf16.mxu0 0
        %1061 = vmatpush1.bf16.msra.mxu0 0
        %1062 = vmatprep.subr.bf16.mxu0 0
        %1063 = vmatpush1.bf16.msra.mxu0 0
        %1064 = vmatprep.subr.bf16.mxu0 0
        %1065 = vmatpush1.bf16.msra.mxu0 0
        %1066 = vmatprep.subr.bf16.mxu0 0
        %1067 = vmatpush1.bf16.msra.mxu0 0
        %1068 = vmatprep.mubr.bf16.mxu0 0
        %1069 = vmatmul.mubr.bf16.gmra.mrb[0].mxu0 %v1034
        %v1070 = vpop.f32.mrb[0].mxu0
        %v1071 = vadd.f32 0.0, %v1070
        %v1072 = vpop.f32.mrb[0].mxu0
        %v1073 = vpop.f32.mrb[0].mxu0
        %v1074 = vpop.f32.mrb[0].mxu0
        %1075 = vdwg.mxu0
        %v1076 = vld [vmem:[#allocation19] sm:$0xf]
        %v1077 = vld [vmem:[#allocation19 + $0x4] sm:$0xf]
        %v1078 = vld [vmem:[#allocation19 + $0x8] sm:$0xf]
        %v1079 = vld [vmem:[#allocation19 + $0xc] sm:$0xf]
        %v1084 = vunpack.c.l.b16 %v1076
        %v1085 = vunpack.c.l.b16 %v1077
        %v1086 = vunpack.c.l.b16 %v1078
        %v1087 = vunpack.c.l.b16 %v1079
        %v1088 = vpack.c.b16 %v1085, %v1084
        %v1089 = vpack.c.b16 %v1087, %v1086
        %1092 = vmatprep.subr.bf16.mxu0 0
        %1093 = vmatpush1.bf16.msra.mxu0 %v1088
        %1094 = vmatprep.subr.bf16.mxu0 0
        %1095 = vmatpush1.bf16.msra.mxu0 %v1089
        %1096 = vmatprep.subr.bf16.mxu0 0
        %1097 = vmatpush1.bf16.msra.mxu0 0
        %1098 = vmatprep.subr.bf16.mxu0 0
        %1099 = vmatpush1.bf16.msra.mxu0 0
        %1100 = vmatprep.subr.bf16.mxu0 0
        %1101 = vmatpush1.bf16.msra.mxu0 0
        %1102 = vmatprep.subr.bf16.mxu0 0
        %1103 = vmatpush1.bf16.msra.mxu0 0
        %1104 = vmatprep.subr.bf16.mxu0 0
        %1105 = vmatpush1.bf16.msra.mxu0 0
        %1106 = vmatprep.subr.bf16.mxu0 0
        %1107 = vmatpush1.bf16.msra.mxu0 0
        %1108 = vmatprep.subr.bf16.mxu0 0
        %1109 = vmatpush1.bf16.msra.mxu0 0
        %1110 = vmatprep.subr.bf16.mxu0 0
        %1111 = vmatpush1.bf16.msra.mxu0 0
        %1112 = vmatprep.subr.bf16.mxu0 0
        %1113 = vmatpush1.bf16.msra.mxu0 0
        %1114 = vmatprep.subr.bf16.mxu0 0
        %1115 = vmatpush1.bf16.msra.mxu0 0
        %1116 = vmatprep.subr.bf16.mxu0 0
        %1117 = vmatpush1.bf16.msra.mxu0 0
        %1118 = vmatprep.subr.bf16.mxu0 0
        %1119 = vmatpush1.bf16.msra.mxu0 0
        %1120 = vmatprep.subr.bf16.mxu0 0
        %1121 = vmatpush1.bf16.msra.mxu0 0
        %1122 = vmatprep.subr.bf16.mxu0 0
        %1123 = vmatpush1.bf16.msra.mxu0 0
        %1124 = vmatprep.mubr.bf16.mxu0 0
        %1125 = vmatmul.mubr.bf16.gmra.mrb[0].mxu0 %v1034
        %v1126 = vpop.f32.mrb[0].mxu0
        %v1127 = vadd.f32 0.0, %v1126
        %v1128 = vpop.f32.mrb[0].mxu0
        %v1129 = vpop.f32.mrb[0].mxu0
        %v1130 = vpop.f32.mrb[0].mxu0
        %1131 = vdwg.mxu0
        %v1132 = vxor.u32 %v1127, 2147483648
        %v1133 = vmul.f32 %v1132, 1.442695
        %v1134 = vpow.pop %v1133
        %v1135 = vadd.f32 %v1134, 1.0
        %v1136 = vrcp.pop %v1135
        %v1137 = vmul.f32 1.0, %v1136
        %v1138 = vmul.f32 %v1127, %v1137
        %vm1139 = vcmask 523264
        %1140 = vst.msk [vmem:[#allocation3] sm:$0xff] %vm1139, %v1138
        %1141 = vst.msk [vmem:[#allocation8 + $0x8] sm:$0xff] %vm1139, %v1071
        %v1142 = vld [vmem:[#allocation10] sm:$0x7]
        %vm1143 = vcmask 518144
        %1144 = vst.msk [vmem:[#allocation8 + $0x5] sm:$0x7] %vm1143, %v1142
        %vm1145 = vcmask 523269
        %1146 = vst.msk [vmem:[#allocation10 - $0x5] sm:$0xe0] %vm1145, %v1071
        %v1147 = vld [vmem:[%s9] sm:$0x1]
        %v1148 = vld [vmem:[#allocation20] sm:$0x1]
        %v1149 = vld [vmem:[#allocation8 + $0x5] sm:$0xff]
        %v1150 = vlaneseq
        %v1151 = vshrl.u32 %v1150, 7
        %v1152 = vsub.s32 0, %v1151
        %v1153 = vrot.slane %v1148, %v1152
        %v1154 = vmul.f32 %v1153, %v1149
        %v1156 = vlaneseq
        %v1157 = vshrl.u32 %v1156, 7
        %v1158 = vsub.s32 0, %v1157
        %v1159 = vrot.slane %v1147, %v1158
        %v1161 = vadd.f32 %v1159, %v1154
        %v1162 = vld [vmem:[#allocation20 + $0x1] sm:$0x1]
        %v1163 = vld [vmem:[#allocation8 + $0x6] sm:$0xff]
        %v1164 = vlaneseq
        %v1165 = vshrl.u32 %v1164, 7
        %v1166 = vsub.s32 0, %v1165
        %v1167 = vrot.slane %v1162, %v1166
        %v1168 = vmul.f32 %v1167, %v1163
        %v1169 = vadd.f32 %v1161, %v1168
        %v1170 = vld [vmem:[#allocation20 + $0x2] sm:$0x1]
        %v1171 = vld [vmem:[#allocation8 + $0x7] sm:$0xff]
        %v1172 = vlaneseq
        %v1173 = vshrl.u32 %v1172, 7
        %v1174 = vsub.s32 0, %v1173
        %v1175 = vrot.slane %v1170, %v1174
        %v1176 = vmul.f32 %v1175, %v1171
        %v1177 = vadd.f32 %v1169, %v1176
        %v1178 = vld [vmem:[#allocation20 + $0x3] sm:$0x1]
        %v1179 = vld [vmem:[#allocation8 + $0x8] sm:$0xff]
        %v1180 = vlaneseq
        %v1181 = vshrl.u32 %v1180, 7
        %v1182 = vsub.s32 0, %v1181
        %v1183 = vrot.slane %v1178, %v1182
        %v1184 = vmul.f32 %v1183, %v1179
        %v1185 = vadd.f32 %v1177, %v1184
        %v1186 = vxor.u32 %v1185, 2147483648
        %v1187 = vmul.f32 %v1186, 1.442695
        %v1188 = vpow.pop %v1187
        %v1189 = vadd.f32 %v1188, 1.0
        %v1190 = vrcp.pop %v1189
        %v1191 = vmul.f32 1.0, %v1190
        %v1192 = vmul.f32 %v1185, %v1191
        %1193 = vst.msk [vmem:[#allocation4] sm:$0xff] %vm1139, %v1192
        %v1194 = vld [vmem:[%s10] sm:$0xff]
        %v1195 = vld [vmem:[%s10 + $0x8] sm:$0xff]
        %v1196 = vld [vmem:[%s10 + $0x10] sm:$0xff]
        %v1197 = vld [vmem:[%s10 + $0x18] sm:$0xff]
        %v1198 = vld [vmem:[%s10 + $0x20] sm:$0xff]
        %v1199 = vld [vmem:[%s10 + $0x28] sm:$0xff]
        %v1200 = vld [vmem:[%s10 + $0x30] sm:$0xff]
        %v1201 = vld [vmem:[%s10 + $0x38] sm:$0xff]
        %v1203 = vsel %vm1139, %v1192, 0
        %1205 = vmatprep.subr.mxu0 0.0
        %1206 = vmatpush1.msra.mxu0 %v1194
        %1207 = vmatprep.subr.mxu0 0.0
        %1208 = vmatpush1.msra.mxu0 %v1195
        %1209 = vmatprep.subr.mxu0 0.0
        %1210 = vmatpush1.msra.mxu0 %v1196
        %1211 = vmatprep.subr.mxu0 0.0
        %1212 = vmatpush1.msra.mxu0 %v1197
        %1213 = vmatprep.subr.mxu0 0.0
        %1214 = vmatpush1.msra.mxu0 %v1198
        %1215 = vmatprep.subr.mxu0 0.0
        %1216 = vmatpush1.msra.mxu0 %v1199
        %1217 = vmatprep.subr.mxu0 0.0
        %1218 = vmatpush1.msra.mxu0 %v1200
        %1219 = vmatprep.subr.mxu0 0.0
        %1220 = vmatpush1.msra.mxu0 %v1201
        %1221 = vmatprep.subr.mxu0 0.0
        %1222 = vmatpush1.msra.mxu0 0.0
        %1223 = vmatprep.subr.mxu0 0.0
        %1224 = vmatpush1.msra.mxu0 0.0
        %1225 = vmatprep.subr.mxu0 0.0
        %1226 = vmatpush1.msra.mxu0 0.0
        %1227 = vmatprep.subr.mxu0 0.0
        %1228 = vmatpush1.msra.mxu0 0.0
        %1229 = vmatprep.subr.mxu0 0.0
        %1230 = vmatpush1.msra.mxu0 0.0
        %1231 = vmatprep.subr.mxu0 0.0
        %1232 = vmatpush1.msra.mxu0 0.0
        %1233 = vmatprep.subr.mxu0 0.0
        %1234 = vmatpush1.msra.mxu0 0.0
        %1235 = vmatprep.subr.mxu0 0.0
        %1236 = vmatpush1.msra.mxu0 0.0
        %1237 = vmatprep.subr.mxu0 0.0
        %1238 = vmatpush1.msra.mxu0 0.0
        %1239 = vmatprep.subr.mxu0 0.0
        %1240 = vmatpush1.msra.mxu0 0.0
        %1241 = vmatprep.subr.mxu0 0.0
        %1242 = vmatpush1.msra.mxu0 0.0
        %1243 = vmatprep.subr.mxu0 0.0
        %1244 = vmatpush1.msra.mxu0 0.0
        %1245 = vmatprep.subr.mxu0 0.0
        %1246 = vmatpush1.msra.mxu0 0.0
        %1247 = vmatprep.subr.mxu0 0.0
        %1248 = vmatpush1.msra.mxu0 0.0
        %1249 = vmatprep.subr.mxu0 0.0
        %1250 = vmatpush1.msra.mxu0 0.0
        %1251 = vmatprep.subr.mxu0 0.0
        %1252 = vmatpush1.msra.mxu0 0.0
        %1253 = vmatprep.subr.mxu0 0.0
        %1254 = vmatpush1.msra.mxu0 0.0
        %1255 = vmatprep.subr.mxu0 0.0
        %1256 = vmatpush1.msra.mxu0 0.0
        %1257 = vmatprep.subr.mxu0 0.0
        %1258 = vmatpush1.msra.mxu0 0.0
        %1259 = vmatprep.subr.mxu0 0.0
        %1260 = vmatpush1.msra.mxu0 0.0
        %1261 = vmatprep.subr.mxu0 0.0
        %1262 = vmatpush1.msra.mxu0 0.0
        %1263 = vmatprep.subr.mxu0 0.0
        %1264 = vmatpush1.msra.mxu0 0.0
        %1265 = vmatprep.subr.mxu0 0.0
        %1266 = vmatpush1.msra.mxu0 0.0
        %1267 = vmatprep.subr.mxu0 0.0
        %1268 = vmatpush1.msra.mxu0 0.0
        %1269 = vmatprep.mubr.f32.mxu0 0.0
        %1270 = vmatmul.mubr.f32.gmra.mrb[0].mxu0 %v1203
        %v1271 = vpop.f32.mrb[0].mxu0
        %v1272 = vadd.f32 0.0, %v1271
        %v1273 = vpop.f32.mrb[0].mxu0
        %1274 = vdwg.mxu0
        %1275 = vst [vmem:[#allocation5] sm:$0xff] %v1272
        %v1276 = vld [vmem:[#allocation22] sm:$0xff]
        %v1277 = vld [vmem:[#allocation22 + $0x8] sm:$0xff]
        %v1278 = vld [vmem:[#allocation22 + $0x10] sm:$0xff]
        %v1279 = vld [vmem:[#allocation22 + $0x18] sm:$0xff]
        %v1280 = vld [vmem:[#allocation22 + $0x20] sm:$0xff]
        %v1281 = vld [vmem:[#allocation22 + $0x28] sm:$0xff]
        %v1282 = vld [vmem:[#allocation22 + $0x30] sm:$0xff]
        %v1283 = vld [vmem:[#allocation22 + $0x38] sm:$0xff]
        %v1284 = vld [vmem:[#allocation22 + $0x40] sm:$0xff]
        %v1285 = vld [vmem:[#allocation22 + $0x48] sm:$0xff]
        %v1286 = vld [vmem:[#allocation22 + $0x50] sm:$0xff]
        %v1287 = vld [vmem:[#allocation22 + $0x58] sm:$0xff]
        %v1288 = vld [vmem:[#allocation22 + $0x60] sm:$0xff]
        %v1289 = vld [vmem:[#allocation22 + $0x68] sm:$0xff]
        %v1290 = vld [vmem:[#allocation22 + $0x70] sm:$0xff]
        %v1291 = vld [vmem:[#allocation22 + $0x78] sm:$0xff]
        %v1292 = vld [vmem:[%s12] sm:$0x1]
        %v1294 = vlaneseq
        %v1295 = vshrl.u32 %v1294, 7
        %v1296 = vsub.s32 0, %v1295
        %v1297 = vrot.slane %v1292, %v1296
        %1299 = vmatprep.subr.mxu0 0.0
        %1300 = vmatpush1.msra.mxu0 %v1276
        %1301 = vmatprep.subr.mxu0 0.0
        %1302 = vmatpush1.msra.mxu0 %v1277
        %1303 = vmatprep.subr.mxu0 0.0
        %1304 = vmatpush1.msra.mxu0 %v1278
        %1305 = vmatprep.subr.mxu0 0.0
        %1306 = vmatpush1.msra.mxu0 %v1279
        %1307 = vmatprep.subr.mxu0 0.0
        %1308 = vmatpush1.msra.mxu0 %v1280
        %1309 = vmatprep.subr.mxu0 0.0
        %1310 = vmatpush1.msra.mxu0 %v1281
        %1311 = vmatprep.subr.mxu0 0.0
        %1312 = vmatpush1.msra.mxu0 %v1282
        %1313 = vmatprep.subr.mxu0 0.0
        %1314 = vmatpush1.msra.mxu0 %v1283
        %1315 = vmatprep.subr.mxu0 0.0
        %1316 = vmatpush1.msra.mxu0 %v1284
        %1317 = vmatprep.subr.mxu0 0.0
        %1318 = vmatpush1.msra.mxu0 %v1285
        %1319 = vmatprep.subr.mxu0 0.0
        %1320 = vmatpush1.msra.mxu0 %v1286
        %1321 = vmatprep.subr.mxu0 0.0
        %1322 = vmatpush1.msra.mxu0 %v1287
        %1323 = vmatprep.subr.mxu0 0.0
        %1324 = vmatpush1.msra.mxu0 %v1288
        %1325 = vmatprep.subr.mxu0 0.0
        %1326 = vmatpush1.msra.mxu0 %v1289
        %1327 = vmatprep.subr.mxu0 0.0
        %1328 = vmatpush1.msra.mxu0 %v1290
        %1329 = vmatprep.subr.mxu0 0.0
        %1330 = vmatpush1.msra.mxu0 %v1291
        %1331 = vmatprep.subr.mxu0 0.0
        %1332 = vmatpush1.msra.mxu0 0.0
        %1333 = vmatprep.subr.mxu0 0.0
        %1334 = vmatpush1.msra.mxu0 0.0
        %1335 = vmatprep.subr.mxu0 0.0
        %1336 = vmatpush1.msra.mxu0 0.0
        %1337 = vmatprep.subr.mxu0 0.0
        %1338 = vmatpush1.msra.mxu0 0.0
        %1339 = vmatprep.subr.mxu0 0.0
        %1340 = vmatpush1.msra.mxu0 0.0
        %1341 = vmatprep.subr.mxu0 0.0
        %1342 = vmatpush1.msra.mxu0 0.0
        %1343 = vmatprep.subr.mxu0 0.0
        %1344 = vmatpush1.msra.mxu0 0.0
        %1345 = vmatprep.subr.mxu0 0.0
        %1346 = vmatpush1.msra.mxu0 0.0
        %1347 = vmatprep.subr.mxu0 0.0
        %1348 = vmatpush1.msra.mxu0 0.0
        %1349 = vmatprep.subr.mxu0 0.0
        %1350 = vmatpush1.msra.mxu0 0.0
        %1351 = vmatprep.subr.mxu0 0.0
        %1352 = vmatpush1.msra.mxu0 0.0
        %1353 = vmatprep.subr.mxu0 0.0
        %1354 = vmatpush1.msra.mxu0 0.0
        %1355 = vmatprep.subr.mxu0 0.0
        %1356 = vmatpush1.msra.mxu0 0.0
        %1357 = vmatprep.subr.mxu0 0.0
        %1358 = vmatpush1.msra.mxu0 0.0
        %1359 = vmatprep.subr.mxu0 0.0
        %1360 = vmatpush1.msra.mxu0 0.0
        %1361 = vmatprep.subr.mxu0 0.0
        %1362 = vmatpush1.msra.mxu0 0.0
        %1363 = vmatprep.mubr.f32.mxu0 0.0
        %1364 = vmatmul.mubr.f32.gmra.mrb[0].mxu0 %v1272
        %v1365 = vpop.f32.mrb[0].mxu0
        %v1366 = vadd.f32 %v1297, %v1365
        %v1367 = vpop.f32.mrb[0].mxu0
        %1368 = vdwg.mxu0
        %v1369 = vmax.f32 %v1366, 0.0
        %vm1370 = vcmp.ne.f32.partialorder %v1366, %v1366
        %v1371 = vadd.f32 %v1366, 0.0
        %v1372 = vand.u32 2147483647, %v1366
        %v1373 = vsub.f32 0.0, %v1372
        %v1374 = vmul.f32 %v1373, 1.442695
        %v1375 = vpow.pop %v1374
        %v1376 = vadd.f32 %v1375, 1.0
        %v1377 = vlog2.pop %v1376
        %v1378 = vmul.f32 %v1377, 0.6931472
        %v1379 = vmul.f32 -0.5, %v1375
        %v1380 = vadd.f32 %v1379, 1.0
        %v1381 = vmul.f32 %v1380, %v1375
        %v1382 = vand.u32 2147483647, %v1375
        %vm1383 = vcmp.lt.f32.partialorder %v1382, 0.0004427343
        %v1384 = vsel %vm1383, %v1381, %v1378
        %v1385 = vadd.f32 %v1369, %v1384
        %v1386 = vsel %vm1370, %v1371, %v1385
        %1387 = vst.msk [vmem:[#allocation6] sm:$0xff] %vm1139, %v1386
        %v1388 = vlaneseq
        %v1389 = vshrl.u32 %v1388, 7
        %v1390 = vld [vmem:[#allocation23] sm:$0xff]
        %v1391 = vld [vmem:[#allocation23 + $0x8] sm:$0xff]
        %v1392 = vld [vmem:[#allocation9] sm:$0xff]
        %v1393 = vld [vmem:[#allocation9 + $0x8] sm:$0xff]
        %v1394 = vld [vmem:[#allocation6] sm:$0xff]
        %v1395 = vld [vmem:[#allocation4] sm:$0xff]
        %v1396 = vmul.f32 %v1394, %v1395
        %v1397 = vld [vmem:[#allocation5] sm:$0xff]
        %v1398 = vlaneseq
        %v1399 = vshrl.u32 %v1398, 7
        %v1400 = vsub.s32 0, %v1399
        %v1401 = vrot.slane %v1397, %v1400
        %s1403 = sor.u32 256, 2
        %1404 = vbcast.lane.b32.xlu0 %v1401, %s1403
        %v1405 = vpop.permute.xlu0 %1404
        %s1407 = sor.u32 256, 10
        %1408 = vbcast.lane.b32.xlu0 %v1401, %s1407
        %v1409 = vpop.permute.xlu0 %1408
        %s1411 = sor.u32 256, 18
        %1412 = vbcast.lane.b32.xlu0 %v1401, %s1411
        %v1413 = vpop.permute.xlu0 %1412
        %s1415 = sor.u32 256, 26
        %1416 = vbcast.lane.b32.xlu0 %v1401, %s1415
        %v1417 = vpop.permute.xlu0 %1416
        %v1418 = vlaneseq
        %v1419 = vshrl.u32 %v1418, 7
        %v1420 = vsub.s32 0, %v1419
        %v1421 = vrot.slane %v1394, %v1420
        %v1422 = vmul.f32 %v1421, %v1390
        %v1423 = vmul.f32 %v1421, %v1391
        %v1424 = vmul.f32 %v1422, 1.442695
        %v1425 = vpow.pop %v1424
        %v1426 = vmul.f32 %v1423, 1.442695
        %v1427 = vpow.pop %v1426
        %v1428 = vmul.f32 %v1425, %v1392
        %v1429 = vmul.f32 %v1427, %v1393
        %v1430 = vlaneseq
        %v1431 = vshrl.u32 %v1430, 7
        %v1432 = vsub.s32 0, %v1431
        %v1433 = vrot.slane %v1396, %v1432
        %v1434 = vmul.f32 %v1433, %v1405
        %v1435 = vmul.f32 %v1433, %v1409
        %v1436 = vadd.f32 %v1428, %v1434
        %v1437 = vadd.f32 %v1429, %v1435
        %v1438 = vmul.f32 %v1436, %v1413
        %v1439 = vmul.f32 %v1437, %v1417
        %v1440 = vsel %vm1139, %v1438, 0.0
        %v1441 = vsel %vm1139, %v1439, 0.0
        %v1442 = vadd.f32 %v1440, %v1441
        %v1443 = vrot.slane %v1442, 4
        %v1444 = vadd.f32 %v1442, %v1443
        %v1445 = vrot.slane %v1444, 2
        %v1446 = vadd.f32 %v1444, %v1445
        %v1447 = vrot.slane %v1446, 1
        %v1448 = vadd.f32 %v1446, %v1447
        %vm1449 = vcmp.eq.s32.totalorder %v1389, 0
        %v1450 = vsel %vm1449, 1, 0
        %vm1451 = vcmp.eq.s32.totalorder %v1450, 1
        %v1452 = vsel %vm1451, %v1448, 0.0
        %v1453 = vlaneseq
        %v1454 = vshrl.u32 %v1453, 7
        %v1455 = vsub.s32 1, %v1454
        %v1456 = vrot.slane %v1397, %v1455
        %s1458 = sor.u32 256, 2
        %1459 = vbcast.lane.b32.xlu0 %v1456, %s1458
        %v1460 = vpop.permute.xlu0 %1459
        %s1462 = sor.u32 256, 10
        %1463 = vbcast.lane.b32.xlu0 %v1456, %s1462
        %v1464 = vpop.permute.xlu0 %1463
        %s1466 = sor.u32 256, 18
        %1467 = vbcast.lane.b32.xlu0 %v1456, %s1466
        %v1468 = vpop.permute.xlu0 %1467
        %s1470 = sor.u32 256, 26
        %1471 = vbcast.lane.b32.xlu0 %v1456, %s1470
        %v1472 = vpop.permute.xlu0 %1471
        %v1473 = vlaneseq
        %v1474 = vshrl.u32 %v1473, 7
        %v1475 = vsub.s32 1, %v1474
        %v1476 = vrot.slane %v1394, %v1475
        %v1477 = vmul.f32 %v1476, %v1390
        %v1478 = vmul.f32 %v1476, %v1391
        %v1479 = vmul.f32 %v1477, 1.442695
        %v1480 = vpow.pop %v1479
        %v1481 = vmul.f32 %v1478, 1.442695
        %v1482 = vpow.pop %v1481
        %v1483 = vmul.f32 %v1480, %v1436
        %v1484 = vmul.f32 %v1482, %v1437
        %v1485 = vlaneseq
        %v1486 = vshrl.u32 %v1485, 7
        %v1487 = vsub.s32 1, %v1486
        %v1488 = vrot.slane %v1396, %v1487
        %v1489 = vmul.f32 %v1488, %v1460
        %v1490 = vmul.f32 %v1488, %v1464
        %v1491 = vadd.f32 %v1483, %v1489
        %v1492 = vadd.f32 %v1484, %v1490
        %v1493 = vmul.f32 %v1491, %v1468
        %v1494 = vmul.f32 %v1492, %v1472
        %v1495 = vsel %vm1139, %v1493, 0.0
        %v1496 = vsel %vm1139, %v1494, 0.0
        %v1497 = vadd.f32 %v1495, %v1496
        %v1498 = vrot.slane %v1497, 4
        %v1499 = vadd.f32 %v1497, %v1498
        %v1500 = vrot.slane %v1499, 2
        %v1501 = vadd.f32 %v1499, %v1500
        %v1502 = vrot.slane %v1501, 1
        %v1503 = vadd.f32 %v1501, %v1502
        %vm1504 = vcmp.eq.s32.totalorder %v1389, 1
        %v1505 = vsel %vm1504, 1, 0
        %vm1506 = vcmp.eq.s32.totalorder %v1505, 1
        %v1507 = vsel %vm1506, %v1503, %v1452
        %v1508 = vlaneseq
        %v1509 = vshrl.u32 %v1508, 7
        %v1510 = vsub.s32 2, %v1509
        %v1511 = vrot.slane %v1397, %v1510
        %s1513 = sor.u32 256, 2
        %1514 = vbcast.lane.b32.xlu0 %v1511, %s1513
        %v1515 = vpop.permute.xlu0 %1514
        %s1517 = sor.u32 256, 10
        %1518 = vbcast.lane.b32.xlu0 %v1511, %s1517
        %v1519 = vpop.permute.xlu0 %1518
        %s1521 = sor.u32 256, 18
        %1522 = vbcast.lane.b32.xlu0 %v1511, %s1521
        %v1523 = vpop.permute.xlu0 %1522
        %s1525 = sor.u32 256, 26
        %1526 = vbcast.lane.b32.xlu0 %v1511, %s1525
        %v1527 = vpop.permute.xlu0 %1526
        %v1528 = vlaneseq
        %v1529 = vshrl.u32 %v1528, 7
        %v1530 = vsub.s32 2, %v1529
        %v1531 = vrot.slane %v1394, %v1530
        %v1532 = vmul.f32 %v1531, %v1390
        %v1533 = vmul.f32 %v1531, %v1391
        %v1534 = vmul.f32 %v1532, 1.442695
        %v1535 = vpow.pop %v1534
        %v1536 = vmul.f32 %v1533, 1.442695
        %v1537 = vpow.pop %v1536
        %v1538 = vmul.f32 %v1535, %v1491
        %v1539 = vmul.f32 %v1537, %v1492
        %v1540 = vlaneseq
        %v1541 = vshrl.u32 %v1540, 7
        %v1542 = vsub.s32 2, %v1541
        %v1543 = vrot.slane %v1396, %v1542
        %v1544 = vmul.f32 %v1543, %v1515
        %v1545 = vmul.f32 %v1543, %v1519
        %v1546 = vadd.f32 %v1538, %v1544
        %v1547 = vadd.f32 %v1539, %v1545
        %v1548 = vmul.f32 %v1546, %v1523
        %v1549 = vmul.f32 %v1547, %v1527
        %v1550 = vsel %vm1139, %v1548, 0.0
        %v1551 = vsel %vm1139, %v1549, 0.0
        %v1552 = vadd.f32 %v1550, %v1551
        %v1553 = vrot.slane %v1552, 4
        %v1554 = vadd.f32 %v1552, %v1553
        %v1555 = vrot.slane %v1554, 2
        %v1556 = vadd.f32 %v1554, %v1555
        %v1557 = vrot.slane %v1556, 1
        %v1558 = vadd.f32 %v1556, %v1557
        %vm1559 = vcmp.eq.s32.totalorder %v1389, 2
        %v1560 = vsel %vm1559, 1, 0
        %vm1561 = vcmp.eq.s32.totalorder %v1560, 1
        %v1562 = vsel %vm1561, %v1558, %v1507
        %v1563 = vlaneseq
        %v1564 = vshrl.u32 %v1563, 7
        %v1565 = vsub.s32 3, %v1564
        %v1566 = vrot.slane %v1397, %v1565
        %s1568 = sor.u32 256, 2
        %1569 = vbcast.lane.b32.xlu0 %v1566, %s1568
        %v1570 = vpop.permute.xlu0 %1569
        %s1572 = sor.u32 256, 10
        %1573 = vbcast.lane.b32.xlu0 %v1566, %s1572
        %v1574 = vpop.permute.xlu0 %1573
        %s1576 = sor.u32 256, 18
        %1577 = vbcast.lane.b32.xlu0 %v1566, %s1576
        %v1578 = vpop.permute.xlu0 %1577
        %s1580 = sor.u32 256, 26
        %1581 = vbcast.lane.b32.xlu0 %v1566, %s1580
        %v1582 = vpop.permute.xlu0 %1581
        %v1583 = vlaneseq
        %v1584 = vshrl.u32 %v1583, 7
        %v1585 = vsub.s32 3, %v1584
        %v1586 = vrot.slane %v1394, %v1585
        %v1587 = vmul.f32 %v1586, %v1390
        %v1588 = vmul.f32 %v1586, %v1391
        %v1589 = vmul.f32 %v1587, 1.442695
        %v1590 = vpow.pop %v1589
        %v1591 = vmul.f32 %v1588, 1.442695
        %v1592 = vpow.pop %v1591
        %v1593 = vmul.f32 %v1590, %v1546
        %v1594 = vmul.f32 %v1592, %v1547
        %v1595 = vlaneseq
        %v1596 = vshrl.u32 %v1595, 7
        %v1597 = vsub.s32 3, %v1596
        %v1598 = vrot.slane %v1396, %v1597
        %v1599 = vmul.f32 %v1598, %v1570
        %v1600 = vmul.f32 %v1598, %v1574
        %v1601 = vadd.f32 %v1593, %v1599
        %v1602 = vadd.f32 %v1594, %v1600
        %v1603 = vmul.f32 %v1601, %v1578
        %v1604 = vmul.f32 %v1602, %v1582
        %v1605 = vsel %vm1139, %v1603, 0.0
        %v1606 = vsel %vm1139, %v1604, 0.0
        %v1607 = vadd.f32 %v1605, %v1606
        %v1608 = vrot.slane %v1607, 4
        %v1609 = vadd.f32 %v1607, %v1608
        %v1610 = vrot.slane %v1609, 2
        %v1611 = vadd.f32 %v1609, %v1610
        %v1612 = vrot.slane %v1611, 1
        %v1613 = vadd.f32 %v1611, %v1612
        %vm1614 = vcmp.eq.s32.totalorder %v1389, 3
        %v1615 = vsel %vm1614, 1, 0
        %vm1616 = vcmp.eq.s32.totalorder %v1615, 1
        %v1617 = vsel %vm1616, %v1613, %v1562
        %v1618 = vlaneseq
        %v1619 = vshrl.u32 %v1618, 7
        %v1620 = vsub.s32 4, %v1619
        %v1621 = vrot.slane %v1397, %v1620
        %s1623 = sor.u32 256, 2
        %1624 = vbcast.lane.b32.xlu0 %v1621, %s1623
        %v1625 = vpop.permute.xlu0 %1624
        %s1627 = sor.u32 256, 10
        %1628 = vbcast.lane.b32.xlu0 %v1621, %s1627
        %v1629 = vpop.permute.xlu0 %1628
        %s1631 = sor.u32 256, 18
        %1632 = vbcast.lane.b32.xlu0 %v1621, %s1631
        %v1633 = vpop.permute.xlu0 %1632
        %s1635 = sor.u32 256, 26
        %1636 = vbcast.lane.b32.xlu0 %v1621, %s1635
        %v1637 = vpop.permute.xlu0 %1636
        %v1638 = vlaneseq
        %v1639 = vshrl.u32 %v1638, 7
        %v1640 = vsub.s32 4, %v1639
        %v1641 = vrot.slane %v1394, %v1640
        %v1642 = vmul.f32 %v1641, %v1390
        %v1643 = vmul.f32 %v1641, %v1391
        %v1644 = vmul.f32 %v1642, 1.442695
        %v1645 = vpow.pop %v1644
        %v1646 = vmul.f32 %v1643, 1.442695
        %v1647 = vpow.pop %v1646
        %v1648 = vmul.f32 %v1645, %v1601
        %v1649 = vmul.f32 %v1647, %v1602
        %v1650 = vlaneseq
        %v1651 = vshrl.u32 %v1650, 7
        %v1652 = vsub.s32 4, %v1651
        %v1653 = vrot.slane %v1396, %v1652
        %v1654 = vmul.f32 %v1653, %v1625
        %v1655 = vmul.f32 %v1653, %v1629
        %v1656 = vadd.f32 %v1648, %v1654
        %v1657 = vadd.f32 %v1649, %v1655
        %v1658 = vmul.f32 %v1656, %v1633
        %v1659 = vmul.f32 %v1657, %v1637
        %v1660 = vsel %vm1139, %v1658, 0.0
        %v1661 = vsel %vm1139, %v1659, 0.0
        %v1662 = vadd.f32 %v1660, %v1661
        %v1663 = vrot.slane %v1662, 4
        %v1664 = vadd.f32 %v1662, %v1663
        %v1665 = vrot.slane %v1664, 2
        %v1666 = vadd.f32 %v1664, %v1665
        %v1667 = vrot.slane %v1666, 1
        %v1668 = vadd.f32 %v1666, %v1667
        %vm1669 = vcmp.eq.s32.totalorder %v1389, 4
        %v1670 = vsel %vm1669, 1, 0
        %vm1671 = vcmp.eq.s32.totalorder %v1670, 1
        %v1672 = vsel %vm1671, %v1668, %v1617
        %v1673 = vlaneseq
        %v1674 = vshrl.u32 %v1673, 7
        %v1675 = vsub.s32 5, %v1674
        %v1676 = vrot.slane %v1397, %v1675
        %s1678 = sor.u32 256, 2
        %1679 = vbcast.lane.b32.xlu0 %v1676, %s1678
        %v1680 = vpop.permute.xlu0 %1679
        %s1682 = sor.u32 256, 10
        %1683 = vbcast.lane.b32.xlu0 %v1676, %s1682
        %v1684 = vpop.permute.xlu0 %1683
        %s1686 = sor.u32 256, 18
        %1687 = vbcast.lane.b32.xlu0 %v1676, %s1686
        %v1688 = vpop.permute.xlu0 %1687
        %s1690 = sor.u32 256, 26
        %1691 = vbcast.lane.b32.xlu0 %v1676, %s1690
        %v1692 = vpop.permute.xlu0 %1691
        %v1693 = vlaneseq
        %v1694 = vshrl.u32 %v1693, 7
        %v1695 = vsub.s32 5, %v1694
        %v1696 = vrot.slane %v1394, %v1695
        %v1697 = vmul.f32 %v1696, %v1390
        %v1698 = vmul.f32 %v1696, %v1391
        %v1699 = vmul.f32 %v1697, 1.442695
        %v1700 = vpow.pop %v1699
        %v1701 = vmul.f32 %v1698, 1.442695
        %v1702 = vpow.pop %v1701
        %v1703 = vmul.f32 %v1700, %v1656
        %v1704 = vmul.f32 %v1702, %v1657
        %v1705 = vlaneseq
        %v1706 = vshrl.u32 %v1705, 7
        %v1707 = vsub.s32 5, %v1706
        %v1708 = vrot.slane %v1396, %v1707
        %v1709 = vmul.f32 %v1708, %v1680
        %v1710 = vmul.f32 %v1708, %v1684
        %v1711 = vadd.f32 %v1703, %v1709
        %v1712 = vadd.f32 %v1704, %v1710
        %v1713 = vmul.f32 %v1711, %v1688
        %v1714 = vmul.f32 %v1712, %v1692
        %v1715 = vsel %vm1139, %v1713, 0.0
        %v1716 = vsel %vm1139, %v1714, 0.0
        %v1717 = vadd.f32 %v1715, %v1716
        %v1718 = vrot.slane %v1717, 4
        %v1719 = vadd.f32 %v1717, %v1718
        %v1720 = vrot.slane %v1719, 2
        %v1721 = vadd.f32 %v1719, %v1720
        %v1722 = vrot.slane %v1721, 1
        %v1723 = vadd.f32 %v1721, %v1722
        %vm1724 = vcmp.eq.s32.totalorder %v1389, 5
        %v1725 = vsel %vm1724, 1, 0
        %vm1726 = vcmp.eq.s32.totalorder %v1725, 1
        %v1727 = vsel %vm1726, %v1723, %v1672
        %v1728 = vlaneseq
        %v1729 = vshrl.u32 %v1728, 7
        %v1730 = vsub.s32 6, %v1729
        %v1731 = vrot.slane %v1397, %v1730
        %s1733 = sor.u32 256, 2
        %1734 = vbcast.lane.b32.xlu0 %v1731, %s1733
        %v1735 = vpop.permute.xlu0 %1734
        %s1737 = sor.u32 256, 10
        %1738 = vbcast.lane.b32.xlu0 %v1731, %s1737
        %v1739 = vpop.permute.xlu0 %1738
        %s1741 = sor.u32 256, 18
        %1742 = vbcast.lane.b32.xlu0 %v1731, %s1741
        %v1743 = vpop.permute.xlu0 %1742
        %s1745 = sor.u32 256, 26
        %1746 = vbcast.lane.b32.xlu0 %v1731, %s1745
        %v1747 = vpop.permute.xlu0 %1746
        %v1748 = vlaneseq
        %v1749 = vshrl.u32 %v1748, 7
        %v1750 = vsub.s32 6, %v1749
        %v1751 = vrot.slane %v1394, %v1750
        %v1752 = vmul.f32 %v1751, %v1390
        %v1753 = vmul.f32 %v1751, %v1391
        %v1754 = vmul.f32 %v1752, 1.442695
        %v1755 = vpow.pop %v1754
        %v1756 = vmul.f32 %v1753, 1.442695
        %v1757 = vpow.pop %v1756
        %v1758 = vmul.f32 %v1755, %v1711
        %v1759 = vmul.f32 %v1757, %v1712
        %v1760 = vlaneseq
        %v1761 = vshrl.u32 %v1760, 7
        %v1762 = vsub.s32 6, %v1761
        %v1763 = vrot.slane %v1396, %v1762
        %v1764 = vmul.f32 %v1763, %v1735
        %v1765 = vmul.f32 %v1763, %v1739
        %v1766 = vadd.f32 %v1758, %v1764
        %v1767 = vadd.f32 %v1759, %v1765
        %v1768 = vmul.f32 %v1766, %v1743
        %v1769 = vmul.f32 %v1767, %v1747
        %v1770 = vsel %vm1139, %v1768, 0.0
        %v1771 = vsel %vm1139, %v1769, 0.0
        %v1772 = vadd.f32 %v1770, %v1771
        %v1773 = vrot.slane %v1772, 4
        %v1774 = vadd.f32 %v1772, %v1773
        %v1775 = vrot.slane %v1774, 2
        %v1776 = vadd.f32 %v1774, %v1775
        %v1777 = vrot.slane %v1776, 1
        %v1778 = vadd.f32 %v1776, %v1777
        %vm1779 = vcmp.eq.s32.totalorder %v1389, 6
        %v1780 = vsel %vm1779, 1, 0
        %vm1781 = vcmp.eq.s32.totalorder %v1780, 1
        %v1782 = vsel %vm1781, %v1778, %v1727
        %v1783 = vlaneseq
        %v1784 = vshrl.u32 %v1783, 7
        %v1785 = vsub.s32 7, %v1784
        %v1786 = vrot.slane %v1397, %v1785
        %s1788 = sor.u32 256, 2
        %1789 = vbcast.lane.b32.xlu0 %v1786, %s1788
        %v1790 = vpop.permute.xlu0 %1789
        %s1792 = sor.u32 256, 10
        %1793 = vbcast.lane.b32.xlu0 %v1786, %s1792
        %v1794 = vpop.permute.xlu0 %1793
        %s1796 = sor.u32 256, 18
        %1797 = vbcast.lane.b32.xlu0 %v1786, %s1796
        %v1798 = vpop.permute.xlu0 %1797
        %s1800 = sor.u32 256, 26
        %1801 = vbcast.lane.b32.xlu0 %v1786, %s1800
        %v1802 = vpop.permute.xlu0 %1801
        %v1803 = vlaneseq
        %v1804 = vshrl.u32 %v1803, 7
        %v1805 = vsub.s32 7, %v1804
        %v1806 = vrot.slane %v1394, %v1805
        %v1807 = vmul.f32 %v1806, %v1390
        %v1808 = vmul.f32 %v1806, %v1391
        %v1809 = vmul.f32 %v1807, 1.442695
        %v1810 = vpow.pop %v1809
        %v1811 = vmul.f32 %v1808, 1.442695
        %v1812 = vpow.pop %v1811
        %v1813 = vmul.f32 %v1810, %v1766
        %v1814 = vmul.f32 %v1812, %v1767
        %v1815 = vlaneseq
        %v1816 = vshrl.u32 %v1815, 7
        %v1817 = vsub.s32 7, %v1816
        %v1818 = vrot.slane %v1396, %v1817
        %v1819 = vmul.f32 %v1818, %v1790
        %v1820 = vmul.f32 %v1818, %v1794
        %v1821 = vadd.f32 %v1813, %v1819
        %v1822 = vadd.f32 %v1814, %v1820
        %v1823 = vmul.f32 %v1821, %v1798
        %v1824 = vmul.f32 %v1822, %v1802
        %v1825 = vsel %vm1139, %v1823, 0.0
        %v1826 = vsel %vm1139, %v1824, 0.0
        %v1827 = vadd.f32 %v1825, %v1826
        %v1828 = vrot.slane %v1827, 4
        %v1829 = vadd.f32 %v1827, %v1828
        %v1830 = vrot.slane %v1829, 2
        %v1831 = vadd.f32 %v1829, %v1830
        %v1832 = vrot.slane %v1831, 1
        %v1833 = vadd.f32 %v1831, %v1832
        %vm1834 = vcmp.eq.s32.totalorder %v1389, 7
        %v1835 = vsel %vm1834, 1, 0
        %vm1836 = vcmp.eq.s32.totalorder %v1835, 1
        %v1837 = vsel %vm1836, %v1833, %v1782
        %1838 = vst.msk [vmem:[#allocation7] sm:$0xff] %vm1139, %v1837
        %1839 = vst.msk [vmem:[#allocation9] sm:$0xff] %vm1139, %v1821
        %1840 = vst.msk [vmem:[#allocation9 + $0x8] sm:$0xff] %vm1139, %v1822
        %v1841 = vld [vmem:[#allocation7] sm:$0xff]
        %v1842 = vld [vmem:[#allocation4] sm:$0xff]
        %v1843 = vld [vmem:[%s14] sm:$0x1]
        %v1845 = vlaneseq
        %v1846 = vshrl.u32 %v1845, 7
        %v1847 = vsub.s32 0, %v1846
        %v1848 = vrot.slane %v1843, %v1847
        %v1850 = vmul.f32 %v1842, %v1848
        %v1851 = vadd.f32 %v1841, %v1850
        %v1852 = vld [vmem:[#allocation3] sm:$0xff]
        %v1853 = vmul.f32 %v1851, %v1852
        %v1854 = vpack.c.bf16 %v1853, %v1853
        %v1855 = vld [vmem:[%s15] sm:$0xf]
        %v1856 = vld [vmem:[%s15 + $0x4] sm:$0xf]
        %v1857 = vld [vmem:[%s15 + $0x8] sm:$0xf]
        %v1858 = vld [vmem:[%s15 + $0xc] sm:$0xf]
        %v1859 = vld [vmem:[%s15 + $0x10] sm:$0xf]
        %v1860 = vld [vmem:[%s15 + $0x14] sm:$0xf]
        %v1861 = vld [vmem:[%s15 + $0x18] sm:$0xf]
        %v1862 = vld [vmem:[%s15 + $0x1c] sm:$0xf]
        %v1871 = vunpack.c.l.b16 %v1855
        %v1872 = vunpack.c.l.b16 %v1856
        %v1873 = vunpack.c.l.b16 %v1857
        %v1874 = vunpack.c.l.b16 %v1858
        %v1875 = vunpack.c.l.b16 %v1859
        %v1876 = vunpack.c.l.b16 %v1860
        %v1877 = vunpack.c.l.b16 %v1861
        %v1878 = vunpack.c.l.b16 %v1862
        %v1879 = vpack.c.b16 %v1872, %v1871
        %v1880 = vpack.c.b16 %v1874, %v1873
        %v1881 = vpack.c.b16 %v1876, %v1875
        %v1882 = vpack.c.b16 %v1878, %v1877
        %v1888 = vsel %vm1139, %v1854, 0
        %1890 = vmatprep.subr.bf16.mxu0 0
        %1891 = vmatpush1.bf16.msra.mxu0 %v1879
        %1892 = vmatprep.subr.bf16.mxu0 0
        %1893 = vmatpush1.bf16.msra.mxu0 %v1880
        %1894 = vmatprep.subr.bf16.mxu0 0
        %1895 = vmatpush1.bf16.msra.mxu0 %v1881
        %1896 = vmatprep.subr.bf16.mxu0 0
        %1897 = vmatpush1.bf16.msra.mxu0 %v1882
        %1898 = vmatprep.subr.bf16.mxu0 0
        %1899 = vmatpush1.bf16.msra.mxu0 0
        %1900 = vmatprep.subr.bf16.mxu0 0
        %1901 = vmatpush1.bf16.msra.mxu0 0
        %1902 = vmatprep.subr.bf16.mxu0 0
        %1903 = vmatpush1.bf16.msra.mxu0 0
        %1904 = vmatprep.subr.bf16.mxu0 0
        %1905 = vmatpush1.bf16.msra.mxu0 0
        %1906 = vmatprep.subr.bf16.mxu0 0
        %1907 = vmatpush1.bf16.msra.mxu0 0
        %1908 = vmatprep.subr.bf16.mxu0 0
        %1909 = vmatpush1.bf16.msra.mxu0 0
        %1910 = vmatprep.subr.bf16.mxu0 0
        %1911 = vmatpush1.bf16.msra.mxu0 0
        %1912 = vmatprep.subr.bf16.mxu0 0
        %1913 = vmatpush1.bf16.msra.mxu0 0
        %1914 = vmatprep.subr.bf16.mxu0 0
        %1915 = vmatpush1.bf16.msra.mxu0 0
        %1916 = vmatprep.subr.bf16.mxu0 0
        %1917 = vmatpush1.bf16.msra.mxu0 0
        %1918 = vmatprep.subr.bf16.mxu0 0
        %1919 = vmatpush1.bf16.msra.mxu0 0
        %1920 = vmatprep.subr.bf16.mxu0 0
        %1921 = vmatpush1.bf16.msra.mxu0 0
        %1922 = vmatprep.mubr.bf16.mxu0 0
        %1923 = vmatmul.mubr.bf16.gmra.mrb[0].mxu0 %v1888
        %v1924 = vpop.f32.mrb[0].mxu0
        %v1925 = vadd.f32 0.0, %v1924
        %v1926 = vpop.f32.mrb[0].mxu0
        %v1927 = vpop.f32.mrb[0].mxu0
        %v1928 = vpop.f32.mrb[0].mxu0
        %1929 = vdwg.mxu0
        %v1930 = vpack.c.bf16 %v1925, %v1925
        %v1931 = vld [vmem:[%s16] sm:$0xf]
        %v1932 = vld [vmem:[%s16 + $0x4] sm:$0xf]
        %v1933 = vld [vmem:[%s16 + $0x8] sm:$0xf]
        %v1934 = vld [vmem:[%s16 + $0xc] sm:$0xf]
        %v1935 = vld [vmem:[%s17] sm:$0x1]
        %v1937 = vlaneseq
        %v1938 = vshrl.u32 %v1937, 7
        %v1939 = vsub.s32 0, %v1938
        %v1940 = vrot.slane %v1935, %v1939
        %v1946 = vunpack.c.l.b16 %v1931
        %v1947 = vunpack.c.l.b16 %v1932
        %v1948 = vunpack.c.l.b16 %v1933
        %v1949 = vunpack.c.l.b16 %v1934
        %v1950 = vpack.c.b16 %v1947, %v1946
        %v1951 = vpack.c.b16 %v1949, %v1948
        %v1955 = vsel %vm852, %v1930, 0
        %1957 = vmatprep.subr.bf16.mxu0 0
        %1958 = vmatpush1.bf16.msra.mxu0 %v1950
        %1959 = vmatprep.subr.bf16.mxu0 0
        %1960 = vmatpush1.bf16.msra.mxu0 %v1951
        %1961 = vmatprep.subr.bf16.mxu0 0
        %1962 = vmatpush1.bf16.msra.mxu0 0
        %1963 = vmatprep.subr.bf16.mxu0 0
        %1964 = vmatpush1.bf16.msra.mxu0 0
        %1965 = vmatprep.subr.bf16.mxu0 0
        %1966 = vmatpush1.bf16.msra.mxu0 0
        %1967 = vmatprep.subr.bf16.mxu0 0
        %1968 = vmatpush1.bf16.msra.mxu0 0
        %1969 = vmatprep.subr.bf16.mxu0 0
        %1970 = vmatpush1.bf16.msra.mxu0 0
        %1971 = vmatprep.subr.bf16.mxu0 0
        %1972 = vmatpush1.bf16.msra.mxu0 0
        %1973 = vmatprep.subr.bf16.mxu0 0
        %1974 = vmatpush1.bf16.msra.mxu0 0
        %1975 = vmatprep.subr.bf16.mxu0 0
        %1976 = vmatpush1.bf16.msra.mxu0 0
        %1977 = vmatprep.subr.bf16.mxu0 0
        %1978 = vmatpush1.bf16.msra.mxu0 0
        %1979 = vmatprep.subr.bf16.mxu0 0
        %1980 = vmatpush1.bf16.msra.mxu0 0
        %1981 = vmatprep.subr.bf16.mxu0 0
        %1982 = vmatpush1.bf16.msra.mxu0 0
        %1983 = vmatprep.subr.bf16.mxu0 0
        %1984 = vmatpush1.bf16.msra.mxu0 0
        %1985 = vmatprep.subr.bf16.mxu0 0
        %1986 = vmatpush1.bf16.msra.mxu0 0
        %1987 = vmatprep.subr.bf16.mxu0 0
        %1988 = vmatpush1.bf16.msra.mxu0 0
        %1989 = vmatprep.mubr.bf16.mxu0 0
        %1990 = vmatmul.mubr.bf16.gmra.mrb[0].mxu0 %v1955
        %v1991 = vpop.f32.mrb[0].mxu0
        %v1992 = vadd.f32 %v1940, %v1991
        %v1993 = vpop.f32.mrb[0].mxu0
        %v1994 = vpop.f32.mrb[0].mxu0
        %v1995 = vpop.f32.mrb[0].mxu0
        %1996 = vdwg.mxu0
        %v1997 = vxor.u32 %v1992, 2147483648
        %v1998 = vmul.f32 %v1997, 1.442695
        %v1999 = vpow.pop %v1998
        %v2000 = vadd.f32 %v1999, 1.0
        %v2001 = vrcp.pop %v2000
        %v2002 = vmul.f32 1.0, %v2001
        %v2003 = vmul.f32 %v1992, %v2002
        %v2004 = vld [vmem:[#allocation2] sm:$0xff]
        %v2005 = vpack.c.bf16 %v2004, %v2004
        %v2006 = vld [vmem:[%s18] sm:$0xf]
        %v2007 = vld [vmem:[%s18 + $0x4] sm:$0xf]
        %v2008 = vld [vmem:[%s18 + $0x8] sm:$0xf]
        %v2009 = vld [vmem:[%s18 + $0xc] sm:$0xf]
        %v2010 = vld [vmem:[%s19] sm:$0x1]
        %v2012 = vlaneseq
        %v2013 = vshrl.u32 %v2012, 7
        %v2014 = vsub.s32 0, %v2013
        %v2015 = vrot.slane %v2010, %v2014
        %v2021 = vunpack.c.l.b16 %v2006
        %v2022 = vunpack.c.l.b16 %v2007
        %v2023 = vunpack.c.l.b16 %v2008
        %v2024 = vunpack.c.l.b16 %v2009
        %v2025 = vpack.c.b16 %v2022, %v2021
        %v2026 = vpack.c.b16 %v2024, %v2023
        %v2030 = vsel %vm852, %v2005, 0
        %2032 = vmatprep.subr.bf16.mxu0 0
        %2033 = vmatpush1.bf16.msra.mxu0 %v2025
        %2034 = vmatprep.subr.bf16.mxu0 0
        %2035 = vmatpush1.bf16.msra.mxu0 %v2026
        %2036 = vmatprep.subr.bf16.mxu0 0
        %2037 = vmatpush1.bf16.msra.mxu0 0
        %2038 = vmatprep.subr.bf16.mxu0 0
        %2039 = vmatpush1.bf16.msra.mxu0 0
        %2040 = vmatprep.subr.bf16.mxu0 0
        %2041 = vmatpush1.bf16.msra.mxu0 0
        %2042 = vmatprep.subr.bf16.mxu0 0
        %2043 = vmatpush1.bf16.msra.mxu0 0
        %2044 = vmatprep.subr.bf16.mxu0 0
        %2045 = vmatpush1.bf16.msra.mxu0 0
        %2046 = vmatprep.subr.bf16.mxu0 0
        %2047 = vmatpush1.bf16.msra.mxu0 0
        %2048 = vmatprep.subr.bf16.mxu0 0
        %2049 = vmatpush1.bf16.msra.mxu0 0
        %2050 = vmatprep.subr.bf16.mxu0 0
        %2051 = vmatpush1.bf16.msra.mxu0 0
        %2052 = vmatprep.subr.bf16.mxu0 0
        %2053 = vmatpush1.bf16.msra.mxu0 0
        %2054 = vmatprep.subr.bf16.mxu0 0
        %2055 = vmatpush1.bf16.msra.mxu0 0
        %2056 = vmatprep.subr.bf16.mxu0 0
        %2057 = vmatpush1.bf16.msra.mxu0 0
        %2058 = vmatprep.subr.bf16.mxu0 0
        %2059 = vmatpush1.bf16.msra.mxu0 0
        %2060 = vmatprep.subr.bf16.mxu0 0
        %2061 = vmatpush1.bf16.msra.mxu0 0
        %2062 = vmatprep.subr.bf16.mxu0 0
        %2063 = vmatpush1.bf16.msra.mxu0 0
        %2064 = vmatprep.mubr.bf16.mxu0 0
        %2065 = vmatmul.mubr.bf16.gmra.mrb[0].mxu0 %v2030
        %v2066 = vpop.f32.mrb[0].mxu0
        %v2067 = vadd.f32 %v2015, %v2066
        %v2068 = vpop.f32.mrb[0].mxu0
        %v2069 = vpop.f32.mrb[0].mxu0
        %v2070 = vpop.f32.mrb[0].mxu0
        %2071 = vdwg.mxu0
        %v2072 = vxor.u32 %v2067, 2147483648
        %v2073 = vmul.f32 %v2072, 1.442695
        %v2074 = vpow.pop %v2073
        %v2075 = vadd.f32 %v2074, 1.0
        %v2076 = vrcp.pop %v2075
        %v2077 = vmul.f32 1.0, %v2076
        %v2078 = vmul.f32 %v2067, %v2077
        %v2079 = vmul.f32 %v2003, %v2078
        %v2080 = vpack.c.bf16 %v2079, %v2079
        %v2081 = vld [vmem:[#allocation25] sm:$0xf]
        %v2082 = vld [vmem:[%s21] sm:$0x1]
        %v2084 = vlaneseq
        %v2085 = vshrl.u32 %v2084, 7
        %v2086 = vsub.s32 0, %v2085
        %v2087 = vrot.slane %v2082, %v2086
        %v2090 = vsel %vm968, %v2080, 0
        %v2093 = vsel %vm972, %v2081, 0
        %2095 = vmatprep.subr.bf16.mxu0 0
        %2096 = vmatpush1.bf16.msra.mxu0 %v2093
        %2097 = vmatprep.subr.bf16.mxu0 0
        %2098 = vmatpush1.bf16.msra.mxu0 0
        %2099 = vmatprep.subr.bf16.mxu0 0
        %2100 = vmatpush1.bf16.msra.mxu0 0
        %2101 = vmatprep.subr.bf16.mxu0 0
        %2102 = vmatpush1.bf16.msra.mxu0 0
        %2103 = vmatprep.subr.bf16.mxu0 0
        %2104 = vmatpush1.bf16.msra.mxu0 0
        %2105 = vmatprep.subr.bf16.mxu0 0
        %2106 = vmatpush1.bf16.msra.mxu0 0
        %2107 = vmatprep.subr.bf16.mxu0 0
        %2108 = vmatpush1.bf16.msra.mxu0 0
        %2109 = vmatprep.subr.bf16.mxu0 0
        %2110 = vmatpush1.bf16.msra.mxu0 0
        %2111 = vmatprep.subr.bf16.mxu0 0
        %2112 = vmatpush1.bf16.msra.mxu0 0
        %2113 = vmatprep.subr.bf16.mxu0 0
        %2114 = vmatpush1.bf16.msra.mxu0 0
        %2115 = vmatprep.subr.bf16.mxu0 0
        %2116 = vmatpush1.bf16.msra.mxu0 0
        %2117 = vmatprep.subr.bf16.mxu0 0
        %2118 = vmatpush1.bf16.msra.mxu0 0
        %2119 = vmatprep.subr.bf16.mxu0 0
        %2120 = vmatpush1.bf16.msra.mxu0 0
        %2121 = vmatprep.subr.bf16.mxu0 0
        %2122 = vmatpush1.bf16.msra.mxu0 0
        %2123 = vmatprep.subr.bf16.mxu0 0
        %2124 = vmatpush1.bf16.msra.mxu0 0
        %2125 = vmatprep.subr.bf16.mxu0 0
        %2126 = vmatpush1.bf16.msra.mxu0 0
        %2127 = vmatprep.mubr.bf16.mxu0 0
        %2128 = vmatmul.mubr.bf16.gmra.mrb[0].mxu0 %v2090
        %v2129 = vpop.f32.mrb[0].mxu0
        %v2130 = vadd.f32 %v2087, %v2129
        %v2131 = vpop.f32.mrb[0].mxu0
        %v2132 = vpop.f32.mrb[0].mxu0
        %v2133 = vpop.f32.mrb[0].mxu0
        %2134 = vdwg.mxu0
        %2136 = vrot.lane.b32.xlu0 %v2130, 64
        %v2137 = vpop.permute.xlu0 %2136
        %v2139 = vmul.f32 %v881, %v2137
        %2141 = vrot.lane.b32.xlu0 %v2139, 64
        %v2142 = vpop.permute.xlu0 %2141
        %v2144 = vadd.f32 %v850, %v2142
        %2145 = vst.msk [vmem:[%s836] sm:$0xff] %vm852, %v2144
        %s2146 = sand.u32 %s539, 1
        %s2147 = scalar_lea.sflag [#allocation13], %s2146
        %s2148 = sand.u32 %s539, 1
        %s2149 = smul.addr %s2148, 8
        %s2150 = scalar_lea.vmem [#allocation26], %s2149
        // Predicated region
        $region149: #{_lambda_.3} parent=107 // pred_check
          %p2151 = pneg %p549
        $region150: #{_lambda_.3} parent=107 // pred_check_branch
          %2153 = sbr.rel (%p2151) target = $region152
        $region151: #{_lambda_.3} parent=107 // pred_region
          %s2155 = ssub.s32 128, 128
          %2156 = vsyncadd %s2147, %s2155
          %s2157 = sadd.s32 %s48, %s47
          %s2158 = smul.addr %s2157, 128
          %s2159 = scalar_lea.hbm %s22, %s2158
          %s2161 = sshll.u32 %s2150, 4
          %s2162 = int_to_ptr.vmem [resolvable:$true] %s2161
          %2164 = dma.vmem_to_hbm [thread:$0]  %s2162, 128, %s2159, %s2147
        $region152: #{_lambda_.3} parent=107 // pred_fallthru
          _
      $region108: #{_lambda_.3} parent=5 // pred_fallthru
        _
      %p2165 = scmp.le.s32.totalorder 2, %s38
      // Predicated region
      $region153: #{_lambda_.3} parent=5 // pred_check
        %p2166 = pneg %p2165
      $region154: #{_lambda_.3} parent=5 // pred_check_branch
        %2168 = sbr.rel (%p2166) target = $region156
      $region155: #{_lambda_.3} parent=5 // pred_region
        %s2169 = ssub.s32 %s38, 2
        // Predicated region
        $region157: #{_lambda_.3} parent=155 // pred_check
          %p2170 = pneg %p555
        $region158: #{_lambda_.3} parent=155 // pred_check_branch
          %2172 = sbr.rel (%p2170) target = $region160
        $region159: #{_lambda_.3} parent=155 // pred_region
          %s2173 = sand.u32 %s540, 1
          %s2174 = scalar_lea.sflag [#allocation13], %s2173
          %s2175 = sand.u32 %s540, 1
          %s2176 = smul.addr %s2175, 8
          %s2177 = scalar_lea.vmem [#allocation26], %s2176
          %2178 = dma.done %s2174, 128
        $region160: #{_lambda_.3} parent=155 // pred_fallthru
          _
      $region156: #{_lambda_.3} parent=5 // pred_fallthru
        _
    $region6: #{_lambda_.3} parent=1 // loop_footer
      %s42 = sadd.s32 1, %s38
    $region7: #{_lambda_.3} parent=1 // loop_footer_branch
      %37 = sbr.rel target = $region3
    $region8: #{_lambda_.3} parent=1 // loop_exit
      _
    %2179 = vsyncpa [#allocation12], 1
    %s2180 = scalar_lea.sflag [#allocation12], 1
    %2181 = vsyncpa %s2180, 1
    %2182 = vsyncpa [#allocation15], 1
    %2183 = vsyncpa [#allocation18], 1
    %2184 = vsyncpa [#allocation21], 1
    %2185 = vsyncpa [#allocation24], 1
    %2186 = vsyncpa [#allocation13], 1
    %s2187 = scalar_lea.sflag [#allocation13], 1
    %2188 = vsyncpa %s2187, 1

</llo_original>
